<compile_context>
chip_gen: v6e
topology: v6e:2x2x1
jax: 0.10.0
libtpu: 0.0.40
codegen_flags: <defaults>
</compile_context>

<pallas_src>
import numpy as np
import jax
import jax.numpy as jnp
from jax import lax
from jax.experimental import pallas as pl
from jax.experimental.pallas import tpu as pltpu


# ----------------------------------------------------------------------------
# helpers
# ----------------------------------------------------------------------------
def _full_spec(shape):
    """Whole-array block (legal because block dims == array dims)."""
    nd = len(shape)
    return pl.BlockSpec(shape, lambda i, _nd=nd: (0,) * _nd)


# ----------------------------------------------------------------------------
# fused Pallas kernel
# ----------------------------------------------------------------------------
def vae_kernel(xi_ref, xo_ref, eps_ref,
               wie_ref, bie_ref, whe_ref, bhn_e_ref,
               wzs_ref, bzs_ref, wh_ref, bh_ref,
               dwih_ref, dbih_ref, dwhh_ref, dbhn_ref, wo_ref, bo_ref,
               zstat_ref, logp_ref,
               gi_e_ref, gi_d_ref, hs_ref):
    H = xi_ref.shape[1] // 2            # hidden size
    T_o, B, V = logp_ref.shape          # B is the padded batch (multiple of 8)
    T_i = xi_ref.shape[0] // B
    Z = eps_ref.shape[-1]
    H2 = 2 * H

    # hoist recurrent weights + bias broadcasts out of the serial loops
    whe = whe_ref[...]                  # (2H, 6H) block-diag, gate-major
    dwhh = dwhh_ref[...]                # (H, 3H)
    bhn_e = jnp.broadcast_to(bhn_e_ref[...], (B, H2))   # [bhn_f | bhn_b]
    dbhn = jnp.broadcast_to(dbhn_ref[...], (B, H))

    # ------------------------------------------------------------------
    # 1) batched input-gate projections, OFF the recurrent dependency chain
    #    (2 matmuls total instead of 16 tiny per-step dots)
    # ------------------------------------------------------------------
    gi_e_ref[...] = (jnp.dot(xi_ref[...], wie_ref[...],
                             preferred_element_type=jnp.float32)
                     + bie_ref[...])                       # (T_i*B, 6H)
    gi_d_ref[...] = (jnp.dot(xo_ref[...], dwih_ref[...],
                             preferred_element_type=jnp.float32)
                     + dbih_ref[...])                      # (T_o*B, 3H)

    # PyTorch GRU cell, gate-major layout [r | z | n], gate width w.
    # gi already contains b_ih (+ folded b_hh for r/z); b_hn stays separate.
    def gru_step(gi, gh, bhn, h, w):
        r = jax.nn.sigmoid(gi[:, :w] + gh[:, :w])
        z = jax.nn.sigmoid(gi[:, w:2 * w] + gh[:, w:2 * w])
        n = jnp.tanh(gi[:, 2 * w:] + r * (gh[:, 2 * w:] + bhn))
        return (1.0 - z) * n + z * h

    # ------------------------------------------------------------------
    # 2) fused bidirectional encoder GRU: one h @ W_hh per step
    #    h = [h_f | h_b], gates merged as [r_f r_b | z_f z_b | n_f n_b]
    # ------------------------------------------------------------------
    def enc_body(t, h):
        row = pl.multiple_of(t * B, B)
        gh = jnp.dot(h, whe, preferred_element_type=jnp.float32)
        return gru_step(gi_e_ref[pl.ds(row, B), :], gh, bhn_e, h, H2)

    h_fb = lax.fori_loop(0, T_i, enc_body,
                         jnp.zeros((B, H2), jnp.float32), unroll=True)

    # lin_mean / lin_log_var fused into one (B, 2H) @ (2H, 2Z) projection
    zstat = (jnp.dot(h_fb, wzs_ref[...], preferred_element_type=jnp.float32)
             + bzs_ref[...])
    zstat_ref[...] = zstat

    # sample_z + lin_h entirely in-kernel (no HBM round trip for h0)
    z = zstat[:, :Z] + jnp.exp(zstat[:, Z:] * 0.5) * eps_ref[...]
    h_dec = (jnp.dot(z, wh_ref[...], preferred_element_type=jnp.float32)
             + bh_ref[...])

    # ------------------------------------------------------------------
    # 3) decoder GRU: only h @ W_hh remains on the serial chain
    # ------------------------------------------------------------------
    def dec_body(t, h):
        row = pl.multiple_of(t * B, B)
        gh = jnp.dot(h, dwhh, preferred_element_type=jnp.float32)
        h = gru_step(gi_d_ref[pl.ds(row, B), :], gh, dbhn, h, H)
        hs_ref[pl.ds(row, B), :] = h
        return h

    lax.fori_loop(0, T_o, dec_body, h_dec, unroll=True)

    # ------------------------------------------------------------------
    # 4) batched lin_o (one matmul) + log-softmax over the TIME axis
    #    (reproduces the reference's F.log_softmax(..., dim=1) on (B,T,V))
    # ------------------------------------------------------------------
    logits = (jnp.dot(hs_ref[...], wo_ref[...],
                      preferred_element_type=jnp.float32)
              + bo_ref[...])                               # (T_o*B, V)
    l3 = logits.reshape(T_o, B, V)                         # sublane-aligned split
    m = jnp.max(l3, axis=0, keepdims=True)
    lse = jnp.log(jnp.sum(jnp.exp(l3 - m), axis=0, keepdims=True)) + m
    logp_ref[...] = l3 - lse


# ----------------------------------------------------------------------------
# pallas_call wrapper
# ----------------------------------------------------------------------------
def vae_pallas(xi_flat, xo_flat, eps, kp):
    TBi, H2 = xi_flat.shape
    H = H2 // 2
    TBo = xo_flat.shape[0]
    Bp, Z = eps.shape
    T_i = TBi // Bp
    T_o = TBo // Bp
    V = kp["bo"].shape[-1]

    ins = (xi_flat, xo_flat, eps,
           kp["wie"], kp["bie"], kp["whe"], kp["bhn_e"],
           kp["wzs"], kp["bzs"], kp["wh"], kp["bh"],
           kp["dwih"], kp["dbih"], kp["dwhh"], kp["dbhn"],
           kp["wo"], kp["bo"])

    return pl.pallas_call(
        vae_kernel,
        grid=(1,),
        in_specs=[_full_spec(a.shape) for a in ins],
        out_specs=(_full_spec((Bp, 2 * Z)), _full_spec((T_o, Bp, V))),
        out_shape=(jax.ShapeDtypeStruct((Bp, 2 * Z), jnp.float32),
                   jax.ShapeDtypeStruct((T_o, Bp, V), jnp.float32)),
        scratch_shapes=[
            pltpu.VMEM((T_i * Bp, 6 * H), jnp.float32),   # merged encoder gate inputs
            pltpu.VMEM((T_o * Bp, 3 * H), jnp.float32),   # decoder gate inputs
            pltpu.VMEM((T_o * Bp, H), jnp.float32),       # decoder hidden states
        ],
        compiler_params=pltpu.CompilerParams(
            dimension_semantics=("arbitrary",),
            vmem_limit_bytes=32 * 1024 * 1024),
    )(*ins)


# ----------------------------------------------------------------------------
# weight folding / merging (tiny, jit-fused wrapper work)
# ----------------------------------------------------------------------------
def _merge_dirs(wf, wb, H):
    """Interleave fwd/bwd (in,3H) weights gate-major into (2*in, 6H) block-diag."""
    zf = jnp.zeros_like(wf[:, :H])
    zb = jnp.zeros_like(wb[:, :H])
    cols = []
    for g in range(3):                          # gates r, z, n
        cols.append(jnp.concatenate([wf[:, g * H:(g + 1) * H], zb], axis=0))
        cols.append(jnp.concatenate([zf, wb[:, g * H:(g + 1) * H]], axis=0))
    return jnp.concatenate(cols, axis=1)        # (2*in, 6H)


def _merge_gate_bias(bf_ih, bb_ih, bf_hh, bb_hh, H):
    """Gate-major merged bias; b_hh folded into r/z, n keeps only b_in."""
    parts = []
    for g in range(3):
        pf = bf_ih[:, g * H:(g + 1) * H]
        pb = bb_ih[:, g * H:(g + 1) * H]
        if g < 2:
            pf = pf + bf_hh[:, g * H:(g + 1) * H]
            pb = pb + bb_hh[:, g * H:(g + 1) * H]
        parts += [pf, pb]
    return jnp.concatenate(parts, axis=1)       # (1, 6H)


def _prep_kernel_params(p):
    H = p["lin_h_b"].shape[-1]
    z1 = jnp.zeros((1, H), jnp.float32)
    dbih = p["dec_bih"] + jnp.concatenate([p["dec_bhh"][:, :2 * H], z1], axis=1)
    return dict(
        wie=_merge_dirs(p["enc_wih_f"], p["enc_wih_b"], H),           # (2H, 6H)
        bie=_merge_gate_bias(p["enc_bih_f"], p["enc_bih_b"],
                             p["enc_bhh_f"], p["enc_bhh_b"], H),      # (1, 6H)
        whe=_merge_dirs(p["enc_whh_f"], p["enc_whh_b"], H),           # (2H, 6H)
        bhn_e=jnp.concatenate([p["enc_bhh_f"][:, 2 * H:],
                               p["enc_bhh_b"][:, 2 * H:]], axis=1),   # (1, 2H)
        wzs=jnp.concatenate(
            [jnp.concatenate([p["enc_wm_f"], p["enc_wv_f"]], axis=1),
             jnp.concatenate([p["enc_wm_b"], p["enc_wv_b"]], axis=1)],
            axis=0),                                                  # (2H, 2Z)
        bzs=jnp.concatenate([p["enc_bm"], p["enc_bv"]], axis=1),      # (1, 2Z)
        wh=p["lin_h_w"], bh=p["lin_h_b"],
        dwih=p["dec_wih"], dbih=dbih,
        dwhh=p["dec_whh"], dbhn=p["dec_bhh"][:, 2 * H:],
        wo=p["dec_wo"], bo=p["dec_bo"],
    )


@jax.jit
def vae_forward(x_i, x_o, p, eps):
    kp = _prep_kernel_params(p)
    B, T_i = x_i.shape
    T_o = x_o.shape[1]
    H = p["lin_h_b"].shape[-1]
    Z = eps.shape[-1]
    Bp = ((B + 7) // 8) * 8                      # pad batch to sublane granularity
    pad = Bp - B

    # embeddings gathered directly in time-major order; fwd + time-reversed bwd
    # stream concatenated on the feature axis so the kernel does ONE gi matmul
    xi_f = p["enc_emb"][x_i.T]                   # (T_i, B, H)
    xi_aug = jnp.concatenate([xi_f, xi_f[::-1]], axis=-1)    # (T_i, B, 2H)
    xo_e = p["dec_emb"][x_o.T]                   # (T_o, B, H)

    xi_aug = jnp.pad(xi_aug, ((0, 0), (0, pad), (0, 0)))
    xo_e = jnp.pad(xo_e, ((0, 0), (0, pad), (0, 0)))
    eps_p = jnp.pad(eps, ((0, pad), (0, 0)))

    xi_flat = xi_aug.reshape(T_i * Bp, 2 * H)
    xo_flat = xo_e.reshape(T_o * Bp, H)

    zstat, logp_tbv = vae_pallas(xi_flat, xo_flat, eps_p, kp)

    z_mean = zstat[:B, :Z]
    z_log_var = zstat[:B, Z:]
    logp = jnp.transpose(logp_tbv[:, :B, :], (1, 0, 2))      # (B, T_o, V)
    return logp, z_mean, z_log_var


# ----------------------------------------------------------------------------
# deterministic parameter init (shapes follow the nn.Module __init__)
# ----------------------------------------------------------------------------
def init_params(key, vocab, H, Z):
    keys = iter(jax.random.split(key, 24))

    def un(shape, scale):
        return jax.random.uniform(next(keys), shape, jnp.float32, -scale, scale)

    sH = 1.0 / (H ** 0.5)
    sZ = 1.0 / (Z ** 0.5)
    s2H = 1.0 / ((2 * H) ** 0.5)

    p = {}
    p["enc_emb"] = jax.random.normal(next(keys), (vocab, H), jnp.float32)
    p["dec_emb"] = jax.random.normal(next(keys), (vocab, H), jnp.float32)
    # encoder bidirectional GRU (weights stored transposed: (in, 3H))
    for d in ("f", "b"):
        p[f"enc_wih_{d}"] = un((H, 3 * H), sH)
        p[f"enc_whh_{d}"] = un((H, 3 * H), sH)
        p[f"enc_bih_{d}"] = un((1, 3 * H), sH)
        p[f"enc_bhh_{d}"] = un((1, 3 * H), sH)
    # lin_mean / lin_log_var: (2H -> Z), split into forward/backward halves
    p["enc_wm_f"] = un((H, Z), s2H)
    p["enc_wm_b"] = un((H, Z), s2H)
    p["enc_bm"] = un((1, Z), s2H)
    p["enc_wv_f"] = un((H, Z), s2H)
    p["enc_wv_b"] = un((H, Z), s2H)
    p["enc_bv"] = un((1, Z), s2H)
    # lin_h: (Z -> H)
    p["lin_h_w"] = un((Z, H), sZ)
    p["lin_h_b"] = un((1, H), sZ)
    # decoder GRU + lin_o: (H -> vocab)
    p["dec_wih"] = un((H, 3 * H), sH)
    p["dec_whh"] = un((H, 3 * H), sH)
    p["dec_bih"] = un((1, 3 * H), sH)
    p["dec_bhh"] = un((1, 3 * H), sH)
    p["dec_wo"] = un((H, vocab), sH)
    p["dec_bo"] = un((1, vocab), sH)
    return p


# ----------------------------------------------------------------------------
# pure-JAX reference (mirrors the PyTorch forward) for a correctness check
# ----------------------------------------------------------------------------
def _gru_ref(x_tbh, h, wih, whh, bih, bhh):
    H = h.shape[1]
    hs = []
    for t in range(x_tbh.shape[0]):
        gi = x_tbh[t] @ wih + bih
        gh = h @ whh + bhh
        r = jax.nn.sigmoid(gi[:, :H] + gh[:, :H])
        z = jax.nn.sigmoid(gi[:, H:2 * H] + gh[:, H:2 * H])
        n = jnp.tanh(gi[:, 2 * H:] + r * gh[:, 2 * H:])
        h = (1.0 - z) * n + z * h
        hs.append(h)
    return jnp.stack(hs), h


def vae_ref(x_i, x_o, p, eps):
    H = p["lin_h_b"].shape[-1]
    x = jnp.transpose(p["enc_emb"][x_i], (1, 0, 2))
    B = x.shape[1]
    h0 = jnp.zeros((B, H), jnp.float32)
    _, hf = _gru_ref(x, h0, p["enc_wih_f"], p["enc_whh_f"], p["enc_bih_f"], p["enc_bhh_f"])
    _, hb = _gru_ref(x[::-1], h0, p["enc_wih_b"], p["enc_whh_b"], p["enc_bih_b"], p["enc_bhh_b"])
    zm = hf @ p["enc_wm_f"] + hb @ p["enc_wm_b"] + p["enc_bm"]
    zlv = hf @ p["enc_wv_f"] + hb @ p["enc_wv_b"] + p["enc_bv"]
    hdec = (zm + jnp.exp(zlv * 0.5) * eps) @ p["lin_h_w"] + p["lin_h_b"]
    xo = jnp.transpose(p["dec_emb"][x_o], (1, 0, 2))
    hs, _ = _gru_ref(xo, hdec, p["dec_wih"], p["dec_whh"], p["dec_bih"], p["dec_bhh"])
    logits = hs @ p["dec_wo"] + p["dec_bo"]                # (T, B, V)
    logp = jax.nn.log_softmax(logits, axis=0)              # == PyTorch dim=1 of (B,T,V)
    return jnp.transpose(logp, (1, 0, 2)), zm, zlv


# ----------------------------------------------------------------------------
if __name__ == "__main__":
    vocab, H, Z = 32, 32, 16          # input_size, hidden_size, z_dim
    B, T_i, T_o = 4, 8, 8

    key = jax.random.PRNGKey(0)
    kparam, kxi, kxo, keps = jax.random.split(key, 4)
    params = init_params(kparam, vocab, H, Z)

    x_i = jax.random.randint(kxi, (B, T_i), 0, vocab)       # encoder tokens
    x_o = jax.random.randint(kxo, (B, T_o), 0, vocab)       # decoder tokens
    # torch.randn_like epsilon -> explicit input so kernel & reference agree
    eps = jax.random.normal(keps, (B, Z), jnp.float32)

    logp, z_mean, z_log_var = vae_forward(x_i, x_o, params, eps)
    jax.block_until_ready((logp, z_mean, z_log_var))

    logp_r, zm_r, zlv_r = vae_ref(x_i, x_o, params, eps)
    assert np.allclose(np.asarray(z_mean), np.asarray(zm_r), atol=1e-3, rtol=1e-3)
    assert np.allclose(np.asarray(z_log_var), np.asarray(zlv_r), atol=1e-3, rtol=1e-3)
    assert np.allclose(np.asarray(logp), np.asarray(logp_r), atol=1e-3, rtol=1e-3)

    print("KERNEL_OK")
</pallas_src>

<mosaic_0001>
module attributes {stable_mosaic.version = 11 : i64} {
  func.func @vae_kernel(%arg0: i32, %arg1: memref<64x64xf32, #tpu.memory_space<vmem>>, %arg2: memref<64x32xf32, #tpu.memory_space<vmem>>, %arg3: memref<8x16xf32, #tpu.memory_space<vmem>>, %arg4: memref<64x192xf32, #tpu.memory_space<vmem>>, %arg5: memref<1x192xf32, #tpu.memory_space<vmem>>, %arg6: memref<64x192xf32, #tpu.memory_space<vmem>>, %arg7: memref<1x64xf32, #tpu.memory_space<vmem>>, %arg8: memref<64x32xf32, #tpu.memory_space<vmem>>, %arg9: memref<1x32xf32, #tpu.memory_space<vmem>>, %arg10: memref<16x32xf32, #tpu.memory_space<vmem>>, %arg11: memref<1x32xf32, #tpu.memory_space<vmem>>, %arg12: memref<32x96xf32, #tpu.memory_space<vmem>>, %arg13: memref<1x96xf32, #tpu.memory_space<vmem>>, %arg14: memref<32x96xf32, #tpu.memory_space<vmem>>, %arg15: memref<1x32xf32, #tpu.memory_space<vmem>>, %arg16: memref<32x32xf32, #tpu.memory_space<vmem>>, %arg17: memref<1x32xf32, #tpu.memory_space<vmem>>, %arg18: memref<8x32xf32, #tpu.memory_space<vmem>>, %arg19: memref<8x8x32xf32, #tpu.memory_space<vmem>>, %arg20: memref<64x192xf32, #tpu.memory_space<vmem>>, %arg21: memref<64x96xf32, #tpu.memory_space<vmem>>, %arg22: memref<64x32xf32, #tpu.memory_space<vmem>>) attributes {dimension_semantics = [#tpu.dimension_semantics<arbitrary>], iteration_bounds = array<i64: 1>, scalar_prefetch = 0 : i64, scratch_operands = 3 : i64, tpu.core_type = #tpu.core_type<tc>, window_params = [{pipeline_mode = #tpu.pipeline_mode<synchronous>, transform_indices = @transform_0, window_bounds = array<i64: 64, 64>}, {pipeline_mode = #tpu.pipeline_mode<synchronous>, transform_indices = @transform_1, window_bounds = array<i64: 64, 32>}, {pipeline_mode = #tpu.pipeline_mode<synchronous>, transform_indices = @transform_2, window_bounds = array<i64: 8, 16>}, {pipeline_mode = #tpu.pipeline_mode<synchronous>, transform_indices = @transform_3, window_bounds = array<i64: 64, 192>}, {pipeline_mode = #tpu.pipeline_mode<synchronous>, transform_indices = @transform_4, window_bounds = array<i64: 1, 192>}, {pipeline_mode = #tpu.pipeline_mode<synchronous>, transform_indices = @transform_5, window_bounds = array<i64: 64, 192>}, {pipeline_mode = #tpu.pipeline_mode<synchronous>, transform_indices = @transform_6, window_bounds = array<i64: 1, 64>}, {pipeline_mode = #tpu.pipeline_mode<synchronous>, transform_indices = @transform_7, window_bounds = array<i64: 64, 32>}, {pipeline_mode = #tpu.pipeline_mode<synchronous>, transform_indices = @transform_8, window_bounds = array<i64: 1, 32>}, {pipeline_mode = #tpu.pipeline_mode<synchronous>, transform_indices = @transform_9, window_bounds = array<i64: 16, 32>}, {pipeline_mode = #tpu.pipeline_mode<synchronous>, transform_indices = @transform_10, window_bounds = array<i64: 1, 32>}, {pipeline_mode = #tpu.pipeline_mode<synchronous>, transform_indices = @transform_11, window_bounds = array<i64: 32, 96>}, {pipeline_mode = #tpu.pipeline_mode<synchronous>, transform_indices = @transform_12, window_bounds = array<i64: 1, 96>}, {pipeline_mode = #tpu.pipeline_mode<synchronous>, transform_indices = @transform_13, window_bounds = array<i64: 32, 96>}, {pipeline_mode = #tpu.pipeline_mode<synchronous>, transform_indices = @transform_14, window_bounds = array<i64: 1, 32>}, {pipeline_mode = #tpu.pipeline_mode<synchronous>, transform_indices = @transform_15, window_bounds = array<i64: 32, 32>}, {pipeline_mode = #tpu.pipeline_mode<synchronous>, transform_indices = @transform_16, window_bounds = array<i64: 1, 32>}, {pipeline_mode = #tpu.pipeline_mode<synchronous>, transform_indices = @transform_17, window_bounds = array<i64: 8, 32>}, {pipeline_mode = #tpu.pipeline_mode<synchronous>, transform_indices = @transform_18, window_bounds = array<i64: 8, 8, 32>}]} {
    %c0 = arith.constant 0 : index
    %c0_0 = arith.constant 0 : index
    %0 = vector.load %arg6[%c0, %c0_0] : memref<64x192xf32, #tpu.memory_space<vmem>>, vector<64x192xf32>
    %c0_1 = arith.constant 0 : index
    %c0_2 = arith.constant 0 : index
    %1 = vector.load %arg14[%c0_1, %c0_2] : memref<32x96xf32, #tpu.memory_space<vmem>>, vector<32x96xf32>
    %c0_3 = arith.constant 0 : index
    %c0_4 = arith.constant 0 : index
    %2 = vector.load %arg7[%c0_3, %c0_4] : memref<1x64xf32, #tpu.memory_space<vmem>>, vector<1x64xf32>
    %3 = vector.shape_cast %2 : vector<1x64xf32> to vector<1x64xf32>
    %4 = vector.broadcast %3 : vector<1x64xf32> to vector<8x64xf32>
    %c0_5 = arith.constant 0 : index
    %c0_6 = arith.constant 0 : index
    %5 = vector.load %arg15[%c0_5, %c0_6] : memref<1x32xf32, #tpu.memory_space<vmem>>, vector<1x32xf32>
    %6 = vector.shape_cast %5 : vector<1x32xf32> to vector<1x32xf32>
    %7 = vector.broadcast %6 : vector<1x32xf32> to vector<8x32xf32>
    %c0_7 = arith.constant 0 : index
    %c0_8 = arith.constant 0 : index
    %8 = vector.load %arg1[%c0_7, %c0_8] : memref<64x64xf32, #tpu.memory_space<vmem>>, vector<64x64xf32>
    %c0_9 = arith.constant 0 : index
    %c0_10 = arith.constant 0 : index
    %9 = vector.load %arg4[%c0_9, %c0_10] : memref<64x192xf32, #tpu.memory_space<vmem>>, vector<64x192xf32>
    %cst = arith.constant dense<0.000000e+00> : vector<64x192xf32>
    %10 = tpu.matmul %8, %9, %cst {dimension_numbers = #tpu.dot_dimension_numbers<[1], [0], [0], [1], [0, 0, 1, 1], [], []>} : vector<64x64xf32>, vector<64x192xf32>, vector<64x192xf32> -> vector<64x192xf32>
    %c0_11 = arith.constant 0 : index
    %c0_12 = arith.constant 0 : index
    %11 = vector.load %arg5[%c0_11, %c0_12] : memref<1x192xf32, #tpu.memory_space<vmem>>, vector<1x192xf32>
    %12 = vector.broadcast %11 : vector<1x192xf32> to vector<64x192xf32>
    %13 = arith.addf %10, %12 : vector<64x192xf32>
    %c0_13 = arith.constant 0 : index
    %c0_14 = arith.constant 0 : index
    %14 = vector.load %arg20[%c0_13, %c0_14] : memref<64x192xf32, #tpu.memory_space<vmem>>, vector<64x192xf32>
    tpu.vector_store %arg20[%c0_13, %c0_14], %13 {strides = array<i32>} : memref<64x192xf32, #tpu.memory_space<vmem>>, vector<64x192xf32>,
    %c0_15 = arith.constant 0 : index
    %c0_16 = arith.constant 0 : index
    %15 = vector.load %arg2[%c0_15, %c0_16] : memref<64x32xf32, #tpu.memory_space<vmem>>, vector<64x32xf32>
    %c0_17 = arith.constant 0 : index
    %c0_18 = arith.constant 0 : index
    %16 = vector.load %arg12[%c0_17, %c0_18] : memref<32x96xf32, #tpu.memory_space<vmem>>, vector<32x96xf32>
    %cst_19 = arith.constant dense<0.000000e+00> : vector<64x96xf32>
    %17 = tpu.matmul %15, %16, %cst_19 {dimension_numbers = #tpu.dot_dimension_numbers<[1], [0], [0], [1], [0, 0, 1, 1], [], []>} : vector<64x32xf32>, vector<32x96xf32>, vector<64x96xf32> -> vector<64x96xf32>
    %c0_20 = arith.constant 0 : index
    %c0_21 = arith.constant 0 : index
    %18 = vector.load %arg13[%c0_20, %c0_21] : memref<1x96xf32, #tpu.memory_space<vmem>>, vector<1x96xf32>
    %19 = vector.broadcast %18 : vector<1x96xf32> to vector<64x96xf32>
    %20 = arith.addf %17, %19 : vector<64x96xf32>
    %c0_22 = arith.constant 0 : index
    %c0_23 = arith.constant 0 : index
    %21 = vector.load %arg21[%c0_22, %c0_23] : memref<64x96xf32, #tpu.memory_space<vmem>>, vector<64x96xf32>
    tpu.vector_store %arg21[%c0_22, %c0_23], %20 {strides = array<i32>} : memref<64x96xf32, #tpu.memory_space<vmem>>, vector<64x96xf32>,
    %cst_24 = arith.constant 0.000000e+00 : f32
    %22 = vector.broadcast %cst_24 : f32 to vector<8x64xf32>
    %c0_i32 = arith.constant 0 : i32
    %c8_i32 = arith.constant 8 : i32
    %23 = arith.muli %c0_i32, %c8_i32 : i32
    %24 = tpu.assume_multiple %23, 8 : i32
    %cst_25 = arith.constant dense<0.000000e+00> : vector<8x192xf32>
    %25 = tpu.matmul %22, %0, %cst_25 {dimension_numbers = #tpu.dot_dimension_numbers<[1], [0], [0], [1], [0, 0, 1, 1], [], []>} : vector<8x64xf32>, vector<64x192xf32>, vector<8x192xf32> -> vector<8x192xf32>
    %26 = arith.index_cast %24 : i32 to index
    %c0_26 = arith.constant 0 : index
    %27 = vector.load %arg20[%26, %c0_26] : memref<64x192xf32, #tpu.memory_space<vmem>>, vector<8x192xf32>
    %28 = vector.extract_strided_slice %27 {offsets = [0, 0], sizes = [8, 64], strides = [1, 1]} : vector<8x192xf32> to vector<8x64xf32>
    %29 = vector.extract_strided_slice %25 {offsets = [0, 0], sizes = [8, 64], strides = [1, 1]} : vector<8x192xf32> to vector<8x64xf32>
    %30 = arith.addf %28, %29 : vector<8x64xf32>
    %31 = arith.negf %30 : vector<8x64xf32>
    %32 = math.exp %31 : vector<8x64xf32>
    %cst_27 = arith.constant 1.000000e+00 : f32
    %33 = vector.broadcast %cst_27 : f32 to vector<8x64xf32>
    %34 = arith.addf %33, %32 : vector<8x64xf32>
    %35 = arith.divf %33, %34 : vector<8x64xf32>
    %36 = vector.extract_strided_slice %27 {offsets = [0, 64], sizes = [8, 64], strides = [1, 1]} : vector<8x192xf32> to vector<8x64xf32>
    %37 = vector.extract_strided_slice %25 {offsets = [0, 64], sizes = [8, 64], strides = [1, 1]} : vector<8x192xf32> to vector<8x64xf32>
    %38 = arith.addf %36, %37 : vector<8x64xf32>
    %39 = arith.negf %38 : vector<8x64xf32>
    %40 = math.exp %39 : vector<8x64xf32>
    %cst_28 = arith.constant 1.000000e+00 : f32
    %41 = vector.broadcast %cst_28 : f32 to vector<8x64xf32>
    %42 = arith.addf %41, %40 : vector<8x64xf32>
    %43 = arith.divf %41, %42 : vector<8x64xf32>
    %44 = vector.extract_strided_slice %27 {offsets = [0, 128], sizes = [8, 64], strides = [1, 1]} : vector<8x192xf32> to vector<8x64xf32>
    %45 = vector.extract_strided_slice %25 {offsets = [0, 128], sizes = [8, 64], strides = [1, 1]} : vector<8x192xf32> to vector<8x64xf32>
    %46 = arith.addf %45, %4 : vector<8x64xf32>
    %47 = arith.mulf %35, %46 : vector<8x64xf32>
    %48 = arith.addf %44, %47 : vector<8x64xf32>
    %49 = math.tanh %48 : vector<8x64xf32>
    %cst_29 = arith.constant 1.000000e+00 : f32
    %50 = vector.broadcast %cst_29 : f32 to vector<8x64xf32>
    %51 = arith.subf %50, %43 : vector<8x64xf32>
    %52 = arith.mulf %51, %49 : vector<8x64xf32>
    %53 = arith.mulf %43, %22 : vector<8x64xf32>
    %54 = arith.addf %52, %53 : vector<8x64xf32>
    %c1_i32 = arith.constant 1 : i32
    %c8_i32_30 = arith.constant 8 : i32
    %55 = arith.muli %c1_i32, %c8_i32_30 : i32
    %56 = tpu.assume_multiple %55, 8 : i32
    %cst_31 = arith.constant dense<0.000000e+00> : vector<8x192xf32>
    %57 = tpu.matmul %54, %0, %cst_31 {dimension_numbers = #tpu.dot_dimension_numbers<[1], [0], [0], [1], [0, 0, 1, 1], [], []>} : vector<8x64xf32>, vector<64x192xf32>, vector<8x192xf32> -> vector<8x192xf32>
    %58 = arith.index_cast %56 : i32 to index
    %c0_32 = arith.constant 0 : index
    %59 = vector.load %arg20[%58, %c0_32] : memref<64x192xf32, #tpu.memory_space<vmem>>, vector<8x192xf32>
    %60 = vector.extract_strided_slice %59 {offsets = [0, 0], sizes = [8, 64], strides = [1, 1]} : vector<8x192xf32> to vector<8x64xf32>
    %61 = vector.extract_strided_slice %57 {offsets = [0, 0], sizes = [8, 64], strides = [1, 1]} : vector<8x192xf32> to vector<8x64xf32>
    %62 = arith.addf %60, %61 : vector<8x64xf32>
    %63 = arith.negf %62 : vector<8x64xf32>
    %64 = math.exp %63 : vector<8x64xf32>
    %cst_33 = arith.constant 1.000000e+00 : f32
    %65 = vector.broadcast %cst_33 : f32 to vector<8x64xf32>
    %66 = arith.addf %65, %64 : vector<8x64xf32>
    %67 = arith.divf %65, %66 : vector<8x64xf32>
    %68 = vector.extract_strided_slice %59 {offsets = [0, 64], sizes = [8, 64], strides = [1, 1]} : vector<8x192xf32> to vector<8x64xf32>
    %69 = vector.extract_strided_slice %57 {offsets = [0, 64], sizes = [8, 64], strides = [1, 1]} : vector<8x192xf32> to vector<8x64xf32>
    %70 = arith.addf %68, %69 : vector<8x64xf32>
    %71 = arith.negf %70 : vector<8x64xf32>
    %72 = math.exp %71 : vector<8x64xf32>
    %cst_34 = arith.constant 1.000000e+00 : f32
    %73 = vector.broadcast %cst_34 : f32 to vector<8x64xf32>
    %74 = arith.addf %73, %72 : vector<8x64xf32>
    %75 = arith.divf %73, %74 : vector<8x64xf32>
    %76 = vector.extract_strided_slice %59 {offsets = [0, 128], sizes = [8, 64], strides = [1, 1]} : vector<8x192xf32> to vector<8x64xf32>
    %77 = vector.extract_strided_slice %57 {offsets = [0, 128], sizes = [8, 64], strides = [1, 1]} : vector<8x192xf32> to vector<8x64xf32>
    %78 = arith.addf %77, %4 : vector<8x64xf32>
    %79 = arith.mulf %67, %78 : vector<8x64xf32>
    %80 = arith.addf %76, %79 : vector<8x64xf32>
    %81 = math.tanh %80 : vector<8x64xf32>
    %cst_35 = arith.constant 1.000000e+00 : f32
    %82 = vector.broadcast %cst_35 : f32 to vector<8x64xf32>
    %83 = arith.subf %82, %75 : vector<8x64xf32>
    %84 = arith.mulf %83, %81 : vector<8x64xf32>
    %85 = arith.mulf %75, %54 : vector<8x64xf32>
    %86 = arith.addf %84, %85 : vector<8x64xf32>
    %c2_i32 = arith.constant 2 : i32
    %c8_i32_36 = arith.constant 8 : i32
    %87 = arith.muli %c2_i32, %c8_i32_36 : i32
    %88 = tpu.assume_multiple %87, 8 : i32
    %cst_37 = arith.constant dense<0.000000e+00> : vector<8x192xf32>
    %89 = tpu.matmul %86, %0, %cst_37 {dimension_numbers = #tpu.dot_dimension_numbers<[1], [0], [0], [1], [0, 0, 1, 1], [], []>} : vector<8x64xf32>, vector<64x192xf32>, vector<8x192xf32> -> vector<8x192xf32>
    %90 = arith.index_cast %88 : i32 to index
    %c0_38 = arith.constant 0 : index
    %91 = vector.load %arg20[%90, %c0_38] : memref<64x192xf32, #tpu.memory_space<vmem>>, vector<8x192xf32>
    %92 = vector.extract_strided_slice %91 {offsets = [0, 0], sizes = [8, 64], strides = [1, 1]} : vector<8x192xf32> to vector<8x64xf32>
    %93 = vector.extract_strided_slice %89 {offsets = [0, 0], sizes = [8, 64], strides = [1, 1]} : vector<8x192xf32> to vector<8x64xf32>
    %94 = arith.addf %92, %93 : vector<8x64xf32>
    %95 = arith.negf %94 : vector<8x64xf32>
    %96 = math.exp %95 : vector<8x64xf32>
    %cst_39 = arith.constant 1.000000e+00 : f32
    %97 = vector.broadcast %cst_39 : f32 to vector<8x64xf32>
    %98 = arith.addf %97, %96 : vector<8x64xf32>
    %99 = arith.divf %97, %98 : vector<8x64xf32>
    %100 = vector.extract_strided_slice %91 {offsets = [0, 64], sizes = [8, 64], strides = [1, 1]} : vector<8x192xf32> to vector<8x64xf32>
    %101 = vector.extract_strided_slice %89 {offsets = [0, 64], sizes = [8, 64], strides = [1, 1]} : vector<8x192xf32> to vector<8x64xf32>
    %102 = arith.addf %100, %101 : vector<8x64xf32>
    %103 = arith.negf %102 : vector<8x64xf32>
    %104 = math.exp %103 : vector<8x64xf32>
    %cst_40 = arith.constant 1.000000e+00 : f32
    %105 = vector.broadcast %cst_40 : f32 to vector<8x64xf32>
    %106 = arith.addf %105, %104 : vector<8x64xf32>
    %107 = arith.divf %105, %106 : vector<8x64xf32>
    %108 = vector.extract_strided_slice %91 {offsets = [0, 128], sizes = [8, 64], strides = [1, 1]} : vector<8x192xf32> to vector<8x64xf32>
    %109 = vector.extract_strided_slice %89 {offsets = [0, 128], sizes = [8, 64], strides = [1, 1]} : vector<8x192xf32> to vector<8x64xf32>
    %110 = arith.addf %109, %4 : vector<8x64xf32>
    %111 = arith.mulf %99, %110 : vector<8x64xf32>
    %112 = arith.addf %108, %111 : vector<8x64xf32>
    %113 = math.tanh %112 : vector<8x64xf32>
    %cst_41 = arith.constant 1.000000e+00 : f32
    %114 = vector.broadcast %cst_41 : f32 to vector<8x64xf32>
    %115 = arith.subf %114, %107 : vector<8x64xf32>
    %116 = arith.mulf %115, %113 : vector<8x64xf32>
    %117 = arith.mulf %107, %86 : vector<8x64xf32>
    %118 = arith.addf %116, %117 : vector<8x64xf32>
    %c3_i32 = arith.constant 3 : i32
    %c8_i32_42 = arith.constant 8 : i32
    %119 = arith.muli %c3_i32, %c8_i32_42 : i32
    %120 = tpu.assume_multiple %119, 8 : i32
    %cst_43 = arith.constant dense<0.000000e+00> : vector<8x192xf32>
    %121 = tpu.matmul %118, %0, %cst_43 {dimension_numbers = #tpu.dot_dimension_numbers<[1], [0], [0], [1], [0, 0, 1, 1], [], []>} : vector<8x64xf32>, vector<64x192xf32>, vector<8x192xf32> -> vector<8x192xf32>
    %122 = arith.index_cast %120 : i32 to index
    %c0_44 = arith.constant 0 : index
    %123 = vector.load %arg20[%122, %c0_44] : memref<64x192xf32, #tpu.memory_space<vmem>>, vector<8x192xf32>
    %124 = vector.extract_strided_slice %123 {offsets = [0, 0], sizes = [8, 64], strides = [1, 1]} : vector<8x192xf32> to vector<8x64xf32>
    %125 = vector.extract_strided_slice %121 {offsets = [0, 0], sizes = [8, 64], strides = [1, 1]} : vector<8x192xf32> to vector<8x64xf32>
    %126 = arith.addf %124, %125 : vector<8x64xf32>
    %127 = arith.negf %126 : vector<8x64xf32>
    %128 = math.exp %127 : vector<8x64xf32>
    %cst_45 = arith.constant 1.000000e+00 : f32
    %129 = vector.broadcast %cst_45 : f32 to vector<8x64xf32>
    %130 = arith.addf %129, %128 : vector<8x64xf32>
    %131 = arith.divf %129, %130 : vector<8x64xf32>
    %132 = vector.extract_strided_slice %123 {offsets = [0, 64], sizes = [8, 64], strides = [1, 1]} : vector<8x192xf32> to vector<8x64xf32>
    %133 = vector.extract_strided_slice %121 {offsets = [0, 64], sizes = [8, 64], strides = [1, 1]} : vector<8x192xf32> to vector<8x64xf32>
    %134 = arith.addf %132, %133 : vector<8x64xf32>
    %135 = arith.negf %134 : vector<8x64xf32>
    %136 = math.exp %135 : vector<8x64xf32>
    %cst_46 = arith.constant 1.000000e+00 : f32
    %137 = vector.broadcast %cst_46 : f32 to vector<8x64xf32>
    %138 = arith.addf %137, %136 : vector<8x64xf32>
    %139 = arith.divf %137, %138 : vector<8x64xf32>
    %140 = vector.extract_strided_slice %123 {offsets = [0, 128], sizes = [8, 64], strides = [1, 1]} : vector<8x192xf32> to vector<8x64xf32>
    %141 = vector.extract_strided_slice %121 {offsets = [0, 128], sizes = [8, 64], strides = [1, 1]} : vector<8x192xf32> to vector<8x64xf32>
    %142 = arith.addf %141, %4 : vector<8x64xf32>
    %143 = arith.mulf %131, %142 : vector<8x64xf32>
    %144 = arith.addf %140, %143 : vector<8x64xf32>
    %145 = math.tanh %144 : vector<8x64xf32>
    %cst_47 = arith.constant 1.000000e+00 : f32
    %146 = vector.broadcast %cst_47 : f32 to vector<8x64xf32>
    %147 = arith.subf %146, %139 : vector<8x64xf32>
    %148 = arith.mulf %147, %145 : vector<8x64xf32>
    %149 = arith.mulf %139, %118 : vector<8x64xf32>
    %150 = arith.addf %148, %149 : vector<8x64xf32>
    %c4_i32 = arith.constant 4 : i32
    %c8_i32_48 = arith.constant 8 : i32
    %151 = arith.muli %c4_i32, %c8_i32_48 : i32
    %152 = tpu.assume_multiple %151, 8 : i32
    %cst_49 = arith.constant dense<0.000000e+00> : vector<8x192xf32>
    %153 = tpu.matmul %150, %0, %cst_49 {dimension_numbers = #tpu.dot_dimension_numbers<[1], [0], [0], [1], [0, 0, 1, 1], [], []>} : vector<8x64xf32>, vector<64x192xf32>, vector<8x192xf32> -> vector<8x192xf32>
    %154 = arith.index_cast %152 : i32 to index
    %c0_50 = arith.constant 0 : index
    %155 = vector.load %arg20[%154, %c0_50] : memref<64x192xf32, #tpu.memory_space<vmem>>, vector<8x192xf32>
    %156 = vector.extract_strided_slice %155 {offsets = [0, 0], sizes = [8, 64], strides = [1, 1]} : vector<8x192xf32> to vector<8x64xf32>
    %157 = vector.extract_strided_slice %153 {offsets = [0, 0], sizes = [8, 64], strides = [1, 1]} : vector<8x192xf32> to vector<8x64xf32>
    %158 = arith.addf %156, %157 : vector<8x64xf32>
    %159 = arith.negf %158 : vector<8x64xf32>
    %160 = math.exp %159 : vector<8x64xf32>
    %cst_51 = arith.constant 1.000000e+00 : f32
    %161 = vector.broadcast %cst_51 : f32 to vector<8x64xf32>
    %162 = arith.addf %161, %160 : vector<8x64xf32>
    %163 = arith.divf %161, %162 : vector<8x64xf32>
    %164 = vector.extract_strided_slice %155 {offsets = [0, 64], sizes = [8, 64], strides = [1, 1]} : vector<8x192xf32> to vector<8x64xf32>
    %165 = vector.extract_strided_slice %153 {offsets = [0, 64], sizes = [8, 64], strides = [1, 1]} : vector<8x192xf32> to vector<8x64xf32>
    %166 = arith.addf %164, %165 : vector<8x64xf32>
    %167 = arith.negf %166 : vector<8x64xf32>
    %168 = math.exp %167 : vector<8x64xf32>
    %cst_52 = arith.constant 1.000000e+00 : f32
    %169 = vector.broadcast %cst_52 : f32 to vector<8x64xf32>
    %170 = arith.addf %169, %168 : vector<8x64xf32>
    %171 = arith.divf %169, %170 : vector<8x64xf32>
    %172 = vector.extract_strided_slice %155 {offsets = [0, 128], sizes = [8, 64], strides = [1, 1]} : vector<8x192xf32> to vector<8x64xf32>
    %173 = vector.extract_strided_slice %153 {offsets = [0, 128], sizes = [8, 64], strides = [1, 1]} : vector<8x192xf32> to vector<8x64xf32>
    %174 = arith.addf %173, %4 : vector<8x64xf32>
    %175 = arith.mulf %163, %174 : vector<8x64xf32>
    %176 = arith.addf %172, %175 : vector<8x64xf32>
    %177 = math.tanh %176 : vector<8x64xf32>
    %cst_53 = arith.constant 1.000000e+00 : f32
    %178 = vector.broadcast %cst_53 : f32 to vector<8x64xf32>
    %179 = arith.subf %178, %171 : vector<8x64xf32>
    %180 = arith.mulf %179, %177 : vector<8x64xf32>
    %181 = arith.mulf %171, %150 : vector<8x64xf32>
    %182 = arith.addf %180, %181 : vector<8x64xf32>
    %c5_i32 = arith.constant 5 : i32
    %c8_i32_54 = arith.constant 8 : i32
    %183 = arith.muli %c5_i32, %c8_i32_54 : i32
    %184 = tpu.assume_multiple %183, 8 : i32
    %cst_55 = arith.constant dense<0.000000e+00> : vector<8x192xf32>
    %185 = tpu.matmul %182, %0, %cst_55 {dimension_numbers = #tpu.dot_dimension_numbers<[1], [0], [0], [1], [0, 0, 1, 1], [], []>} : vector<8x64xf32>, vector<64x192xf32>, vector<8x192xf32> -> vector<8x192xf32>
    %186 = arith.index_cast %184 : i32 to index
    %c0_56 = arith.constant 0 : index
    %187 = vector.load %arg20[%186, %c0_56] : memref<64x192xf32, #tpu.memory_space<vmem>>, vector<8x192xf32>
    %188 = vector.extract_strided_slice %187 {offsets = [0, 0], sizes = [8, 64], strides = [1, 1]} : vector<8x192xf32> to vector<8x64xf32>
    %189 = vector.extract_strided_slice %185 {offsets = [0, 0], sizes = [8, 64], strides = [1, 1]} : vector<8x192xf32> to vector<8x64xf32>
    %190 = arith.addf %188, %189 : vector<8x64xf32>
    %191 = arith.negf %190 : vector<8x64xf32>
    %192 = math.exp %191 : vector<8x64xf32>
    %cst_57 = arith.constant 1.000000e+00 : f32
    %193 = vector.broadcast %cst_57 : f32 to vector<8x64xf32>
    %194 = arith.addf %193, %192 : vector<8x64xf32>
    %195 = arith.divf %193, %194 : vector<8x64xf32>
    %196 = vector.extract_strided_slice %187 {offsets = [0, 64], sizes = [8, 64], strides = [1, 1]} : vector<8x192xf32> to vector<8x64xf32>
    %197 = vector.extract_strided_slice %185 {offsets = [0, 64], sizes = [8, 64], strides = [1, 1]} : vector<8x192xf32> to vector<8x64xf32>
    %198 = arith.addf %196, %197 : vector<8x64xf32>
    %199 = arith.negf %198 : vector<8x64xf32>
    %200 = math.exp %199 : vector<8x64xf32>
    %cst_58 = arith.constant 1.000000e+00 : f32
    %201 = vector.broadcast %cst_58 : f32 to vector<8x64xf32>
    %202 = arith.addf %201, %200 : vector<8x64xf32>
    %203 = arith.divf %201, %202 : vector<8x64xf32>
    %204 = vector.extract_strided_slice %187 {offsets = [0, 128], sizes = [8, 64], strides = [1, 1]} : vector<8x192xf32> to vector<8x64xf32>
    %205 = vector.extract_strided_slice %185 {offsets = [0, 128], sizes = [8, 64], strides = [1, 1]} : vector<8x192xf32> to vector<8x64xf32>
    %206 = arith.addf %205, %4 : vector<8x64xf32>
    %207 = arith.mulf %195, %206 : vector<8x64xf32>
    %208 = arith.addf %204, %207 : vector<8x64xf32>
    %209 = math.tanh %208 : vector<8x64xf32>
    %cst_59 = arith.constant 1.000000e+00 : f32
    %210 = vector.broadcast %cst_59 : f32 to vector<8x64xf32>
    %211 = arith.subf %210, %203 : vector<8x64xf32>
    %212 = arith.mulf %211, %209 : vector<8x64xf32>
    %213 = arith.mulf %203, %182 : vector<8x64xf32>
    %214 = arith.addf %212, %213 : vector<8x64xf32>
    %c6_i32 = arith.constant 6 : i32
    %c8_i32_60 = arith.constant 8 : i32
    %215 = arith.muli %c6_i32, %c8_i32_60 : i32
    %216 = tpu.assume_multiple %215, 8 : i32
    %cst_61 = arith.constant dense<0.000000e+00> : vector<8x192xf32>
    %217 = tpu.matmul %214, %0, %cst_61 {dimension_numbers = #tpu.dot_dimension_numbers<[1], [0], [0], [1], [0, 0, 1, 1], [], []>} : vector<8x64xf32>, vector<64x192xf32>, vector<8x192xf32> -> vector<8x192xf32>
    %218 = arith.index_cast %216 : i32 to index
    %c0_62 = arith.constant 0 : index
    %219 = vector.load %arg20[%218, %c0_62] : memref<64x192xf32, #tpu.memory_space<vmem>>, vector<8x192xf32>
    %220 = vector.extract_strided_slice %219 {offsets = [0, 0], sizes = [8, 64], strides = [1, 1]} : vector<8x192xf32> to vector<8x64xf32>
    %221 = vector.extract_strided_slice %217 {offsets = [0, 0], sizes = [8, 64], strides = [1, 1]} : vector<8x192xf32> to vector<8x64xf32>
    %222 = arith.addf %220, %221 : vector<8x64xf32>
    %223 = arith.negf %222 : vector<8x64xf32>
    %224 = math.exp %223 : vector<8x64xf32>
    %cst_63 = arith.constant 1.000000e+00 : f32
    %225 = vector.broadcast %cst_63 : f32 to vector<8x64xf32>
    %226 = arith.addf %225, %224 : vector<8x64xf32>
    %227 = arith.divf %225, %226 : vector<8x64xf32>
    %228 = vector.extract_strided_slice %219 {offsets = [0, 64], sizes = [8, 64], strides = [1, 1]} : vector<8x192xf32> to vector<8x64xf32>
    %229 = vector.extract_strided_slice %217 {offsets = [0, 64], sizes = [8, 64], strides = [1, 1]} : vector<8x192xf32> to vector<8x64xf32>
    %230 = arith.addf %228, %229 : vector<8x64xf32>
    %231 = arith.negf %230 : vector<8x64xf32>
    %232 = math.exp %231 : vector<8x64xf32>
    %cst_64 = arith.constant 1.000000e+00 : f32
    %233 = vector.broadcast %cst_64 : f32 to vector<8x64xf32>
    %234 = arith.addf %233, %232 : vector<8x64xf32>
    %235 = arith.divf %233, %234 : vector<8x64xf32>
    %236 = vector.extract_strided_slice %219 {offsets = [0, 128], sizes = [8, 64], strides = [1, 1]} : vector<8x192xf32> to vector<8x64xf32>
    %237 = vector.extract_strided_slice %217 {offsets = [0, 128], sizes = [8, 64], strides = [1, 1]} : vector<8x192xf32> to vector<8x64xf32>
    %238 = arith.addf %237, %4 : vector<8x64xf32>
    %239 = arith.mulf %227, %238 : vector<8x64xf32>
    %240 = arith.addf %236, %239 : vector<8x64xf32>
    %241 = math.tanh %240 : vector<8x64xf32>
    %cst_65 = arith.constant 1.000000e+00 : f32
    %242 = vector.broadcast %cst_65 : f32 to vector<8x64xf32>
    %243 = arith.subf %242, %235 : vector<8x64xf32>
    %244 = arith.mulf %243, %241 : vector<8x64xf32>
    %245 = arith.mulf %235, %214 : vector<8x64xf32>
    %246 = arith.addf %244, %245 : vector<8x64xf32>
    %c7_i32 = arith.constant 7 : i32
    %c8_i32_66 = arith.constant 8 : i32
    %247 = arith.muli %c7_i32, %c8_i32_66 : i32
    %248 = tpu.assume_multiple %247, 8 : i32
    %cst_67 = arith.constant dense<0.000000e+00> : vector<8x192xf32>
    %249 = tpu.matmul %246, %0, %cst_67 {dimension_numbers = #tpu.dot_dimension_numbers<[1], [0], [0], [1], [0, 0, 1, 1], [], []>} : vector<8x64xf32>, vector<64x192xf32>, vector<8x192xf32> -> vector<8x192xf32>
    %250 = arith.index_cast %248 : i32 to index
    %c0_68 = arith.constant 0 : index
    %251 = vector.load %arg20[%250, %c0_68] : memref<64x192xf32, #tpu.memory_space<vmem>>, vector<8x192xf32>
    %252 = vector.extract_strided_slice %251 {offsets = [0, 0], sizes = [8, 64], strides = [1, 1]} : vector<8x192xf32> to vector<8x64xf32>
    %253 = vector.extract_strided_slice %249 {offsets = [0, 0], sizes = [8, 64], strides = [1, 1]} : vector<8x192xf32> to vector<8x64xf32>
    %254 = arith.addf %252, %253 : vector<8x64xf32>
    %255 = arith.negf %254 : vector<8x64xf32>
    %256 = math.exp %255 : vector<8x64xf32>
    %cst_69 = arith.constant 1.000000e+00 : f32
    %257 = vector.broadcast %cst_69 : f32 to vector<8x64xf32>
    %258 = arith.addf %257, %256 : vector<8x64xf32>
    %259 = arith.divf %257, %258 : vector<8x64xf32>
    %260 = vector.extract_strided_slice %251 {offsets = [0, 64], sizes = [8, 64], strides = [1, 1]} : vector<8x192xf32> to vector<8x64xf32>
    %261 = vector.extract_strided_slice %249 {offsets = [0, 64], sizes = [8, 64], strides = [1, 1]} : vector<8x192xf32> to vector<8x64xf32>
    %262 = arith.addf %260, %261 : vector<8x64xf32>
    %263 = arith.negf %262 : vector<8x64xf32>
    %264 = math.exp %263 : vector<8x64xf32>
    %cst_70 = arith.constant 1.000000e+00 : f32
    %265 = vector.broadcast %cst_70 : f32 to vector<8x64xf32>
    %266 = arith.addf %265, %264 : vector<8x64xf32>
    %267 = arith.divf %265, %266 : vector<8x64xf32>
    %268 = vector.extract_strided_slice %251 {offsets = [0, 128], sizes = [8, 64], strides = [1, 1]} : vector<8x192xf32> to vector<8x64xf32>
    %269 = vector.extract_strided_slice %249 {offsets = [0, 128], sizes = [8, 64], strides = [1, 1]} : vector<8x192xf32> to vector<8x64xf32>
    %270 = arith.addf %269, %4 : vector<8x64xf32>
    %271 = arith.mulf %259, %270 : vector<8x64xf32>
    %272 = arith.addf %268, %271 : vector<8x64xf32>
    %273 = math.tanh %272 : vector<8x64xf32>
    %cst_71 = arith.constant 1.000000e+00 : f32
    %274 = vector.broadcast %cst_71 : f32 to vector<8x64xf32>
    %275 = arith.subf %274, %267 : vector<8x64xf32>
    %276 = arith.mulf %275, %273 : vector<8x64xf32>
    %277 = arith.mulf %267, %246 : vector<8x64xf32>
    %278 = arith.addf %276, %277 : vector<8x64xf32>
    %c8_i32_72 = arith.constant 8 : i32
    %c0_73 = arith.constant 0 : index
    %c0_74 = arith.constant 0 : index
    %279 = vector.load %arg8[%c0_73, %c0_74] : memref<64x32xf32, #tpu.memory_space<vmem>>, vector<64x32xf32>
    %cst_75 = arith.constant dense<0.000000e+00> : vector<8x32xf32>
    %280 = tpu.matmul %278, %279, %cst_75 {dimension_numbers = #tpu.dot_dimension_numbers<[1], [0], [0], [1], [0, 0, 1, 1], [], []>} : vector<8x64xf32>, vector<64x32xf32>, vector<8x32xf32> -> vector<8x32xf32>
    %c0_76 = arith.constant 0 : index
    %c0_77 = arith.constant 0 : index
    %281 = vector.load %arg9[%c0_76, %c0_77] : memref<1x32xf32, #tpu.memory_space<vmem>>, vector<1x32xf32>
    %282 = vector.broadcast %281 : vector<1x32xf32> to vector<8x32xf32>
    %283 = arith.addf %280, %282 : vector<8x32xf32>
    %c0_78 = arith.constant 0 : index
    %c0_79 = arith.constant 0 : index
    %284 = vector.load %arg18[%c0_78, %c0_79] : memref<8x32xf32, #tpu.memory_space<vmem>>, vector<8x32xf32>
    tpu.vector_store %arg18[%c0_78, %c0_79], %283 {strides = array<i32>} : memref<8x32xf32, #tpu.memory_space<vmem>>, vector<8x32xf32>,
    %285 = vector.extract_strided_slice %283 {offsets = [0, 0], sizes = [8, 16], strides = [1, 1]} : vector<8x32xf32> to vector<8x16xf32>
    %286 = vector.extract_strided_slice %283 {offsets = [0, 16], sizes = [8, 16], strides = [1, 1]} : vector<8x32xf32> to vector<8x16xf32>
    %cst_80 = arith.constant 5.000000e-01 : f32
    %287 = vector.broadcast %cst_80 : f32 to vector<8x16xf32>
    %288 = arith.mulf %286, %287 : vector<8x16xf32>
    %289 = math.exp %288 : vector<8x16xf32>
    %c0_81 = arith.constant 0 : index
    %c0_82 = arith.constant 0 : index
    %290 = vector.load %arg3[%c0_81, %c0_82] : memref<8x16xf32, #tpu.memory_space<vmem>>, vector<8x16xf32>
    %291 = arith.mulf %289, %290 : vector<8x16xf32>
    %292 = arith.addf %285, %291 : vector<8x16xf32>
    %c0_83 = arith.constant 0 : index
    %c0_84 = arith.constant 0 : index
    %293 = vector.load %arg10[%c0_83, %c0_84] : memref<16x32xf32, #tpu.memory_space<vmem>>, vector<16x32xf32>
    %cst_85 = arith.constant dense<0.000000e+00> : vector<8x32xf32>
    %294 = tpu.matmul %292, %293, %cst_85 {dimension_numbers = #tpu.dot_dimension_numbers<[1], [0], [0], [1], [0, 0, 1, 1], [], []>} : vector<8x16xf32>, vector<16x32xf32>, vector<8x32xf32> -> vector<8x32xf32>
    %c0_86 = arith.constant 0 : index
    %c0_87 = arith.constant 0 : index
    %295 = vector.load %arg11[%c0_86, %c0_87] : memref<1x32xf32, #tpu.memory_space<vmem>>, vector<1x32xf32>
    %296 = vector.broadcast %295 : vector<1x32xf32> to vector<8x32xf32>
    %297 = arith.addf %294, %296 : vector<8x32xf32>
    %c0_i32_88 = arith.constant 0 : i32
    %c8_i32_89 = arith.constant 8 : i32
    %298 = arith.muli %c0_i32_88, %c8_i32_89 : i32
    %299 = tpu.assume_multiple %298, 8 : i32
    %cst_90 = arith.constant dense<0.000000e+00> : vector<8x96xf32>
    %300 = tpu.matmul %297, %1, %cst_90 {dimension_numbers = #tpu.dot_dimension_numbers<[1], [0], [0], [1], [0, 0, 1, 1], [], []>} : vector<8x32xf32>, vector<32x96xf32>, vector<8x96xf32> -> vector<8x96xf32>
    %301 = arith.index_cast %299 : i32 to index
    %c0_91 = arith.constant 0 : index
    %302 = vector.load %arg21[%301, %c0_91] : memref<64x96xf32, #tpu.memory_space<vmem>>, vector<8x96xf32>
    %303 = vector.extract_strided_slice %302 {offsets = [0, 0], sizes = [8, 32], strides = [1, 1]} : vector<8x96xf32> to vector<8x32xf32>
    %304 = vector.extract_strided_slice %300 {offsets = [0, 0], sizes = [8, 32], strides = [1, 1]} : vector<8x96xf32> to vector<8x32xf32>
    %305 = arith.addf %303, %304 : vector<8x32xf32>
    %306 = arith.negf %305 : vector<8x32xf32>
    %307 = math.exp %306 : vector<8x32xf32>
    %cst_92 = arith.constant 1.000000e+00 : f32
    %308 = vector.broadcast %cst_92 : f32 to vector<8x32xf32>
    %309 = arith.addf %308, %307 : vector<8x32xf32>
    %310 = arith.divf %308, %309 : vector<8x32xf32>
    %311 = vector.extract_strided_slice %302 {offsets = [0, 32], sizes = [8, 32], strides = [1, 1]} : vector<8x96xf32> to vector<8x32xf32>
    %312 = vector.extract_strided_slice %300 {offsets = [0, 32], sizes = [8, 32], strides = [1, 1]} : vector<8x96xf32> to vector<8x32xf32>
    %313 = arith.addf %311, %312 : vector<8x32xf32>
    %314 = arith.negf %313 : vector<8x32xf32>
    %315 = math.exp %314 : vector<8x32xf32>
    %cst_93 = arith.constant 1.000000e+00 : f32
    %316 = vector.broadcast %cst_93 : f32 to vector<8x32xf32>
    %317 = arith.addf %316, %315 : vector<8x32xf32>
    %318 = arith.divf %316, %317 : vector<8x32xf32>
    %319 = vector.extract_strided_slice %302 {offsets = [0, 64], sizes = [8, 32], strides = [1, 1]} : vector<8x96xf32> to vector<8x32xf32>
    %320 = vector.extract_strided_slice %300 {offsets = [0, 64], sizes = [8, 32], strides = [1, 1]} : vector<8x96xf32> to vector<8x32xf32>
    %321 = arith.addf %320, %7 : vector<8x32xf32>
    %322 = arith.mulf %310, %321 : vector<8x32xf32>
    %323 = arith.addf %319, %322 : vector<8x32xf32>
    %324 = math.tanh %323 : vector<8x32xf32>
    %cst_94 = arith.constant 1.000000e+00 : f32
    %325 = vector.broadcast %cst_94 : f32 to vector<8x32xf32>
    %326 = arith.subf %325, %318 : vector<8x32xf32>
    %327 = arith.mulf %326, %324 : vector<8x32xf32>
    %328 = arith.mulf %318, %297 : vector<8x32xf32>
    %329 = arith.addf %327, %328 : vector<8x32xf32>
    %330 = arith.index_cast %299 : i32 to index
    %c0_95 = arith.constant 0 : index
    %331 = vector.load %arg22[%330, %c0_95] : memref<64x32xf32, #tpu.memory_space<vmem>>, vector<8x32xf32>
    tpu.vector_store %arg22[%330, %c0_95], %329 {strides = array<i32>} : memref<64x32xf32, #tpu.memory_space<vmem>>, vector<8x32xf32>,
    %c1_i32_96 = arith.constant 1 : i32
    %c8_i32_97 = arith.constant 8 : i32
    %332 = arith.muli %c1_i32_96, %c8_i32_97 : i32
    %333 = tpu.assume_multiple %332, 8 : i32
    %cst_98 = arith.constant dense<0.000000e+00> : vector<8x96xf32>
    %334 = tpu.matmul %329, %1, %cst_98 {dimension_numbers = #tpu.dot_dimension_numbers<[1], [0], [0], [1], [0, 0, 1, 1], [], []>} : vector<8x32xf32>, vector<32x96xf32>, vector<8x96xf32> -> vector<8x96xf32>
    %335 = arith.index_cast %333 : i32 to index
    %c0_99 = arith.constant 0 : index
    %336 = vector.load %arg21[%335, %c0_99] : memref<64x96xf32, #tpu.memory_space<vmem>>, vector<8x96xf32>
    %337 = vector.extract_strided_slice %336 {offsets = [0, 0], sizes = [8, 32], strides = [1, 1]} : vector<8x96xf32> to vector<8x32xf32>
    %338 = vector.extract_strided_slice %334 {offsets = [0, 0], sizes = [8, 32], strides = [1, 1]} : vector<8x96xf32> to vector<8x32xf32>
    %339 = arith.addf %337, %338 : vector<8x32xf32>
    %340 = arith.negf %339 : vector<8x32xf32>
    %341 = math.exp %340 : vector<8x32xf32>
    %cst_100 = arith.constant 1.000000e+00 : f32
    %342 = vector.broadcast %cst_100 : f32 to vector<8x32xf32>
    %343 = arith.addf %342, %341 : vector<8x32xf32>
    %344 = arith.divf %342, %343 : vector<8x32xf32>
    %345 = vector.extract_strided_slice %336 {offsets = [0, 32], sizes = [8, 32], strides = [1, 1]} : vector<8x96xf32> to vector<8x32xf32>
    %346 = vector.extract_strided_slice %334 {offsets = [0, 32], sizes = [8, 32], strides = [1, 1]} : vector<8x96xf32> to vector<8x32xf32>
    %347 = arith.addf %345, %346 : vector<8x32xf32>
    %348 = arith.negf %347 : vector<8x32xf32>
    %349 = math.exp %348 : vector<8x32xf32>
    %cst_101 = arith.constant 1.000000e+00 : f32
    %350 = vector.broadcast %cst_101 : f32 to vector<8x32xf32>
    %351 = arith.addf %350, %349 : vector<8x32xf32>
    %352 = arith.divf %350, %351 : vector<8x32xf32>
    %353 = vector.extract_strided_slice %336 {offsets = [0, 64], sizes = [8, 32], strides = [1, 1]} : vector<8x96xf32> to vector<8x32xf32>
    %354 = vector.extract_strided_slice %334 {offsets = [0, 64], sizes = [8, 32], strides = [1, 1]} : vector<8x96xf32> to vector<8x32xf32>
    %355 = arith.addf %354, %7 : vector<8x32xf32>
    %356 = arith.mulf %344, %355 : vector<8x32xf32>
    %357 = arith.addf %353, %356 : vector<8x32xf32>
    %358 = math.tanh %357 : vector<8x32xf32>
    %cst_102 = arith.constant 1.000000e+00 : f32
    %359 = vector.broadcast %cst_102 : f32 to vector<8x32xf32>
    %360 = arith.subf %359, %352 : vector<8x32xf32>
    %361 = arith.mulf %360, %358 : vector<8x32xf32>
    %362 = arith.mulf %352, %329 : vector<8x32xf32>
    %363 = arith.addf %361, %362 : vector<8x32xf32>
    %364 = arith.index_cast %333 : i32 to index
    %c0_103 = arith.constant 0 : index
    %365 = vector.load %arg22[%364, %c0_103] : memref<64x32xf32, #tpu.memory_space<vmem>>, vector<8x32xf32>
    tpu.vector_store %arg22[%364, %c0_103], %363 {strides = array<i32>} : memref<64x32xf32, #tpu.memory_space<vmem>>, vector<8x32xf32>,
    %c2_i32_104 = arith.constant 2 : i32
    %c8_i32_105 = arith.constant 8 : i32
    %366 = arith.muli %c2_i32_104, %c8_i32_105 : i32
    %367 = tpu.assume_multiple %366, 8 : i32
    %cst_106 = arith.constant dense<0.000000e+00> : vector<8x96xf32>
    %368 = tpu.matmul %363, %1, %cst_106 {dimension_numbers = #tpu.dot_dimension_numbers<[1], [0], [0], [1], [0, 0, 1, 1], [], []>} : vector<8x32xf32>, vector<32x96xf32>, vector<8x96xf32> -> vector<8x96xf32>
    %369 = arith.index_cast %367 : i32 to index
    %c0_107 = arith.constant 0 : index
    %370 = vector.load %arg21[%369, %c0_107] : memref<64x96xf32, #tpu.memory_space<vmem>>, vector<8x96xf32>
    %371 = vector.extract_strided_slice %370 {offsets = [0, 0], sizes = [8, 32], strides = [1, 1]} : vector<8x96xf32> to vector<8x32xf32>
    %372 = vector.extract_strided_slice %368 {offsets = [0, 0], sizes = [8, 32], strides = [1, 1]} : vector<8x96xf32> to vector<8x32xf32>
    %373 = arith.addf %371, %372 : vector<8x32xf32>
    %374 = arith.negf %373 : vector<8x32xf32>
    %375 = math.exp %374 : vector<8x32xf32>
    %cst_108 = arith.constant 1.000000e+00 : f32
    %376 = vector.broadcast %cst_108 : f32 to vector<8x32xf32>
    %377 = arith.addf %376, %375 : vector<8x32xf32>
    %378 = arith.divf %376, %377 : vector<8x32xf32>
    %379 = vector.extract_strided_slice %370 {offsets = [0, 32], sizes = [8, 32], strides = [1, 1]} : vector<8x96xf32> to vector<8x32xf32>
    %380 = vector.extract_strided_slice %368 {offsets = [0, 32], sizes = [8, 32], strides = [1, 1]} : vector<8x96xf32> to vector<8x32xf32>
    %381 = arith.addf %379, %380 : vector<8x32xf32>
    %382 = arith.negf %381 : vector<8x32xf32>
    %383 = math.exp %382 : vector<8x32xf32>
    %cst_109 = arith.constant 1.000000e+00 : f32
    %384 = vector.broadcast %cst_109 : f32 to vector<8x32xf32>
    %385 = arith.addf %384, %383 : vector<8x32xf32>
    %386 = arith.divf %384, %385 : vector<8x32xf32>
    %387 = vector.extract_strided_slice %370 {offsets = [0, 64], sizes = [8, 32], strides = [1, 1]} : vector<8x96xf32> to vector<8x32xf32>
    %388 = vector.extract_strided_slice %368 {offsets = [0, 64], sizes = [8, 32], strides = [1, 1]} : vector<8x96xf32> to vector<8x32xf32>
    %389 = arith.addf %388, %7 : vector<8x32xf32>
    %390 = arith.mulf %378, %389 : vector<8x32xf32>
    %391 = arith.addf %387, %390 : vector<8x32xf32>
    %392 = math.tanh %391 : vector<8x32xf32>
    %cst_110 = arith.constant 1.000000e+00 : f32
    %393 = vector.broadcast %cst_110 : f32 to vector<8x32xf32>
    %394 = arith.subf %393, %386 : vector<8x32xf32>
    %395 = arith.mulf %394, %392 : vector<8x32xf32>
    %396 = arith.mulf %386, %363 : vector<8x32xf32>
    %397 = arith.addf %395, %396 : vector<8x32xf32>
    %398 = arith.index_cast %367 : i32 to index
    %c0_111 = arith.constant 0 : index
    %399 = vector.load %arg22[%398, %c0_111] : memref<64x32xf32, #tpu.memory_space<vmem>>, vector<8x32xf32>
    tpu.vector_store %arg22[%398, %c0_111], %397 {strides = array<i32>} : memref<64x32xf32, #tpu.memory_space<vmem>>, vector<8x32xf32>,
    %c3_i32_112 = arith.constant 3 : i32
    %c8_i32_113 = arith.constant 8 : i32
    %400 = arith.muli %c3_i32_112, %c8_i32_113 : i32
    %401 = tpu.assume_multiple %400, 8 : i32
    %cst_114 = arith.constant dense<0.000000e+00> : vector<8x96xf32>
    %402 = tpu.matmul %397, %1, %cst_114 {dimension_numbers = #tpu.dot_dimension_numbers<[1], [0], [0], [1], [0, 0, 1, 1], [], []>} : vector<8x32xf32>, vector<32x96xf32>, vector<8x96xf32> -> vector<8x96xf32>
    %403 = arith.index_cast %401 : i32 to index
    %c0_115 = arith.constant 0 : index
    %404 = vector.load %arg21[%403, %c0_115] : memref<64x96xf32, #tpu.memory_space<vmem>>, vector<8x96xf32>
    %405 = vector.extract_strided_slice %404 {offsets = [0, 0], sizes = [8, 32], strides = [1, 1]} : vector<8x96xf32> to vector<8x32xf32>
    %406 = vector.extract_strided_slice %402 {offsets = [0, 0], sizes = [8, 32], strides = [1, 1]} : vector<8x96xf32> to vector<8x32xf32>
    %407 = arith.addf %405, %406 : vector<8x32xf32>
    %408 = arith.negf %407 : vector<8x32xf32>
    %409 = math.exp %408 : vector<8x32xf32>
    %cst_116 = arith.constant 1.000000e+00 : f32
    %410 = vector.broadcast %cst_116 : f32 to vector<8x32xf32>
    %411 = arith.addf %410, %409 : vector<8x32xf32>
    %412 = arith.divf %410, %411 : vector<8x32xf32>
    %413 = vector.extract_strided_slice %404 {offsets = [0, 32], sizes = [8, 32], strides = [1, 1]} : vector<8x96xf32> to vector<8x32xf32>
    %414 = vector.extract_strided_slice %402 {offsets = [0, 32], sizes = [8, 32], strides = [1, 1]} : vector<8x96xf32> to vector<8x32xf32>
    %415 = arith.addf %413, %414 : vector<8x32xf32>
    %416 = arith.negf %415 : vector<8x32xf32>
    %417 = math.exp %416 : vector<8x32xf32>
    %cst_117 = arith.constant 1.000000e+00 : f32
    %418 = vector.broadcast %cst_117 : f32 to vector<8x32xf32>
    %419 = arith.addf %418, %417 : vector<8x32xf32>
    %420 = arith.divf %418, %419 : vector<8x32xf32>
    %421 = vector.extract_strided_slice %404 {offsets = [0, 64], sizes = [8, 32], strides = [1, 1]} : vector<8x96xf32> to vector<8x32xf32>
    %422 = vector.extract_strided_slice %402 {offsets = [0, 64], sizes = [8, 32], strides = [1, 1]} : vector<8x96xf32> to vector<8x32xf32>
    %423 = arith.addf %422, %7 : vector<8x32xf32>
    %424 = arith.mulf %412, %423 : vector<8x32xf32>
    %425 = arith.addf %421, %424 : vector<8x32xf32>
    %426 = math.tanh %425 : vector<8x32xf32>
    %cst_118 = arith.constant 1.000000e+00 : f32
    %427 = vector.broadcast %cst_118 : f32 to vector<8x32xf32>
    %428 = arith.subf %427, %420 : vector<8x32xf32>
    %429 = arith.mulf %428, %426 : vector<8x32xf32>
    %430 = arith.mulf %420, %397 : vector<8x32xf32>
    %431 = arith.addf %429, %430 : vector<8x32xf32>
    %432 = arith.index_cast %401 : i32 to index
    %c0_119 = arith.constant 0 : index
    %433 = vector.load %arg22[%432, %c0_119] : memref<64x32xf32, #tpu.memory_space<vmem>>, vector<8x32xf32>
    tpu.vector_store %arg22[%432, %c0_119], %431 {strides = array<i32>} : memref<64x32xf32, #tpu.memory_space<vmem>>, vector<8x32xf32>,
    %c4_i32_120 = arith.constant 4 : i32
    %c8_i32_121 = arith.constant 8 : i32
    %434 = arith.muli %c4_i32_120, %c8_i32_121 : i32
    %435 = tpu.assume_multiple %434, 8 : i32
    %cst_122 = arith.constant dense<0.000000e+00> : vector<8x96xf32>
    %436 = tpu.matmul %431, %1, %cst_122 {dimension_numbers = #tpu.dot_dimension_numbers<[1], [0], [0], [1], [0, 0, 1, 1], [], []>} : vector<8x32xf32>, vector<32x96xf32>, vector<8x96xf32> -> vector<8x96xf32>
    %437 = arith.index_cast %435 : i32 to index
    %c0_123 = arith.constant 0 : index
    %438 = vector.load %arg21[%437, %c0_123] : memref<64x96xf32, #tpu.memory_space<vmem>>, vector<8x96xf32>
    %439 = vector.extract_strided_slice %438 {offsets = [0, 0], sizes = [8, 32], strides = [1, 1]} : vector<8x96xf32> to vector<8x32xf32>
    %440 = vector.extract_strided_slice %436 {offsets = [0, 0], sizes = [8, 32], strides = [1, 1]} : vector<8x96xf32> to vector<8x32xf32>
    %441 = arith.addf %439, %440 : vector<8x32xf32>
    %442 = arith.negf %441 : vector<8x32xf32>
    %443 = math.exp %442 : vector<8x32xf32>
    %cst_124 = arith.constant 1.000000e+00 : f32
    %444 = vector.broadcast %cst_124 : f32 to vector<8x32xf32>
    %445 = arith.addf %444, %443 : vector<8x32xf32>
    %446 = arith.divf %444, %445 : vector<8x32xf32>
    %447 = vector.extract_strided_slice %438 {offsets = [0, 32], sizes = [8, 32], strides = [1, 1]} : vector<8x96xf32> to vector<8x32xf32>
    %448 = vector.extract_strided_slice %436 {offsets = [0, 32], sizes = [8, 32], strides = [1, 1]} : vector<8x96xf32> to vector<8x32xf32>
    %449 = arith.addf %447, %448 : vector<8x32xf32>
    %450 = arith.negf %449 : vector<8x32xf32>
    %451 = math.exp %450 : vector<8x32xf32>
    %cst_125 = arith.constant 1.000000e+00 : f32
    %452 = vector.broadcast %cst_125 : f32 to vector<8x32xf32>
    %453 = arith.addf %452, %451 : vector<8x32xf32>
    %454 = arith.divf %452, %453 : vector<8x32xf32>
    %455 = vector.extract_strided_slice %438 {offsets = [0, 64], sizes = [8, 32], strides = [1, 1]} : vector<8x96xf32> to vector<8x32xf32>
    %456 = vector.extract_strided_slice %436 {offsets = [0, 64], sizes = [8, 32], strides = [1, 1]} : vector<8x96xf32> to vector<8x32xf32>
    %457 = arith.addf %456, %7 : vector<8x32xf32>
    %458 = arith.mulf %446, %457 : vector<8x32xf32>
    %459 = arith.addf %455, %458 : vector<8x32xf32>
    %460 = math.tanh %459 : vector<8x32xf32>
    %cst_126 = arith.constant 1.000000e+00 : f32
    %461 = vector.broadcast %cst_126 : f32 to vector<8x32xf32>
    %462 = arith.subf %461, %454 : vector<8x32xf32>
    %463 = arith.mulf %462, %460 : vector<8x32xf32>
    %464 = arith.mulf %454, %431 : vector<8x32xf32>
    %465 = arith.addf %463, %464 : vector<8x32xf32>
    %466 = arith.index_cast %435 : i32 to index
    %c0_127 = arith.constant 0 : index
    %467 = vector.load %arg22[%466, %c0_127] : memref<64x32xf32, #tpu.memory_space<vmem>>, vector<8x32xf32>
    tpu.vector_store %arg22[%466, %c0_127], %465 {strides = array<i32>} : memref<64x32xf32, #tpu.memory_space<vmem>>, vector<8x32xf32>,
    %c5_i32_128 = arith.constant 5 : i32
    %c8_i32_129 = arith.constant 8 : i32
    %468 = arith.muli %c5_i32_128, %c8_i32_129 : i32
    %469 = tpu.assume_multiple %468, 8 : i32
    %cst_130 = arith.constant dense<0.000000e+00> : vector<8x96xf32>
    %470 = tpu.matmul %465, %1, %cst_130 {dimension_numbers = #tpu.dot_dimension_numbers<[1], [0], [0], [1], [0, 0, 1, 1], [], []>} : vector<8x32xf32>, vector<32x96xf32>, vector<8x96xf32> -> vector<8x96xf32>
    %471 = arith.index_cast %469 : i32 to index
    %c0_131 = arith.constant 0 : index
    %472 = vector.load %arg21[%471, %c0_131] : memref<64x96xf32, #tpu.memory_space<vmem>>, vector<8x96xf32>
    %473 = vector.extract_strided_slice %472 {offsets = [0, 0], sizes = [8, 32], strides = [1, 1]} : vector<8x96xf32> to vector<8x32xf32>
    %474 = vector.extract_strided_slice %470 {offsets = [0, 0], sizes = [8, 32], strides = [1, 1]} : vector<8x96xf32> to vector<8x32xf32>
    %475 = arith.addf %473, %474 : vector<8x32xf32>
    %476 = arith.negf %475 : vector<8x32xf32>
    %477 = math.exp %476 : vector<8x32xf32>
    %cst_132 = arith.constant 1.000000e+00 : f32
    %478 = vector.broadcast %cst_132 : f32 to vector<8x32xf32>
    %479 = arith.addf %478, %477 : vector<8x32xf32>
    %480 = arith.divf %478, %479 : vector<8x32xf32>
    %481 = vector.extract_strided_slice %472 {offsets = [0, 32], sizes = [8, 32], strides = [1, 1]} : vector<8x96xf32> to vector<8x32xf32>
    %482 = vector.extract_strided_slice %470 {offsets = [0, 32], sizes = [8, 32], strides = [1, 1]} : vector<8x96xf32> to vector<8x32xf32>
    %483 = arith.addf %481, %482 : vector<8x32xf32>
    %484 = arith.negf %483 : vector<8x32xf32>
    %485 = math.exp %484 : vector<8x32xf32>
    %cst_133 = arith.constant 1.000000e+00 : f32
    %486 = vector.broadcast %cst_133 : f32 to vector<8x32xf32>
    %487 = arith.addf %486, %485 : vector<8x32xf32>
    %488 = arith.divf %486, %487 : vector<8x32xf32>
    %489 = vector.extract_strided_slice %472 {offsets = [0, 64], sizes = [8, 32], strides = [1, 1]} : vector<8x96xf32> to vector<8x32xf32>
    %490 = vector.extract_strided_slice %470 {offsets = [0, 64], sizes = [8, 32], strides = [1, 1]} : vector<8x96xf32> to vector<8x32xf32>
    %491 = arith.addf %490, %7 : vector<8x32xf32>
    %492 = arith.mulf %480, %491 : vector<8x32xf32>
    %493 = arith.addf %489, %492 : vector<8x32xf32>
    %494 = math.tanh %493 : vector<8x32xf32>
    %cst_134 = arith.constant 1.000000e+00 : f32
    %495 = vector.broadcast %cst_134 : f32 to vector<8x32xf32>
    %496 = arith.subf %495, %488 : vector<8x32xf32>
    %497 = arith.mulf %496, %494 : vector<8x32xf32>
    %498 = arith.mulf %488, %465 : vector<8x32xf32>
    %499 = arith.addf %497, %498 : vector<8x32xf32>
    %500 = arith.index_cast %469 : i32 to index
    %c0_135 = arith.constant 0 : index
    %501 = vector.load %arg22[%500, %c0_135] : memref<64x32xf32, #tpu.memory_space<vmem>>, vector<8x32xf32>
    tpu.vector_store %arg22[%500, %c0_135], %499 {strides = array<i32>} : memref<64x32xf32, #tpu.memory_space<vmem>>, vector<8x32xf32>,
    %c6_i32_136 = arith.constant 6 : i32
    %c8_i32_137 = arith.constant 8 : i32
    %502 = arith.muli %c6_i32_136, %c8_i32_137 : i32
    %503 = tpu.assume_multiple %502, 8 : i32
    %cst_138 = arith.constant dense<0.000000e+00> : vector<8x96xf32>
    %504 = tpu.matmul %499, %1, %cst_138 {dimension_numbers = #tpu.dot_dimension_numbers<[1], [0], [0], [1], [0, 0, 1, 1], [], []>} : vector<8x32xf32>, vector<32x96xf32>, vector<8x96xf32> -> vector<8x96xf32>
    %505 = arith.index_cast %503 : i32 to index
    %c0_139 = arith.constant 0 : index
    %506 = vector.load %arg21[%505, %c0_139] : memref<64x96xf32, #tpu.memory_space<vmem>>, vector<8x96xf32>
    %507 = vector.extract_strided_slice %506 {offsets = [0, 0], sizes = [8, 32], strides = [1, 1]} : vector<8x96xf32> to vector<8x32xf32>
    %508 = vector.extract_strided_slice %504 {offsets = [0, 0], sizes = [8, 32], strides = [1, 1]} : vector<8x96xf32> to vector<8x32xf32>
    %509 = arith.addf %507, %508 : vector<8x32xf32>
    %510 = arith.negf %509 : vector<8x32xf32>
    %511 = math.exp %510 : vector<8x32xf32>
    %cst_140 = arith.constant 1.000000e+00 : f32
    %512 = vector.broadcast %cst_140 : f32 to vector<8x32xf32>
    %513 = arith.addf %512, %511 : vector<8x32xf32>
    %514 = arith.divf %512, %513 : vector<8x32xf32>
    %515 = vector.extract_strided_slice %506 {offsets = [0, 32], sizes = [8, 32], strides = [1, 1]} : vector<8x96xf32> to vector<8x32xf32>
    %516 = vector.extract_strided_slice %504 {offsets = [0, 32], sizes = [8, 32], strides = [1, 1]} : vector<8x96xf32> to vector<8x32xf32>
    %517 = arith.addf %515, %516 : vector<8x32xf32>
    %518 = arith.negf %517 : vector<8x32xf32>
    %519 = math.exp %518 : vector<8x32xf32>
    %cst_141 = arith.constant 1.000000e+00 : f32
    %520 = vector.broadcast %cst_141 : f32 to vector<8x32xf32>
    %521 = arith.addf %520, %519 : vector<8x32xf32>
    %522 = arith.divf %520, %521 : vector<8x32xf32>
    %523 = vector.extract_strided_slice %506 {offsets = [0, 64], sizes = [8, 32], strides = [1, 1]} : vector<8x96xf32> to vector<8x32xf32>
    %524 = vector.extract_strided_slice %504 {offsets = [0, 64], sizes = [8, 32], strides = [1, 1]} : vector<8x96xf32> to vector<8x32xf32>
    %525 = arith.addf %524, %7 : vector<8x32xf32>
    %526 = arith.mulf %514, %525 : vector<8x32xf32>
    %527 = arith.addf %523, %526 : vector<8x32xf32>
    %528 = math.tanh %527 : vector<8x32xf32>
    %cst_142 = arith.constant 1.000000e+00 : f32
    %529 = vector.broadcast %cst_142 : f32 to vector<8x32xf32>
    %530 = arith.subf %529, %522 : vector<8x32xf32>
    %531 = arith.mulf %530, %528 : vector<8x32xf32>
    %532 = arith.mulf %522, %499 : vector<8x32xf32>
    %533 = arith.addf %531, %532 : vector<8x32xf32>
    %534 = arith.index_cast %503 : i32 to index
    %c0_143 = arith.constant 0 : index
    %535 = vector.load %arg22[%534, %c0_143] : memref<64x32xf32, #tpu.memory_space<vmem>>, vector<8x32xf32>
    tpu.vector_store %arg22[%534, %c0_143], %533 {strides = array<i32>} : memref<64x32xf32, #tpu.memory_space<vmem>>, vector<8x32xf32>,
    %c7_i32_144 = arith.constant 7 : i32
    %c8_i32_145 = arith.constant 8 : i32
    %536 = arith.muli %c7_i32_144, %c8_i32_145 : i32
    %537 = tpu.assume_multiple %536, 8 : i32
    %cst_146 = arith.constant dense<0.000000e+00> : vector<8x96xf32>
    %538 = tpu.matmul %533, %1, %cst_146 {dimension_numbers = #tpu.dot_dimension_numbers<[1], [0], [0], [1], [0, 0, 1, 1], [], []>} : vector<8x32xf32>, vector<32x96xf32>, vector<8x96xf32> -> vector<8x96xf32>
    %539 = arith.index_cast %537 : i32 to index
    %c0_147 = arith.constant 0 : index
    %540 = vector.load %arg21[%539, %c0_147] : memref<64x96xf32, #tpu.memory_space<vmem>>, vector<8x96xf32>
    %541 = vector.extract_strided_slice %540 {offsets = [0, 0], sizes = [8, 32], strides = [1, 1]} : vector<8x96xf32> to vector<8x32xf32>
    %542 = vector.extract_strided_slice %538 {offsets = [0, 0], sizes = [8, 32], strides = [1, 1]} : vector<8x96xf32> to vector<8x32xf32>
    %543 = arith.addf %541, %542 : vector<8x32xf32>
    %544 = arith.negf %543 : vector<8x32xf32>
    %545 = math.exp %544 : vector<8x32xf32>
    %cst_148 = arith.constant 1.000000e+00 : f32
    %546 = vector.broadcast %cst_148 : f32 to vector<8x32xf32>
    %547 = arith.addf %546, %545 : vector<8x32xf32>
    %548 = arith.divf %546, %547 : vector<8x32xf32>
    %549 = vector.extract_strided_slice %540 {offsets = [0, 32], sizes = [8, 32], strides = [1, 1]} : vector<8x96xf32> to vector<8x32xf32>
    %550 = vector.extract_strided_slice %538 {offsets = [0, 32], sizes = [8, 32], strides = [1, 1]} : vector<8x96xf32> to vector<8x32xf32>
    %551 = arith.addf %549, %550 : vector<8x32xf32>
    %552 = arith.negf %551 : vector<8x32xf32>
    %553 = math.exp %552 : vector<8x32xf32>
    %cst_149 = arith.constant 1.000000e+00 : f32
    %554 = vector.broadcast %cst_149 : f32 to vector<8x32xf32>
    %555 = arith.addf %554, %553 : vector<8x32xf32>
    %556 = arith.divf %554, %555 : vector<8x32xf32>
    %557 = vector.extract_strided_slice %540 {offsets = [0, 64], sizes = [8, 32], strides = [1, 1]} : vector<8x96xf32> to vector<8x32xf32>
    %558 = vector.extract_strided_slice %538 {offsets = [0, 64], sizes = [8, 32], strides = [1, 1]} : vector<8x96xf32> to vector<8x32xf32>
    %559 = arith.addf %558, %7 : vector<8x32xf32>
    %560 = arith.mulf %548, %559 : vector<8x32xf32>
    %561 = arith.addf %557, %560 : vector<8x32xf32>
    %562 = math.tanh %561 : vector<8x32xf32>
    %cst_150 = arith.constant 1.000000e+00 : f32
    %563 = vector.broadcast %cst_150 : f32 to vector<8x32xf32>
    %564 = arith.subf %563, %556 : vector<8x32xf32>
    %565 = arith.mulf %564, %562 : vector<8x32xf32>
    %566 = arith.mulf %556, %533 : vector<8x32xf32>
    %567 = arith.addf %565, %566 : vector<8x32xf32>
    %568 = arith.index_cast %537 : i32 to index
    %c0_151 = arith.constant 0 : index
    %569 = vector.load %arg22[%568, %c0_151] : memref<64x32xf32, #tpu.memory_space<vmem>>, vector<8x32xf32>
    tpu.vector_store %arg22[%568, %c0_151], %567 {strides = array<i32>} : memref<64x32xf32, #tpu.memory_space<vmem>>, vector<8x32xf32>,
    %c8_i32_152 = arith.constant 8 : i32
    %c0_153 = arith.constant 0 : index
    %c0_154 = arith.constant 0 : index
    %570 = vector.load %arg22[%c0_153, %c0_154] : memref<64x32xf32, #tpu.memory_space<vmem>>, vector<64x32xf32>
    %c0_155 = arith.constant 0 : index
    %c0_156 = arith.constant 0 : index
    %571 = vector.load %arg16[%c0_155, %c0_156] : memref<32x32xf32, #tpu.memory_space<vmem>>, vector<32x32xf32>
    %cst_157 = arith.constant dense<0.000000e+00> : vector<64x32xf32>
    %572 = tpu.matmul %570, %571, %cst_157 {dimension_numbers = #tpu.dot_dimension_numbers<[1], [0], [0], [1], [0, 0, 1, 1], [], []>} : vector<64x32xf32>, vector<32x32xf32>, vector<64x32xf32> -> vector<64x32xf32>
    %c0_158 = arith.constant 0 : index
    %c0_159 = arith.constant 0 : index
    %573 = vector.load %arg17[%c0_158, %c0_159] : memref<1x32xf32, #tpu.memory_space<vmem>>, vector<1x32xf32>
    %574 = vector.broadcast %573 : vector<1x32xf32> to vector<64x32xf32>
    %575 = arith.addf %572, %574 : vector<64x32xf32>
    %576 = vector.shape_cast %575 : vector<64x32xf32> to vector<8x8x32xf32>
    %cst_160 = arith.constant dense<0xFF800000> : vector<8x32xf32>
    %577 = vector.multi_reduction <maximumf>, %576, %cst_160 [0] : vector<8x8x32xf32> to vector<8x32xf32>
    %578 = vector.shape_cast %577 : vector<8x32xf32> to vector<1x8x32xf32>
    %579 = vector.broadcast %578 : vector<1x8x32xf32> to vector<8x8x32xf32>
    %580 = arith.subf %576, %579 : vector<8x8x32xf32>
    %581 = math.exp %580 : vector<8x8x32xf32>
    %cst_161 = arith.constant dense<0.000000e+00> : vector<8x32xf32>
    %582 = vector.multi_reduction <add>, %581, %cst_161 [0] : vector<8x8x32xf32> to vector<8x32xf32>
    %583 = vector.shape_cast %582 : vector<8x32xf32> to vector<1x8x32xf32>
    %584 = math.log %583 : vector<1x8x32xf32>
    %585 = arith.addf %584, %578 : vector<1x8x32xf32>
    %586 = vector.broadcast %585 : vector<1x8x32xf32> to vector<8x8x32xf32>
    %587 = arith.subf %576, %586 : vector<8x8x32xf32>
    %c0_162 = arith.constant 0 : index
    %c0_163 = arith.constant 0 : index
    %c0_164 = arith.constant 0 : index
    %588 = vector.load %arg19[%c0_162, %c0_163, %c0_164] : memref<8x8x32xf32, #tpu.memory_space<vmem>>, vector<8x8x32xf32>
    tpu.vector_store %arg19[%c0_162, %c0_163, %c0_164], %587 {strides = array<i32>} : memref<8x8x32xf32, #tpu.memory_space<vmem>>, vector<8x8x32xf32>,
    return
  }
  func.func @transform_0(%arg0: i32) -> (i32, i32) {
    %c0_i32 = arith.constant 0 : i32
    %c0_i32_0 = arith.constant 0 : i32
    %c0_i32_1 = arith.constant 0 : i32
    return %c0_i32, %c0_i32_0 : i32, i32
  }
  func.func @transform_1(%arg0: i32) -> (i32, i32) {
    %c0_i32 = arith.constant 0 : i32
    %c0_i32_0 = arith.constant 0 : i32
    %c0_i32_1 = arith.constant 0 : i32
    return %c0_i32, %c0_i32_0 : i32, i32
  }
  func.func @transform_2(%arg0: i32) -> (i32, i32) {
    %c0_i32 = arith.constant 0 : i32
    %c0_i32_0 = arith.constant 0 : i32
    %c0_i32_1 = arith.constant 0 : i32
    return %c0_i32, %c0_i32_0 : i32, i32
  }
  func.func @transform_3(%arg0: i32) -> (i32, i32) {
    %c0_i32 = arith.constant 0 : i32
    %c0_i32_0 = arith.constant 0 : i32
    %c0_i32_1 = arith.constant 0 : i32
    return %c0_i32, %c0_i32_0 : i32, i32
  }
  func.func @transform_4(%arg0: i32) -> (i32, i32) {
    %c0_i32 = arith.constant 0 : i32
    %c0_i32_0 = arith.constant 0 : i32
    %c0_i32_1 = arith.constant 0 : i32
    return %c0_i32, %c0_i32_0 : i32, i32
  }
  func.func @transform_5(%arg0: i32) -> (i32, i32) {
    %c0_i32 = arith.constant 0 : i32
    %c0_i32_0 = arith.constant 0 : i32
    %c0_i32_1 = arith.constant 0 : i32
    return %c0_i32, %c0_i32_0 : i32, i32
  }
  func.func @transform_6(%arg0: i32) -> (i32, i32) {
    %c0_i32 = arith.constant 0 : i32
    %c0_i32_0 = arith.constant 0 : i32
    %c0_i32_1 = arith.constant 0 : i32
    return %c0_i32, %c0_i32_0 : i32, i32
  }
  func.func @transform_7(%arg0: i32) -> (i32, i32) {
    %c0_i32 = arith.constant 0 : i32
    %c0_i32_0 = arith.constant 0 : i32
    %c0_i32_1 = arith.constant 0 : i32
    return %c0_i32, %c0_i32_0 : i32, i32
  }
  func.func @transform_8(%arg0: i32) -> (i32, i32) {
    %c0_i32 = arith.constant 0 : i32
    %c0_i32_0 = arith.constant 0 : i32
    %c0_i32_1 = arith.constant 0 : i32
    return %c0_i32, %c0_i32_0 : i32, i32
  }
  func.func @transform_9(%arg0: i32) -> (i32, i32) {
    %c0_i32 = arith.constant 0 : i32
    %c0_i32_0 = arith.constant 0 : i32
    %c0_i32_1 = arith.constant 0 : i32
    return %c0_i32, %c0_i32_0 : i32, i32
  }
  func.func @transform_10(%arg0: i32) -> (i32, i32) {
    %c0_i32 = arith.constant 0 : i32
    %c0_i32_0 = arith.constant 0 : i32
    %c0_i32_1 = arith.constant 0 : i32
    return %c0_i32, %c0_i32_0 : i32, i32
  }
  func.func @transform_11(%arg0: i32) -> (i32, i32) {
    %c0_i32 = arith.constant 0 : i32
    %c0_i32_0 = arith.constant 0 : i32
    %c0_i32_1 = arith.constant 0 : i32
    return %c0_i32, %c0_i32_0 : i32, i32
  }
  func.func @transform_12(%arg0: i32) -> (i32, i32) {
    %c0_i32 = arith.constant 0 : i32
    %c0_i32_0 = arith.constant 0 : i32
    %c0_i32_1 = arith.constant 0 : i32
    return %c0_i32, %c0_i32_0 : i32, i32
  }
  func.func @transform_13(%arg0: i32) -> (i32, i32) {
    %c0_i32 = arith.constant 0 : i32
    %c0_i32_0 = arith.constant 0 : i32
    %c0_i32_1 = arith.constant 0 : i32
    return %c0_i32, %c0_i32_0 : i32, i32
  }
  func.func @transform_14(%arg0: i32) -> (i32, i32) {
    %c0_i32 = arith.constant 0 : i32
    %c0_i32_0 = arith.constant 0 : i32
    %c0_i32_1 = arith.constant 0 : i32
    return %c0_i32, %c0_i32_0 : i32, i32
  }
  func.func @transform_15(%arg0: i32) -> (i32, i32) {
    %c0_i32 = arith.constant 0 : i32
    %c0_i32_0 = arith.constant 0 : i32
    %c0_i32_1 = arith.constant 0 : i32
    return %c0_i32, %c0_i32_0 : i32, i32
  }
  func.func @transform_16(%arg0: i32) -> (i32, i32) {
    %c0_i32 = arith.constant 0 : i32
    %c0_i32_0 = arith.constant 0 : i32
    %c0_i32_1 = arith.constant 0 : i32
    return %c0_i32, %c0_i32_0 : i32, i32
  }
  func.func @transform_17(%arg0: i32) -> (i32, i32) {
    %c0_i32 = arith.constant 0 : i32
    %c0_i32_0 = arith.constant 0 : i32
    %c0_i32_1 = arith.constant 0 : i32
    return %c0_i32, %c0_i32_0 : i32, i32
  }
  func.func @transform_18(%arg0: i32) -> (i32, i32, i32) {
    %c0_i32 = arith.constant 0 : i32
    %c0_i32_0 = arith.constant 0 : i32
    %c0_i32_1 = arith.constant 0 : i32
    %c0_i32_2 = arith.constant 0 : i32
    return %c0_i32, %c0_i32_0, %c0_i32_1 : i32, i32, i32
  }
}

</mosaic_0001>

<llo_original>
// kernel: vae_forward.1
$region0: #{vae_forward.1}
  #allocation0 [shape = 'u32[]', space=smem, size = 0x4, offset = 0x4, fixed_abs, tag = 'smem constant byte address 0x4 - core index']
  #allocation1 [shape = 'u32[144,128]{1,0:T(1,128)}', space=vmem, size = 0x12000, scoped, tag = 'internal scratch']
  #allocation2 [shape = 'f32[64,192]{1,0:T(8,128)}', space=vmem, size = 0x10000, scoped, tag = 'scratch operand']
  #allocation3 [shape = 'f32[64,96]{1,0:T(8,128)}', space=vmem, size = 0x8000, scoped, tag = 'scratch operand']
  #allocation4 [shape = 'f32[64,32]{1,0:T(8,128)}', space=vmem, size = 0x8000, scoped, tag = 'scratch operand']
  %s0 = inlined_call_operand.vmem [shape: f32[64,64], index: 0, kind: input, shape index: {}]
  %s1 = inlined_call_operand.vmem [shape: f32[64,32], index: 1, kind: input, shape index: {}]
  %s2 = inlined_call_operand.vmem [shape: f32[8,16], index: 2, kind: input, shape index: {}]
  %s3 = inlined_call_operand.vmem [shape: f32[64,192], index: 3, kind: input, shape index: {}]
  %s4 = inlined_call_operand.vmem [shape: f32[1,192], index: 4, kind: input, shape index: {}]
  %s5 = inlined_call_operand.vmem [shape: f32[64,192], index: 5, kind: input, shape index: {}]
  %s6 = inlined_call_operand.vmem [shape: f32[1,64], index: 6, kind: input, shape index: {}]
  %s7 = inlined_call_operand.vmem [shape: f32[64,32], index: 7, kind: input, shape index: {}]
  %s8 = inlined_call_operand.vmem [shape: f32[1,32], index: 8, kind: input, shape index: {}]
  %s9 = inlined_call_operand.vmem [shape: f32[16,32], index: 9, kind: input, shape index: {}]
  %s10 = inlined_call_operand.vmem [shape: f32[1,32], index: 10, kind: input, shape index: {}]
  %s11 = inlined_call_operand.vmem [shape: f32[32,96], index: 11, kind: input, shape index: {}]
  %s12 = inlined_call_operand.vmem [shape: f32[1,96], index: 12, kind: input, shape index: {}]
  %s13 = inlined_call_operand.vmem [shape: f32[32,96], index: 13, kind: input, shape index: {}]
  %s14 = inlined_call_operand.vmem [shape: f32[1,32], index: 14, kind: input, shape index: {}]
  %s15 = inlined_call_operand.vmem [shape: f32[32,32], index: 15, kind: input, shape index: {}]
  %s16 = inlined_call_operand.vmem [shape: f32[1,32], index: 16, kind: input, shape index: {}]
  %s17 = inlined_call_operand.vmem [shape: f32[8,32], index: 17, kind: output, shape index: {0}]
  %s18 = inlined_call_operand.vmem [shape: f32[8,8,32], index: 18, kind: output, shape index: {1}]
  %19 = xla_tuple %s17, %s18
  %s20 = sld [smem:[#allocation0]]
  $region86: #{vae_forward.1} parent=0
    _
  %s22 = ssub.s32 1, %s20
  %s23 = scalar_select 0, %s22, %s20
  // Predicated region
  $region2: #{vae_forward.1} parent=0 // pred_check
    _
  $region3: #{vae_forward.1} parent=0 // pred_check_branch
    %25 = sbr.rel (0) target = $region5
  $region4: #{vae_forward.1} parent=0 // pred_region
    _
  $region5: #{vae_forward.1} parent=0 // pred_fallthru
    _
  // Predicated region
  $region6: #{vae_forward.1} parent=0 // pred_check
    _
  $region7: #{vae_forward.1} parent=0 // pred_check_branch
    %27 = sbr.rel (0) target = $region9
  $region8: #{vae_forward.1} parent=0 // pred_region
    _
  $region9: #{vae_forward.1} parent=0 // pred_fallthru
    _
  // Predicated region
  $region10: #{vae_forward.1} parent=0 // pred_check
    _
  $region11: #{vae_forward.1} parent=0 // pred_check_branch
    %29 = sbr.rel (0) target = $region13
  $region12: #{vae_forward.1} parent=0 // pred_region
    _
  $region13: #{vae_forward.1} parent=0 // pred_fallthru
    _
  // Predicated region
  $region14: #{vae_forward.1} parent=0 // pred_check
    _
  $region15: #{vae_forward.1} parent=0 // pred_check_branch
    %31 = sbr.rel (0) target = $region17
  $region16: #{vae_forward.1} parent=0 // pred_region
    _
  $region17: #{vae_forward.1} parent=0 // pred_fallthru
    _
  // Predicated region
  $region18: #{vae_forward.1} parent=0 // pred_check
    _
  $region19: #{vae_forward.1} parent=0 // pred_check_branch
    %33 = sbr.rel (0) target = $region21
  $region20: #{vae_forward.1} parent=0 // pred_region
    _
  $region21: #{vae_forward.1} parent=0 // pred_fallthru
    _
  // Predicated region
  $region22: #{vae_forward.1} parent=0 // pred_check
    _
  $region23: #{vae_forward.1} parent=0 // pred_check_branch
    %35 = sbr.rel (0) target = $region25
  $region24: #{vae_forward.1} parent=0 // pred_region
    _
  $region25: #{vae_forward.1} parent=0 // pred_fallthru
    _
  // Predicated region
  $region26: #{vae_forward.1} parent=0 // pred_check
    _
  $region27: #{vae_forward.1} parent=0 // pred_check_branch
    %37 = sbr.rel (0) target = $region29
  $region28: #{vae_forward.1} parent=0 // pred_region
    _
  $region29: #{vae_forward.1} parent=0 // pred_fallthru
    _
  // Predicated region
  $region30: #{vae_forward.1} parent=0 // pred_check
    _
  $region31: #{vae_forward.1} parent=0 // pred_check_branch
    %39 = sbr.rel (0) target = $region33
  $region32: #{vae_forward.1} parent=0 // pred_region
    _
  $region33: #{vae_forward.1} parent=0 // pred_fallthru
    _
  // Predicated region
  $region34: #{vae_forward.1} parent=0 // pred_check
    _
  $region35: #{vae_forward.1} parent=0 // pred_check_branch
    %41 = sbr.rel (0) target = $region37
  $region36: #{vae_forward.1} parent=0 // pred_region
    _
  $region37: #{vae_forward.1} parent=0 // pred_fallthru
    _
  // Predicated region
  $region38: #{vae_forward.1} parent=0 // pred_check
    _
  $region39: #{vae_forward.1} parent=0 // pred_check_branch
    %43 = sbr.rel (0) target = $region41
  $region40: #{vae_forward.1} parent=0 // pred_region
    _
  $region41: #{vae_forward.1} parent=0 // pred_fallthru
    _
  // Predicated region
  $region42: #{vae_forward.1} parent=0 // pred_check
    _
  $region43: #{vae_forward.1} parent=0 // pred_check_branch
    %45 = sbr.rel (0) target = $region45
  $region44: #{vae_forward.1} parent=0 // pred_region
    _
  $region45: #{vae_forward.1} parent=0 // pred_fallthru
    _
  // Predicated region
  $region46: #{vae_forward.1} parent=0 // pred_check
    _
  $region47: #{vae_forward.1} parent=0 // pred_check_branch
    %47 = sbr.rel (0) target = $region49
  $region48: #{vae_forward.1} parent=0 // pred_region
    _
  $region49: #{vae_forward.1} parent=0 // pred_fallthru
    _
  // Predicated region
  $region50: #{vae_forward.1} parent=0 // pred_check
    _
  $region51: #{vae_forward.1} parent=0 // pred_check_branch
    %49 = sbr.rel (0) target = $region53
  $region52: #{vae_forward.1} parent=0 // pred_region
    _
  $region53: #{vae_forward.1} parent=0 // pred_fallthru
    _
  // Predicated region
  $region54: #{vae_forward.1} parent=0 // pred_check
    _
  $region55: #{vae_forward.1} parent=0 // pred_check_branch
    %51 = sbr.rel (0) target = $region57
  $region56: #{vae_forward.1} parent=0 // pred_region
    _
  $region57: #{vae_forward.1} parent=0 // pred_fallthru
    _
  // Predicated region
  $region58: #{vae_forward.1} parent=0 // pred_check
    _
  $region59: #{vae_forward.1} parent=0 // pred_check_branch
    %53 = sbr.rel (0) target = $region61
  $region60: #{vae_forward.1} parent=0 // pred_region
    _
  $region61: #{vae_forward.1} parent=0 // pred_fallthru
    _
  // Predicated region
  $region62: #{vae_forward.1} parent=0 // pred_check
    _
  $region63: #{vae_forward.1} parent=0 // pred_check_branch
    %55 = sbr.rel (0) target = $region65
  $region64: #{vae_forward.1} parent=0 // pred_region
    _
  $region65: #{vae_forward.1} parent=0 // pred_fallthru
    _
  // Predicated region
  $region66: #{vae_forward.1} parent=0 // pred_check
    _
  $region67: #{vae_forward.1} parent=0 // pred_check_branch
    %57 = sbr.rel (0) target = $region69
  $region68: #{vae_forward.1} parent=0 // pred_region
    _
  $region69: #{vae_forward.1} parent=0 // pred_fallthru
    _
  %v58 = vld [vmem:[%s5] sm:$0xff]
  %v59 = vld [vmem:[%s5 + $0x8] sm:$0xff]
  %v60 = vld [vmem:[%s5 + $0x10] sm:$0xff]
  %v61 = vld [vmem:[%s5 + $0x18] sm:$0xff]
  %v62 = vld [vmem:[%s5 + $0x20] sm:$0xff]
  %v63 = vld [vmem:[%s5 + $0x28] sm:$0xff]
  %v64 = vld [vmem:[%s5 + $0x30] sm:$0xff]
  %v65 = vld [vmem:[%s5 + $0x38] sm:$0xff]
  %v66 = vld [vmem:[%s5 + $0x40] sm:$0xff]
  %v67 = vld [vmem:[%s5 + $0x48] sm:$0xff]
  %v68 = vld [vmem:[%s5 + $0x50] sm:$0xff]
  %v69 = vld [vmem:[%s5 + $0x58] sm:$0xff]
  %v70 = vld [vmem:[%s5 + $0x60] sm:$0xff]
  %v71 = vld [vmem:[%s5 + $0x68] sm:$0xff]
  %v72 = vld [vmem:[%s5 + $0x70] sm:$0xff]
  %v73 = vld [vmem:[%s5 + $0x78] sm:$0xff]
  %v74 = vld [vmem:[%s13] sm:$0xff]
  %v75 = vld [vmem:[%s13 + $0x8] sm:$0xff]
  %v76 = vld [vmem:[%s13 + $0x10] sm:$0xff]
  %v77 = vld [vmem:[%s13 + $0x18] sm:$0xff]
  %v78 = vld [vmem:[%s6] sm:$0x1]
  %v80 = vlaneseq
  %v81 = vshrl.u32 %v80, 7
  %v82 = vsub.s32 0, %v81
  %v83 = vrot.slane %v78, %v82
  %v85 = vld [vmem:[%s14] sm:$0x1]
  %v87 = vlaneseq
  %v88 = vshrl.u32 %v87, 7
  %v89 = vsub.s32 0, %v88
  %v90 = vrot.slane %v85, %v89
  %v91 = vld [vmem:[%s0] sm:$0xff]
  %v92 = vld [vmem:[%s0 + $0x8] sm:$0xff]
  %v93 = vld [vmem:[%s0 + $0x10] sm:$0xff]
  %v94 = vld [vmem:[%s0 + $0x18] sm:$0xff]
  %v95 = vld [vmem:[%s0 + $0x20] sm:$0xff]
  %v96 = vld [vmem:[%s0 + $0x28] sm:$0xff]
  %v97 = vld [vmem:[%s0 + $0x30] sm:$0xff]
  %v98 = vld [vmem:[%s0 + $0x38] sm:$0xff]
  %v99 = vld [vmem:[%s3] sm:$0xff]
  %v100 = vld [vmem:[%s3 + $0x8] sm:$0xff]
  %v101 = vld [vmem:[%s3 + $0x10] sm:$0xff]
  %v102 = vld [vmem:[%s3 + $0x18] sm:$0xff]
  %v103 = vld [vmem:[%s3 + $0x20] sm:$0xff]
  %v104 = vld [vmem:[%s3 + $0x28] sm:$0xff]
  %v105 = vld [vmem:[%s3 + $0x30] sm:$0xff]
  %v106 = vld [vmem:[%s3 + $0x38] sm:$0xff]
  %v107 = vld [vmem:[%s3 + $0x40] sm:$0xff]
  %v108 = vld [vmem:[%s3 + $0x48] sm:$0xff]
  %v109 = vld [vmem:[%s3 + $0x50] sm:$0xff]
  %v110 = vld [vmem:[%s3 + $0x58] sm:$0xff]
  %v111 = vld [vmem:[%s3 + $0x60] sm:$0xff]
  %v112 = vld [vmem:[%s3 + $0x68] sm:$0xff]
  %v113 = vld [vmem:[%s3 + $0x70] sm:$0xff]
  %v114 = vld [vmem:[%s3 + $0x78] sm:$0xff]
  %v115 = vld [vmem:[%s4] sm:$0x3]
  %v117 = vlaneseq
  %v118 = vshrl.u32 %v117, 7
  %v119 = vsub.s32 0, %v118
  %v120 = vrot.slane %v115, %v119
  %v121 = vlaneseq
  %v122 = vshrl.u32 %v121, 7
  %v123 = vsub.s32 1, %v122
  %v124 = vrot.slane %v115, %v123
  %vm127 = vcmask 523264
  %v129 = vsel %vm127, %v91, 0
  %v132 = vsel %vm127, %v92, 0
  %v135 = vsel %vm127, %v93, 0
  %v138 = vsel %vm127, %v94, 0
  %v141 = vsel %vm127, %v95, 0
  %v144 = vsel %vm127, %v96, 0
  %v147 = vsel %vm127, %v97, 0
  %v150 = vsel %vm127, %v98, 0
  %152 = vmatprep.subr.mxu0 0.0
  %153 = vmatpush1.msra.mxu0 0.0
  %154 = vmatprep.subr.mxu0 0.0
  %155 = vmatpush1.msra.mxu0 0.0
  %156 = vmatprep.subr.mxu0 0.0
  %157 = vmatpush1.msra.mxu0 0.0
  %158 = vmatprep.subr.mxu0 0.0
  %159 = vmatpush1.msra.mxu0 0.0
  %160 = vmatprep.subr.mxu0 0.0
  %161 = vmatpush1.msra.mxu0 0.0
  %162 = vmatprep.subr.mxu0 0.0
  %163 = vmatpush1.msra.mxu0 0.0
  %164 = vmatprep.subr.mxu0 0.0
  %165 = vmatpush1.msra.mxu0 0.0
  %166 = vmatprep.subr.mxu0 0.0
  %167 = vmatpush1.msra.mxu0 0.0
  %168 = vmatprep.subr.mxu0 %v114
  %169 = vmatpush1.msra.mxu0 %v113
  %170 = vmatprep.subr.mxu0 %v112
  %171 = vmatpush1.msra.mxu0 %v111
  %172 = vmatprep.subr.mxu0 %v110
  %173 = vmatpush1.msra.mxu0 %v109
  %174 = vmatprep.subr.mxu0 %v108
  %175 = vmatpush1.msra.mxu0 %v107
  %176 = vmatprep.subr.mxu0 %v106
  %177 = vmatpush1.msra.mxu0 %v105
  %178 = vmatprep.subr.mxu0 %v104
  %179 = vmatpush1.msra.mxu0 %v103
  %180 = vmatprep.subr.mxu0 %v102
  %181 = vmatpush1.msra.mxu0 %v101
  %182 = vmatprep.subr.mxu0 %v100
  %183 = vmatpush1.msra.mxu0 %v99
  %184 = vmatprep.subr.mxu0 0.0
  %185 = vmatpush2.msra.mxu0 0.0
  %186 = vmatprep.subr.mxu0 0.0
  %187 = vmatpush2.msra.mxu0 0.0
  %188 = vmatprep.subr.mxu0 0.0
  %189 = vmatpush2.msra.mxu0 0.0
  %190 = vmatprep.subr.mxu0 0.0
  %191 = vmatpush2.msra.mxu0 0.0
  %192 = vmatprep.subr.mxu0 0.0
  %193 = vmatpush2.msra.mxu0 0.0
  %194 = vmatprep.subr.mxu0 0.0
  %195 = vmatpush2.msra.mxu0 0.0
  %196 = vmatprep.subr.mxu0 0.0
  %197 = vmatpush2.msra.mxu0 0.0
  %198 = vmatprep.subr.mxu0 0.0
  %199 = vmatpush2.msra.mxu0 0.0
  %200 = vmatprep.subr.mxu0 0.0
  %201 = vmatpush2.msra.mxu0 0.0
  %202 = vmatprep.subr.mxu0 0.0
  %203 = vmatpush2.msra.mxu0 0.0
  %204 = vmatprep.subr.mxu0 0.0
  %205 = vmatpush2.msra.mxu0 0.0
  %206 = vmatprep.subr.mxu0 0.0
  %207 = vmatpush2.msra.mxu0 0.0
  %208 = vmatprep.subr.mxu0 0.0
  %209 = vmatpush2.msra.mxu0 0.0
  %210 = vmatprep.subr.mxu0 0.0
  %211 = vmatpush2.msra.mxu0 0.0
  %212 = vmatprep.subr.mxu0 0.0
  %213 = vmatpush2.msra.mxu0 0.0
  %214 = vmatprep.subr.mxu0 0.0
  %215 = vmatpush2.msra.mxu0 0.0
  %216 = vmatprep.mubr.f32.mxu0 0.0
  %217 = vmatmul.mubr.f32.gmra.mxu0 %v129
  %v218 = vpop.f32.mrf.mxu0
  %v219 = vadd.f32 %v120, %v218
  %v220 = vpop.f32.mrf.mxu0
  %v221 = vadd.f32 %v124, %v220
  %222 = vmatprep.mubr.f32.mxu0 0.0
  %223 = vmatmul.mubr.f32.gmra.mxu0 %v132
  %v224 = vpop.f32.mrf.mxu0
  %v225 = vadd.f32 %v120, %v224
  %v226 = vpop.f32.mrf.mxu0
  %v227 = vadd.f32 %v124, %v226
  %228 = vmatprep.mubr.f32.mxu0 0.0
  %229 = vmatmul.mubr.f32.gmra.mxu0 %v135
  %v230 = vpop.f32.mrf.mxu0
  %v231 = vadd.f32 %v120, %v230
  %v232 = vpop.f32.mrf.mxu0
  %v233 = vadd.f32 %v124, %v232
  %234 = vmatprep.mubr.f32.mxu0 0.0
  %235 = vmatmul.mubr.f32.gmra.mxu0 %v138
  %v236 = vpop.f32.mrf.mxu0
  %v237 = vadd.f32 %v120, %v236
  %v238 = vpop.f32.mrf.mxu0
  %v239 = vadd.f32 %v124, %v238
  %240 = vmatprep.mubr.f32.mxu0 0.0
  %241 = vmatmul.mubr.f32.gmra.mxu0 %v141
  %v242 = vpop.f32.mrf.mxu0
  %v243 = vadd.f32 %v120, %v242
  %v244 = vpop.f32.mrf.mxu0
  %v245 = vadd.f32 %v124, %v244
  %246 = vmatprep.mubr.f32.mxu0 0.0
  %247 = vmatmul.mubr.f32.gmra.mxu0 %v144
  %v248 = vpop.f32.mrf.mxu0
  %v249 = vadd.f32 %v120, %v248
  %v250 = vpop.f32.mrf.mxu0
  %v251 = vadd.f32 %v124, %v250
  %252 = vmatprep.mubr.f32.mxu0 0.0
  %253 = vmatmul.mubr.f32.gmra.mxu0 %v147
  %v254 = vpop.f32.mrf.mxu0
  %v255 = vadd.f32 %v120, %v254
  %v256 = vpop.f32.mrf.mxu0
  %v257 = vadd.f32 %v124, %v256
  %258 = vmatprep.mubr.f32.mxu0 0.0
  %259 = vmatmul.mubr.f32.gmra.mxu0 %v150
  %v260 = vpop.f32.mrf.mxu0
  %v261 = vadd.f32 %v120, %v260
  %v262 = vpop.f32.mrf.mxu0
  %v263 = vadd.f32 %v124, %v262
  %264 = vdwg.mxu0
  %265 = vst [vmem:[#allocation2] sm:$0xff] %v219
  %266 = vst.msk [vmem:[#allocation2 + $0x8] sm:$0xff] %vm127, %v221
  %267 = vst [vmem:[#allocation2 + $0x10] sm:$0xff] %v225
  %268 = vst.msk [vmem:[#allocation2 + $0x18] sm:$0xff] %vm127, %v227
  %269 = vst [vmem:[#allocation2 + $0x20] sm:$0xff] %v231
  %270 = vst.msk [vmem:[#allocation2 + $0x28] sm:$0xff] %vm127, %v233
  %271 = vst [vmem:[#allocation2 + $0x30] sm:$0xff] %v237
  %272 = vst.msk [vmem:[#allocation2 + $0x38] sm:$0xff] %vm127, %v239
  %273 = vst [vmem:[#allocation2 + $0x40] sm:$0xff] %v243
  %274 = vst.msk [vmem:[#allocation2 + $0x48] sm:$0xff] %vm127, %v245
  %275 = vst [vmem:[#allocation2 + $0x50] sm:$0xff] %v249
  %276 = vst.msk [vmem:[#allocation2 + $0x58] sm:$0xff] %vm127, %v251
  %277 = vst [vmem:[#allocation2 + $0x60] sm:$0xff] %v255
  %278 = vst.msk [vmem:[#allocation2 + $0x68] sm:$0xff] %vm127, %v257
  %279 = vst [vmem:[#allocation2 + $0x70] sm:$0xff] %v261
  %280 = vst.msk [vmem:[#allocation2 + $0x78] sm:$0xff] %vm127, %v263
  %v281 = vld [vmem:[%s1] sm:$0xff]
  %v282 = vld [vmem:[%s1 + $0x8] sm:$0xff]
  %v283 = vld [vmem:[%s1 + $0x10] sm:$0xff]
  %v284 = vld [vmem:[%s1 + $0x18] sm:$0xff]
  %v285 = vld [vmem:[%s1 + $0x20] sm:$0xff]
  %v286 = vld [vmem:[%s1 + $0x28] sm:$0xff]
  %v287 = vld [vmem:[%s1 + $0x30] sm:$0xff]
  %v288 = vld [vmem:[%s1 + $0x38] sm:$0xff]
  %v289 = vld [vmem:[%s11] sm:$0xff]
  %v290 = vld [vmem:[%s11 + $0x8] sm:$0xff]
  %v291 = vld [vmem:[%s11 + $0x10] sm:$0xff]
  %v292 = vld [vmem:[%s11 + $0x18] sm:$0xff]
  %v293 = vld [vmem:[%s12] sm:$0x1]
  %v295 = vlaneseq
  %v296 = vshrl.u32 %v295, 7
  %v297 = vsub.s32 0, %v296
  %v298 = vrot.slane %v293, %v297
  %vm300 = vcmask 261120
  %v302 = vsel %vm300, %v281, 0
  %v305 = vsel %vm300, %v282, 0
  %v308 = vsel %vm300, %v283, 0
  %v311 = vsel %vm300, %v284, 0
  %v314 = vsel %vm300, %v285, 0
  %v317 = vsel %vm300, %v286, 0
  %v320 = vsel %vm300, %v287, 0
  %v323 = vsel %vm300, %v288, 0
  %325 = vmatprep.subr.mxu0 0.0
  %326 = vmatpush1.msra.mxu0 0.0
  %327 = vmatprep.subr.mxu0 0.0
  %328 = vmatpush1.msra.mxu0 0.0
  %329 = vmatprep.subr.mxu0 0.0
  %330 = vmatpush1.msra.mxu0 0.0
  %331 = vmatprep.subr.mxu0 0.0
  %332 = vmatpush1.msra.mxu0 0.0
  %333 = vmatprep.subr.mxu0 0.0
  %334 = vmatpush1.msra.mxu0 0.0
  %335 = vmatprep.subr.mxu0 0.0
  %336 = vmatpush1.msra.mxu0 0.0
  %337 = vmatprep.subr.mxu0 0.0
  %338 = vmatpush1.msra.mxu0 0.0
  %339 = vmatprep.subr.mxu0 0.0
  %340 = vmatpush1.msra.mxu0 0.0
  %341 = vmatprep.subr.mxu0 0.0
  %342 = vmatpush1.msra.mxu0 0.0
  %343 = vmatprep.subr.mxu0 0.0
  %344 = vmatpush1.msra.mxu0 0.0
  %345 = vmatprep.subr.mxu0 0.0
  %346 = vmatpush1.msra.mxu0 0.0
  %347 = vmatprep.subr.mxu0 0.0
  %348 = vmatpush1.msra.mxu0 0.0
  %349 = vmatprep.subr.mxu0 0.0
  %350 = vmatpush1.msra.mxu0 %v292
  %351 = vmatprep.subr.mxu0 0.0
  %352 = vmatpush1.msra.mxu0 %v291
  %353 = vmatprep.subr.mxu0 0.0
  %354 = vmatpush1.msra.mxu0 %v290
  %355 = vmatprep.subr.mxu0 0.0
  %356 = vmatpush1.msra.mxu0 %v289
  %357 = vmatprep.subr.mxu0 0.0
  %358 = vmatpush2.msra.mxu0 0.0
  %359 = vmatprep.subr.mxu0 0.0
  %360 = vmatpush2.msra.mxu0 0.0
  %361 = vmatprep.subr.mxu0 0.0
  %362 = vmatpush2.msra.mxu0 0.0
  %363 = vmatprep.subr.mxu0 0.0
  %364 = vmatpush2.msra.mxu0 0.0
  %365 = vmatprep.subr.mxu0 0.0
  %366 = vmatpush2.msra.mxu0 0.0
  %367 = vmatprep.subr.mxu0 0.0
  %368 = vmatpush2.msra.mxu0 0.0
  %369 = vmatprep.subr.mxu0 0.0
  %370 = vmatpush2.msra.mxu0 0.0
  %371 = vmatprep.subr.mxu0 0.0
  %372 = vmatpush2.msra.mxu0 0.0
  %373 = vmatprep.subr.mxu0 0.0
  %374 = vmatpush2.msra.mxu0 0.0
  %375 = vmatprep.subr.mxu0 0.0
  %376 = vmatpush2.msra.mxu0 0.0
  %377 = vmatprep.subr.mxu0 0.0
  %378 = vmatpush2.msra.mxu0 0.0
  %379 = vmatprep.subr.mxu0 0.0
  %380 = vmatpush2.msra.mxu0 0.0
  %381 = vmatprep.subr.mxu0 0.0
  %382 = vmatpush2.msra.mxu0 0.0
  %383 = vmatprep.subr.mxu0 0.0
  %384 = vmatpush2.msra.mxu0 0.0
  %385 = vmatprep.subr.mxu0 0.0
  %386 = vmatpush2.msra.mxu0 0.0
  %387 = vmatprep.subr.mxu0 0.0
  %388 = vmatpush2.msra.mxu0 0.0
  %389 = vmatprep.mubr.f32.mxu0 0.0
  %390 = vmatmul.mubr.f32.gmra.mxu0 %v302
  %v391 = vpop.f32.mrf.mxu0
  %v392 = vadd.f32 %v298, %v391
  %v393 = vpop.f32.mrf.mxu0
  %394 = vmatprep.mubr.f32.mxu0 0.0
  %395 = vmatmul.mubr.f32.gmra.mxu0 %v305
  %v396 = vpop.f32.mrf.mxu0
  %v397 = vadd.f32 %v298, %v396
  %v398 = vpop.f32.mrf.mxu0
  %399 = vmatprep.mubr.f32.mxu0 0.0
  %400 = vmatmul.mubr.f32.gmra.mxu0 %v308
  %v401 = vpop.f32.mrf.mxu0
  %v402 = vadd.f32 %v298, %v401
  %v403 = vpop.f32.mrf.mxu0
  %404 = vmatprep.mubr.f32.mxu0 0.0
  %405 = vmatmul.mubr.f32.gmra.mxu0 %v311
  %v406 = vpop.f32.mrf.mxu0
  %v407 = vadd.f32 %v298, %v406
  %v408 = vpop.f32.mrf.mxu0
  %409 = vmatprep.mubr.f32.mxu0 0.0
  %410 = vmatmul.mubr.f32.gmra.mxu0 %v314
  %v411 = vpop.f32.mrf.mxu0
  %v412 = vadd.f32 %v298, %v411
  %v413 = vpop.f32.mrf.mxu0
  %414 = vmatprep.mubr.f32.mxu0 0.0
  %415 = vmatmul.mubr.f32.gmra.mxu0 %v317
  %v416 = vpop.f32.mrf.mxu0
  %v417 = vadd.f32 %v298, %v416
  %v418 = vpop.f32.mrf.mxu0
  %419 = vmatprep.mubr.f32.mxu0 0.0
  %420 = vmatmul.mubr.f32.gmra.mxu0 %v320
  %v421 = vpop.f32.mrf.mxu0
  %v422 = vadd.f32 %v298, %v421
  %v423 = vpop.f32.mrf.mxu0
  %424 = vmatprep.mubr.f32.mxu0 0.0
  %425 = vmatmul.mubr.f32.gmra.mxu0 %v323
  %v426 = vpop.f32.mrf.mxu0
  %v427 = vadd.f32 %v298, %v426
  %v428 = vpop.f32.mrf.mxu0
  %429 = vdwg.mxu0
  %vm430 = vcmask 785408
  %431 = vst.msk [vmem:[#allocation3] sm:$0xff] %vm430, %v392
  %432 = vst.msk [vmem:[#allocation3 + $0x8] sm:$0xff] %vm430, %v397
  %433 = vst.msk [vmem:[#allocation3 + $0x10] sm:$0xff] %vm430, %v402
  %434 = vst.msk [vmem:[#allocation3 + $0x18] sm:$0xff] %vm430, %v407
  %435 = vst.msk [vmem:[#allocation3 + $0x20] sm:$0xff] %vm430, %v412
  %436 = vst.msk [vmem:[#allocation3 + $0x28] sm:$0xff] %vm430, %v417
  %437 = vst.msk [vmem:[#allocation3 + $0x30] sm:$0xff] %vm430, %v422
  %438 = vst.msk [vmem:[#allocation3 + $0x38] sm:$0xff] %vm430, %v427
  %v440 = vsel %vm127, 0.0, 0
  %442 = vmatprep.subr.mxu0 0.0
  %443 = vmatpush1.msra.mxu0 0.0
  %444 = vmatprep.subr.mxu0 0.0
  %445 = vmatpush1.msra.mxu0 0.0
  %446 = vmatprep.subr.mxu0 0.0
  %447 = vmatpush1.msra.mxu0 0.0
  %448 = vmatprep.subr.mxu0 0.0
  %449 = vmatpush1.msra.mxu0 0.0
  %450 = vmatprep.subr.mxu0 0.0
  %451 = vmatpush1.msra.mxu0 0.0
  %452 = vmatprep.subr.mxu0 0.0
  %453 = vmatpush1.msra.mxu0 0.0
  %454 = vmatprep.subr.mxu0 0.0
  %455 = vmatpush1.msra.mxu0 0.0
  %456 = vmatprep.subr.mxu0 0.0
  %457 = vmatpush1.msra.mxu0 0.0
  %458 = vmatprep.subr.mxu0 %v73
  %459 = vmatpush1.msra.mxu0 %v72
  %460 = vmatprep.subr.mxu0 %v71
  %461 = vmatpush1.msra.mxu0 %v70
  %462 = vmatprep.subr.mxu0 %v69
  %463 = vmatpush1.msra.mxu0 %v68
  %464 = vmatprep.subr.mxu0 %v67
  %465 = vmatpush1.msra.mxu0 %v66
  %466 = vmatprep.subr.mxu0 %v65
  %467 = vmatpush1.msra.mxu0 %v64
  %468 = vmatprep.subr.mxu0 %v63
  %469 = vmatpush1.msra.mxu0 %v62
  %470 = vmatprep.subr.mxu0 %v61
  %471 = vmatpush1.msra.mxu0 %v60
  %472 = vmatprep.subr.mxu0 %v59
  %473 = vmatpush1.msra.mxu0 %v58
  %474 = vmatprep.subr.mxu0 0.0
  %475 = vmatpush2.msra.mxu0 0.0
  %476 = vmatprep.subr.mxu0 0.0
  %477 = vmatpush2.msra.mxu0 0.0
  %478 = vmatprep.subr.mxu0 0.0
  %479 = vmatpush2.msra.mxu0 0.0
  %480 = vmatprep.subr.mxu0 0.0
  %481 = vmatpush2.msra.mxu0 0.0
  %482 = vmatprep.subr.mxu0 0.0
  %483 = vmatpush2.msra.mxu0 0.0
  %484 = vmatprep.subr.mxu0 0.0
  %485 = vmatpush2.msra.mxu0 0.0
  %486 = vmatprep.subr.mxu0 0.0
  %487 = vmatpush2.msra.mxu0 0.0
  %488 = vmatprep.subr.mxu0 0.0
  %489 = vmatpush2.msra.mxu0 0.0
  %490 = vmatprep.subr.mxu0 0.0
  %491 = vmatpush2.msra.mxu0 0.0
  %492 = vmatprep.subr.mxu0 0.0
  %493 = vmatpush2.msra.mxu0 0.0
  %494 = vmatprep.subr.mxu0 0.0
  %495 = vmatpush2.msra.mxu0 0.0
  %496 = vmatprep.subr.mxu0 0.0
  %497 = vmatpush2.msra.mxu0 0.0
  %498 = vmatprep.subr.mxu0 0.0
  %499 = vmatpush2.msra.mxu0 0.0
  %500 = vmatprep.subr.mxu0 0.0
  %501 = vmatpush2.msra.mxu0 0.0
  %502 = vmatprep.subr.mxu0 0.0
  %503 = vmatpush2.msra.mxu0 0.0
  %504 = vmatprep.subr.mxu0 0.0
  %505 = vmatpush2.msra.mxu0 0.0
  %506 = vmatprep.mubr.f32.mxu0 0.0
  %507 = vmatmul.mubr.f32.gmra.mxu0 %v440
  %v508 = vpop.f32.mrf.mxu0
  %v509 = vadd.f32 0.0, %v508
  %v510 = vpop.f32.mrf.mxu0
  %v511 = vadd.f32 0.0, %v510
  %512 = vdwg.mxu0
  %s513 = smul.u32 0, 2
  %s514 = smul.addr %s513, 8
  %s515 = scalar_lea.vmem [#allocation2], %s514
  %v516 = vld [vmem:[%s515] sm:$0xff]
  %v517 = vld [vmem:[%s515 + $0x8] sm:$0xff]
  %v518 = vadd.f32 %v516, %v509
  %v519 = vxor.u32 %v518, 2147483648
  %v520 = vmul.f32 %v519, 1.442695
  %v521 = vpow.pop %v520
  %v522 = vadd.f32 %v521, 1.0
  %v523 = vrcp.pop %v522
  %v524 = vmul.f32 1.0, %v523
  %v525 = vadd.f32 %v511, %v83
  %v526 = vmul.f32 %v524, %v525
  %v527 = vadd.f32 %v517, %v526
  %v528 = vtanh.pop %v527
  %v529 = vsub.f32 1.0, %v524
  %531 = vrot.lane.b32.xlu0 %v528, 64
  %v532 = vpop.permute.xlu0 %531
  %v534 = vmul.f32 %v529, %v532
  %v535 = vmul.f32 %v524, 0.0
  %v536 = vadd.f32 %v534, %v535
  %538 = vrot.lane.b32.xlu0 %v536, 64
  %v539 = vpop.permute.xlu0 %538
  %v540 = vsel %vm127, %v539, 0
  %542 = vmatprep.subr.mxu0 0.0
  %543 = vmatpush1.msra.mxu0 0.0
  %544 = vmatprep.subr.mxu0 0.0
  %545 = vmatpush1.msra.mxu0 0.0
  %546 = vmatprep.subr.mxu0 0.0
  %547 = vmatpush1.msra.mxu0 0.0
  %548 = vmatprep.subr.mxu0 0.0
  %549 = vmatpush1.msra.mxu0 0.0
  %550 = vmatprep.subr.mxu0 0.0
  %551 = vmatpush1.msra.mxu0 0.0
  %552 = vmatprep.subr.mxu0 0.0
  %553 = vmatpush1.msra.mxu0 0.0
  %554 = vmatprep.subr.mxu0 0.0
  %555 = vmatpush1.msra.mxu0 0.0
  %556 = vmatprep.subr.mxu0 0.0
  %557 = vmatpush1.msra.mxu0 0.0
  %558 = vmatprep.subr.mxu0 %v73
  %559 = vmatpush1.msra.mxu0 %v72
  %560 = vmatprep.subr.mxu0 %v71
  %561 = vmatpush1.msra.mxu0 %v70
  %562 = vmatprep.subr.mxu0 %v69
  %563 = vmatpush1.msra.mxu0 %v68
  %564 = vmatprep.subr.mxu0 %v67
  %565 = vmatpush1.msra.mxu0 %v66
  %566 = vmatprep.subr.mxu0 %v65
  %567 = vmatpush1.msra.mxu0 %v64
  %568 = vmatprep.subr.mxu0 %v63
  %569 = vmatpush1.msra.mxu0 %v62
  %570 = vmatprep.subr.mxu0 %v61
  %571 = vmatpush1.msra.mxu0 %v60
  %572 = vmatprep.subr.mxu0 %v59
  %573 = vmatpush1.msra.mxu0 %v58
  %574 = vmatprep.subr.mxu0 0.0
  %575 = vmatpush2.msra.mxu0 0.0
  %576 = vmatprep.subr.mxu0 0.0
  %577 = vmatpush2.msra.mxu0 0.0
  %578 = vmatprep.subr.mxu0 0.0
  %579 = vmatpush2.msra.mxu0 0.0
  %580 = vmatprep.subr.mxu0 0.0
  %581 = vmatpush2.msra.mxu0 0.0
  %582 = vmatprep.subr.mxu0 0.0
  %583 = vmatpush2.msra.mxu0 0.0
  %584 = vmatprep.subr.mxu0 0.0
  %585 = vmatpush2.msra.mxu0 0.0
  %586 = vmatprep.subr.mxu0 0.0
  %587 = vmatpush2.msra.mxu0 0.0
  %588 = vmatprep.subr.mxu0 0.0
  %589 = vmatpush2.msra.mxu0 0.0
  %590 = vmatprep.subr.mxu0 0.0
  %591 = vmatpush2.msra.mxu0 0.0
  %592 = vmatprep.subr.mxu0 0.0
  %593 = vmatpush2.msra.mxu0 0.0
  %594 = vmatprep.subr.mxu0 0.0
  %595 = vmatpush2.msra.mxu0 0.0
  %596 = vmatprep.subr.mxu0 0.0
  %597 = vmatpush2.msra.mxu0 0.0
  %598 = vmatprep.subr.mxu0 0.0
  %599 = vmatpush2.msra.mxu0 0.0
  %600 = vmatprep.subr.mxu0 0.0
  %601 = vmatpush2.msra.mxu0 0.0
  %602 = vmatprep.subr.mxu0 0.0
  %603 = vmatpush2.msra.mxu0 0.0
  %604 = vmatprep.subr.mxu0 0.0
  %605 = vmatpush2.msra.mxu0 0.0
  %606 = vmatprep.mubr.f32.mxu0 0.0
  %607 = vmatmul.mubr.f32.gmra.mxu0 %v540
  %v608 = vpop.f32.mrf.mxu0
  %v609 = vadd.f32 0.0, %v608
  %v610 = vpop.f32.mrf.mxu0
  %v611 = vadd.f32 0.0, %v610
  %612 = vdwg.mxu0
  %s613 = smul.u32 1, 2
  %s614 = smul.addr %s613, 8
  %s615 = scalar_lea.vmem [#allocation2], %s614
  %v616 = vld [vmem:[%s615] sm:$0xff]
  %v617 = vld [vmem:[%s615 + $0x8] sm:$0xff]
  %v618 = vadd.f32 %v616, %v609
  %v619 = vxor.u32 %v618, 2147483648
  %v620 = vmul.f32 %v619, 1.442695
  %v621 = vpow.pop %v620
  %v622 = vadd.f32 %v621, 1.0
  %v623 = vrcp.pop %v622
  %v624 = vmul.f32 1.0, %v623
  %v625 = vadd.f32 %v611, %v83
  %v626 = vmul.f32 %v624, %v625
  %v627 = vadd.f32 %v617, %v626
  %v628 = vtanh.pop %v627
  %v629 = vsub.f32 1.0, %v624
  %631 = vrot.lane.b32.xlu0 %v628, 64
  %v632 = vpop.permute.xlu0 %631
  %v634 = vmul.f32 %v629, %v632
  %v635 = vmul.f32 %v624, %v536
  %v636 = vadd.f32 %v634, %v635
  %638 = vrot.lane.b32.xlu0 %v636, 64
  %v639 = vpop.permute.xlu0 %638
  %v640 = vsel %vm127, %v639, 0
  %642 = vmatprep.subr.mxu0 0.0
  %643 = vmatpush1.msra.mxu0 0.0
  %644 = vmatprep.subr.mxu0 0.0
  %645 = vmatpush1.msra.mxu0 0.0
  %646 = vmatprep.subr.mxu0 0.0
  %647 = vmatpush1.msra.mxu0 0.0
  %648 = vmatprep.subr.mxu0 0.0
  %649 = vmatpush1.msra.mxu0 0.0
  %650 = vmatprep.subr.mxu0 0.0
  %651 = vmatpush1.msra.mxu0 0.0
  %652 = vmatprep.subr.mxu0 0.0
  %653 = vmatpush1.msra.mxu0 0.0
  %654 = vmatprep.subr.mxu0 0.0
  %655 = vmatpush1.msra.mxu0 0.0
  %656 = vmatprep.subr.mxu0 0.0
  %657 = vmatpush1.msra.mxu0 0.0
  %658 = vmatprep.subr.mxu0 %v73
  %659 = vmatpush1.msra.mxu0 %v72
  %660 = vmatprep.subr.mxu0 %v71
  %661 = vmatpush1.msra.mxu0 %v70
  %662 = vmatprep.subr.mxu0 %v69
  %663 = vmatpush1.msra.mxu0 %v68
  %664 = vmatprep.subr.mxu0 %v67
  %665 = vmatpush1.msra.mxu0 %v66
  %666 = vmatprep.subr.mxu0 %v65
  %667 = vmatpush1.msra.mxu0 %v64
  %668 = vmatprep.subr.mxu0 %v63
  %669 = vmatpush1.msra.mxu0 %v62
  %670 = vmatprep.subr.mxu0 %v61
  %671 = vmatpush1.msra.mxu0 %v60
  %672 = vmatprep.subr.mxu0 %v59
  %673 = vmatpush1.msra.mxu0 %v58
  %674 = vmatprep.subr.mxu0 0.0
  %675 = vmatpush2.msra.mxu0 0.0
  %676 = vmatprep.subr.mxu0 0.0
  %677 = vmatpush2.msra.mxu0 0.0
  %678 = vmatprep.subr.mxu0 0.0
  %679 = vmatpush2.msra.mxu0 0.0
  %680 = vmatprep.subr.mxu0 0.0
  %681 = vmatpush2.msra.mxu0 0.0
  %682 = vmatprep.subr.mxu0 0.0
  %683 = vmatpush2.msra.mxu0 0.0
  %684 = vmatprep.subr.mxu0 0.0
  %685 = vmatpush2.msra.mxu0 0.0
  %686 = vmatprep.subr.mxu0 0.0
  %687 = vmatpush2.msra.mxu0 0.0
  %688 = vmatprep.subr.mxu0 0.0
  %689 = vmatpush2.msra.mxu0 0.0
  %690 = vmatprep.subr.mxu0 0.0
  %691 = vmatpush2.msra.mxu0 0.0
  %692 = vmatprep.subr.mxu0 0.0
  %693 = vmatpush2.msra.mxu0 0.0
  %694 = vmatprep.subr.mxu0 0.0
  %695 = vmatpush2.msra.mxu0 0.0
  %696 = vmatprep.subr.mxu0 0.0
  %697 = vmatpush2.msra.mxu0 0.0
  %698 = vmatprep.subr.mxu0 0.0
  %699 = vmatpush2.msra.mxu0 0.0
  %700 = vmatprep.subr.mxu0 0.0
  %701 = vmatpush2.msra.mxu0 0.0
  %702 = vmatprep.subr.mxu0 0.0
  %703 = vmatpush2.msra.mxu0 0.0
  %704 = vmatprep.subr.mxu0 0.0
  %705 = vmatpush2.msra.mxu0 0.0
  %706 = vmatprep.mubr.f32.mxu0 0.0
  %707 = vmatmul.mubr.f32.gmra.mxu0 %v640
  %v708 = vpop.f32.mrf.mxu0
  %v709 = vadd.f32 0.0, %v708
  %v710 = vpop.f32.mrf.mxu0
  %v711 = vadd.f32 0.0, %v710
  %712 = vdwg.mxu0
  %s713 = smul.u32 2, 2
  %s714 = smul.addr %s713, 8
  %s715 = scalar_lea.vmem [#allocation2], %s714
  %v716 = vld [vmem:[%s715] sm:$0xff]
  %v717 = vld [vmem:[%s715 + $0x8] sm:$0xff]
  %v718 = vadd.f32 %v716, %v709
  %v719 = vxor.u32 %v718, 2147483648
  %v720 = vmul.f32 %v719, 1.442695
  %v721 = vpow.pop %v720
  %v722 = vadd.f32 %v721, 1.0
  %v723 = vrcp.pop %v722
  %v724 = vmul.f32 1.0, %v723
  %v725 = vadd.f32 %v711, %v83
  %v726 = vmul.f32 %v724, %v725
  %v727 = vadd.f32 %v717, %v726
  %v728 = vtanh.pop %v727
  %v729 = vsub.f32 1.0, %v724
  %731 = vrot.lane.b32.xlu0 %v728, 64
  %v732 = vpop.permute.xlu0 %731
  %v734 = vmul.f32 %v729, %v732
  %v735 = vmul.f32 %v724, %v636
  %v736 = vadd.f32 %v734, %v735
  %738 = vrot.lane.b32.xlu0 %v736, 64
  %v739 = vpop.permute.xlu0 %738
  %v740 = vsel %vm127, %v739, 0
  %742 = vmatprep.subr.mxu0 0.0
  %743 = vmatpush1.msra.mxu0 0.0
  %744 = vmatprep.subr.mxu0 0.0
  %745 = vmatpush1.msra.mxu0 0.0
  %746 = vmatprep.subr.mxu0 0.0
  %747 = vmatpush1.msra.mxu0 0.0
  %748 = vmatprep.subr.mxu0 0.0
  %749 = vmatpush1.msra.mxu0 0.0
  %750 = vmatprep.subr.mxu0 0.0
  %751 = vmatpush1.msra.mxu0 0.0
  %752 = vmatprep.subr.mxu0 0.0
  %753 = vmatpush1.msra.mxu0 0.0
  %754 = vmatprep.subr.mxu0 0.0
  %755 = vmatpush1.msra.mxu0 0.0
  %756 = vmatprep.subr.mxu0 0.0
  %757 = vmatpush1.msra.mxu0 0.0
  %758 = vmatprep.subr.mxu0 %v73
  %759 = vmatpush1.msra.mxu0 %v72
  %760 = vmatprep.subr.mxu0 %v71
  %761 = vmatpush1.msra.mxu0 %v70
  %762 = vmatprep.subr.mxu0 %v69
  %763 = vmatpush1.msra.mxu0 %v68
  %764 = vmatprep.subr.mxu0 %v67
  %765 = vmatpush1.msra.mxu0 %v66
  %766 = vmatprep.subr.mxu0 %v65
  %767 = vmatpush1.msra.mxu0 %v64
  %768 = vmatprep.subr.mxu0 %v63
  %769 = vmatpush1.msra.mxu0 %v62
  %770 = vmatprep.subr.mxu0 %v61
  %771 = vmatpush1.msra.mxu0 %v60
  %772 = vmatprep.subr.mxu0 %v59
  %773 = vmatpush1.msra.mxu0 %v58
  %774 = vmatprep.subr.mxu0 0.0
  %775 = vmatpush2.msra.mxu0 0.0
  %776 = vmatprep.subr.mxu0 0.0
  %777 = vmatpush2.msra.mxu0 0.0
  %778 = vmatprep.subr.mxu0 0.0
  %779 = vmatpush2.msra.mxu0 0.0
  %780 = vmatprep.subr.mxu0 0.0
  %781 = vmatpush2.msra.mxu0 0.0
  %782 = vmatprep.subr.mxu0 0.0
  %783 = vmatpush2.msra.mxu0 0.0
  %784 = vmatprep.subr.mxu0 0.0
  %785 = vmatpush2.msra.mxu0 0.0
  %786 = vmatprep.subr.mxu0 0.0
  %787 = vmatpush2.msra.mxu0 0.0
  %788 = vmatprep.subr.mxu0 0.0
  %789 = vmatpush2.msra.mxu0 0.0
  %790 = vmatprep.subr.mxu0 0.0
  %791 = vmatpush2.msra.mxu0 0.0
  %792 = vmatprep.subr.mxu0 0.0
  %793 = vmatpush2.msra.mxu0 0.0
  %794 = vmatprep.subr.mxu0 0.0
  %795 = vmatpush2.msra.mxu0 0.0
  %796 = vmatprep.subr.mxu0 0.0
  %797 = vmatpush2.msra.mxu0 0.0
  %798 = vmatprep.subr.mxu0 0.0
  %799 = vmatpush2.msra.mxu0 0.0
  %800 = vmatprep.subr.mxu0 0.0
  %801 = vmatpush2.msra.mxu0 0.0
  %802 = vmatprep.subr.mxu0 0.0
  %803 = vmatpush2.msra.mxu0 0.0
  %804 = vmatprep.subr.mxu0 0.0
  %805 = vmatpush2.msra.mxu0 0.0
  %806 = vmatprep.mubr.f32.mxu0 0.0
  %807 = vmatmul.mubr.f32.gmra.mxu0 %v740
  %v808 = vpop.f32.mrf.mxu0
  %v809 = vadd.f32 0.0, %v808
  %v810 = vpop.f32.mrf.mxu0
  %v811 = vadd.f32 0.0, %v810
  %812 = vdwg.mxu0
  %s813 = smul.u32 3, 2
  %s814 = smul.addr %s813, 8
  %s815 = scalar_lea.vmem [#allocation2], %s814
  %v816 = vld [vmem:[%s815] sm:$0xff]
  %v817 = vld [vmem:[%s815 + $0x8] sm:$0xff]
  %v818 = vadd.f32 %v816, %v809
  %v819 = vxor.u32 %v818, 2147483648
  %v820 = vmul.f32 %v819, 1.442695
  %v821 = vpow.pop %v820
  %v822 = vadd.f32 %v821, 1.0
  %v823 = vrcp.pop %v822
  %v824 = vmul.f32 1.0, %v823
  %v825 = vadd.f32 %v811, %v83
  %v826 = vmul.f32 %v824, %v825
  %v827 = vadd.f32 %v817, %v826
  %v828 = vtanh.pop %v827
  %v829 = vsub.f32 1.0, %v824
  %831 = vrot.lane.b32.xlu0 %v828, 64
  %v832 = vpop.permute.xlu0 %831
  %v834 = vmul.f32 %v829, %v832
  %v835 = vmul.f32 %v824, %v736
  %v836 = vadd.f32 %v834, %v835
  %838 = vrot.lane.b32.xlu0 %v836, 64
  %v839 = vpop.permute.xlu0 %838
  %v840 = vsel %vm127, %v839, 0
  %842 = vmatprep.subr.mxu0 0.0
  %843 = vmatpush1.msra.mxu0 0.0
  %844 = vmatprep.subr.mxu0 0.0
  %845 = vmatpush1.msra.mxu0 0.0
  %846 = vmatprep.subr.mxu0 0.0
  %847 = vmatpush1.msra.mxu0 0.0
  %848 = vmatprep.subr.mxu0 0.0
  %849 = vmatpush1.msra.mxu0 0.0
  %850 = vmatprep.subr.mxu0 0.0
  %851 = vmatpush1.msra.mxu0 0.0
  %852 = vmatprep.subr.mxu0 0.0
  %853 = vmatpush1.msra.mxu0 0.0
  %854 = vmatprep.subr.mxu0 0.0
  %855 = vmatpush1.msra.mxu0 0.0
  %856 = vmatprep.subr.mxu0 0.0
  %857 = vmatpush1.msra.mxu0 0.0
  %858 = vmatprep.subr.mxu0 %v73
  %859 = vmatpush1.msra.mxu0 %v72
  %860 = vmatprep.subr.mxu0 %v71
  %861 = vmatpush1.msra.mxu0 %v70
  %862 = vmatprep.subr.mxu0 %v69
  %863 = vmatpush1.msra.mxu0 %v68
  %864 = vmatprep.subr.mxu0 %v67
  %865 = vmatpush1.msra.mxu0 %v66
  %866 = vmatprep.subr.mxu0 %v65
  %867 = vmatpush1.msra.mxu0 %v64
  %868 = vmatprep.subr.mxu0 %v63
  %869 = vmatpush1.msra.mxu0 %v62
  %870 = vmatprep.subr.mxu0 %v61
  %871 = vmatpush1.msra.mxu0 %v60
  %872 = vmatprep.subr.mxu0 %v59
  %873 = vmatpush1.msra.mxu0 %v58
  %874 = vmatprep.subr.mxu0 0.0
  %875 = vmatpush2.msra.mxu0 0.0
  %876 = vmatprep.subr.mxu0 0.0
  %877 = vmatpush2.msra.mxu0 0.0
  %878 = vmatprep.subr.mxu0 0.0
  %879 = vmatpush2.msra.mxu0 0.0
  %880 = vmatprep.subr.mxu0 0.0
  %881 = vmatpush2.msra.mxu0 0.0
  %882 = vmatprep.subr.mxu0 0.0
  %883 = vmatpush2.msra.mxu0 0.0
  %884 = vmatprep.subr.mxu0 0.0
  %885 = vmatpush2.msra.mxu0 0.0
  %886 = vmatprep.subr.mxu0 0.0
  %887 = vmatpush2.msra.mxu0 0.0
  %888 = vmatprep.subr.mxu0 0.0
  %889 = vmatpush2.msra.mxu0 0.0
  %890 = vmatprep.subr.mxu0 0.0
  %891 = vmatpush2.msra.mxu0 0.0
  %892 = vmatprep.subr.mxu0 0.0
  %893 = vmatpush2.msra.mxu0 0.0
  %894 = vmatprep.subr.mxu0 0.0
  %895 = vmatpush2.msra.mxu0 0.0
  %896 = vmatprep.subr.mxu0 0.0
  %897 = vmatpush2.msra.mxu0 0.0
  %898 = vmatprep.subr.mxu0 0.0
  %899 = vmatpush2.msra.mxu0 0.0
  %900 = vmatprep.subr.mxu0 0.0
  %901 = vmatpush2.msra.mxu0 0.0
  %902 = vmatprep.subr.mxu0 0.0
  %903 = vmatpush2.msra.mxu0 0.0
  %904 = vmatprep.subr.mxu0 0.0
  %905 = vmatpush2.msra.mxu0 0.0
  %906 = vmatprep.mubr.f32.mxu0 0.0
  %907 = vmatmul.mubr.f32.gmra.mxu0 %v840
  %v908 = vpop.f32.mrf.mxu0
  %v909 = vadd.f32 0.0, %v908
  %v910 = vpop.f32.mrf.mxu0
  %v911 = vadd.f32 0.0, %v910
  %912 = vdwg.mxu0
  %s913 = smul.u32 4, 2
  %s914 = smul.addr %s913, 8
  %s915 = scalar_lea.vmem [#allocation2], %s914
  %v916 = vld [vmem:[%s915] sm:$0xff]
  %v917 = vld [vmem:[%s915 + $0x8] sm:$0xff]
  %v918 = vadd.f32 %v916, %v909
  %v919 = vxor.u32 %v918, 2147483648
  %v920 = vmul.f32 %v919, 1.442695
  %v921 = vpow.pop %v920
  %v922 = vadd.f32 %v921, 1.0
  %v923 = vrcp.pop %v922
  %v924 = vmul.f32 1.0, %v923
  %v925 = vadd.f32 %v911, %v83
  %v926 = vmul.f32 %v924, %v925
  %v927 = vadd.f32 %v917, %v926
  %v928 = vtanh.pop %v927
  %v929 = vsub.f32 1.0, %v924
  %931 = vrot.lane.b32.xlu0 %v928, 64
  %v932 = vpop.permute.xlu0 %931
  %v934 = vmul.f32 %v929, %v932
  %v935 = vmul.f32 %v924, %v836
  %v936 = vadd.f32 %v934, %v935
  %938 = vrot.lane.b32.xlu0 %v936, 64
  %v939 = vpop.permute.xlu0 %938
  %v940 = vsel %vm127, %v939, 0
  %942 = vmatprep.subr.mxu0 0.0
  %943 = vmatpush1.msra.mxu0 0.0
  %944 = vmatprep.subr.mxu0 0.0
  %945 = vmatpush1.msra.mxu0 0.0
  %946 = vmatprep.subr.mxu0 0.0
  %947 = vmatpush1.msra.mxu0 0.0
  %948 = vmatprep.subr.mxu0 0.0
  %949 = vmatpush1.msra.mxu0 0.0
  %950 = vmatprep.subr.mxu0 0.0
  %951 = vmatpush1.msra.mxu0 0.0
  %952 = vmatprep.subr.mxu0 0.0
  %953 = vmatpush1.msra.mxu0 0.0
  %954 = vmatprep.subr.mxu0 0.0
  %955 = vmatpush1.msra.mxu0 0.0
  %956 = vmatprep.subr.mxu0 0.0
  %957 = vmatpush1.msra.mxu0 0.0
  %958 = vmatprep.subr.mxu0 %v73
  %959 = vmatpush1.msra.mxu0 %v72
  %960 = vmatprep.subr.mxu0 %v71
  %961 = vmatpush1.msra.mxu0 %v70
  %962 = vmatprep.subr.mxu0 %v69
  %963 = vmatpush1.msra.mxu0 %v68
  %964 = vmatprep.subr.mxu0 %v67
  %965 = vmatpush1.msra.mxu0 %v66
  %966 = vmatprep.subr.mxu0 %v65
  %967 = vmatpush1.msra.mxu0 %v64
  %968 = vmatprep.subr.mxu0 %v63
  %969 = vmatpush1.msra.mxu0 %v62
  %970 = vmatprep.subr.mxu0 %v61
  %971 = vmatpush1.msra.mxu0 %v60
  %972 = vmatprep.subr.mxu0 %v59
  %973 = vmatpush1.msra.mxu0 %v58
  %974 = vmatprep.subr.mxu0 0.0
  %975 = vmatpush2.msra.mxu0 0.0
  %976 = vmatprep.subr.mxu0 0.0
  %977 = vmatpush2.msra.mxu0 0.0
  %978 = vmatprep.subr.mxu0 0.0
  %979 = vmatpush2.msra.mxu0 0.0
  %980 = vmatprep.subr.mxu0 0.0
  %981 = vmatpush2.msra.mxu0 0.0
  %982 = vmatprep.subr.mxu0 0.0
  %983 = vmatpush2.msra.mxu0 0.0
  %984 = vmatprep.subr.mxu0 0.0
  %985 = vmatpush2.msra.mxu0 0.0
  %986 = vmatprep.subr.mxu0 0.0
  %987 = vmatpush2.msra.mxu0 0.0
  %988 = vmatprep.subr.mxu0 0.0
  %989 = vmatpush2.msra.mxu0 0.0
  %990 = vmatprep.subr.mxu0 0.0
  %991 = vmatpush2.msra.mxu0 0.0
  %992 = vmatprep.subr.mxu0 0.0
  %993 = vmatpush2.msra.mxu0 0.0
  %994 = vmatprep.subr.mxu0 0.0
  %995 = vmatpush2.msra.mxu0 0.0
  %996 = vmatprep.subr.mxu0 0.0
  %997 = vmatpush2.msra.mxu0 0.0
  %998 = vmatprep.subr.mxu0 0.0
  %999 = vmatpush2.msra.mxu0 0.0
  %1000 = vmatprep.subr.mxu0 0.0
  %1001 = vmatpush2.msra.mxu0 0.0
  %1002 = vmatprep.subr.mxu0 0.0
  %1003 = vmatpush2.msra.mxu0 0.0
  %1004 = vmatprep.subr.mxu0 0.0
  %1005 = vmatpush2.msra.mxu0 0.0
  %1006 = vmatprep.mubr.f32.mxu0 0.0
  %1007 = vmatmul.mubr.f32.gmra.mxu0 %v940
  %v1008 = vpop.f32.mrf.mxu0
  %v1009 = vadd.f32 0.0, %v1008
  %v1010 = vpop.f32.mrf.mxu0
  %v1011 = vadd.f32 0.0, %v1010
  %1012 = vdwg.mxu0
  %s1013 = smul.u32 5, 2
  %s1014 = smul.addr %s1013, 8
  %s1015 = scalar_lea.vmem [#allocation2], %s1014
  %v1016 = vld [vmem:[%s1015] sm:$0xff]
  %v1017 = vld [vmem:[%s1015 + $0x8] sm:$0xff]
  %v1018 = vadd.f32 %v1016, %v1009
  %v1019 = vxor.u32 %v1018, 2147483648
  %v1020 = vmul.f32 %v1019, 1.442695
  %v1021 = vpow.pop %v1020
  %v1022 = vadd.f32 %v1021, 1.0
  %v1023 = vrcp.pop %v1022
  %v1024 = vmul.f32 1.0, %v1023
  %v1025 = vadd.f32 %v1011, %v83
  %v1026 = vmul.f32 %v1024, %v1025
  %v1027 = vadd.f32 %v1017, %v1026
  %v1028 = vtanh.pop %v1027
  %v1029 = vsub.f32 1.0, %v1024
  %1031 = vrot.lane.b32.xlu0 %v1028, 64
  %v1032 = vpop.permute.xlu0 %1031
  %v1034 = vmul.f32 %v1029, %v1032
  %v1035 = vmul.f32 %v1024, %v936
  %v1036 = vadd.f32 %v1034, %v1035
  %1038 = vrot.lane.b32.xlu0 %v1036, 64
  %v1039 = vpop.permute.xlu0 %1038
  %v1040 = vsel %vm127, %v1039, 0
  %1042 = vmatprep.subr.mxu0 0.0
  %1043 = vmatpush1.msra.mxu0 0.0
  %1044 = vmatprep.subr.mxu0 0.0
  %1045 = vmatpush1.msra.mxu0 0.0
  %1046 = vmatprep.subr.mxu0 0.0
  %1047 = vmatpush1.msra.mxu0 0.0
  %1048 = vmatprep.subr.mxu0 0.0
  %1049 = vmatpush1.msra.mxu0 0.0
  %1050 = vmatprep.subr.mxu0 0.0
  %1051 = vmatpush1.msra.mxu0 0.0
  %1052 = vmatprep.subr.mxu0 0.0
  %1053 = vmatpush1.msra.mxu0 0.0
  %1054 = vmatprep.subr.mxu0 0.0
  %1055 = vmatpush1.msra.mxu0 0.0
  %1056 = vmatprep.subr.mxu0 0.0
  %1057 = vmatpush1.msra.mxu0 0.0
  %1058 = vmatprep.subr.mxu0 %v73
  %1059 = vmatpush1.msra.mxu0 %v72
  %1060 = vmatprep.subr.mxu0 %v71
  %1061 = vmatpush1.msra.mxu0 %v70
  %1062 = vmatprep.subr.mxu0 %v69
  %1063 = vmatpush1.msra.mxu0 %v68
  %1064 = vmatprep.subr.mxu0 %v67
  %1065 = vmatpush1.msra.mxu0 %v66
  %1066 = vmatprep.subr.mxu0 %v65
  %1067 = vmatpush1.msra.mxu0 %v64
  %1068 = vmatprep.subr.mxu0 %v63
  %1069 = vmatpush1.msra.mxu0 %v62
  %1070 = vmatprep.subr.mxu0 %v61
  %1071 = vmatpush1.msra.mxu0 %v60
  %1072 = vmatprep.subr.mxu0 %v59
  %1073 = vmatpush1.msra.mxu0 %v58
  %1074 = vmatprep.subr.mxu0 0.0
  %1075 = vmatpush2.msra.mxu0 0.0
  %1076 = vmatprep.subr.mxu0 0.0
  %1077 = vmatpush2.msra.mxu0 0.0
  %1078 = vmatprep.subr.mxu0 0.0
  %1079 = vmatpush2.msra.mxu0 0.0
  %1080 = vmatprep.subr.mxu0 0.0
  %1081 = vmatpush2.msra.mxu0 0.0
  %1082 = vmatprep.subr.mxu0 0.0
  %1083 = vmatpush2.msra.mxu0 0.0
  %1084 = vmatprep.subr.mxu0 0.0
  %1085 = vmatpush2.msra.mxu0 0.0
  %1086 = vmatprep.subr.mxu0 0.0
  %1087 = vmatpush2.msra.mxu0 0.0
  %1088 = vmatprep.subr.mxu0 0.0
  %1089 = vmatpush2.msra.mxu0 0.0
  %1090 = vmatprep.subr.mxu0 0.0
  %1091 = vmatpush2.msra.mxu0 0.0
  %1092 = vmatprep.subr.mxu0 0.0
  %1093 = vmatpush2.msra.mxu0 0.0
  %1094 = vmatprep.subr.mxu0 0.0
  %1095 = vmatpush2.msra.mxu0 0.0
  %1096 = vmatprep.subr.mxu0 0.0
  %1097 = vmatpush2.msra.mxu0 0.0
  %1098 = vmatprep.subr.mxu0 0.0
  %1099 = vmatpush2.msra.mxu0 0.0
  %1100 = vmatprep.subr.mxu0 0.0
  %1101 = vmatpush2.msra.mxu0 0.0
  %1102 = vmatprep.subr.mxu0 0.0
  %1103 = vmatpush2.msra.mxu0 0.0
  %1104 = vmatprep.subr.mxu0 0.0
  %1105 = vmatpush2.msra.mxu0 0.0
  %1106 = vmatprep.mubr.f32.mxu0 0.0
  %1107 = vmatmul.mubr.f32.gmra.mxu0 %v1040
  %v1108 = vpop.f32.mrf.mxu0
  %v1109 = vadd.f32 0.0, %v1108
  %v1110 = vpop.f32.mrf.mxu0
  %v1111 = vadd.f32 0.0, %v1110
  %1112 = vdwg.mxu0
  %s1113 = smul.u32 6, 2
  %s1114 = smul.addr %s1113, 8
  %s1115 = scalar_lea.vmem [#allocation2], %s1114
  %v1116 = vld [vmem:[%s1115] sm:$0xff]
  %v1117 = vld [vmem:[%s1115 + $0x8] sm:$0xff]
  %v1118 = vadd.f32 %v1116, %v1109
  %v1119 = vxor.u32 %v1118, 2147483648
  %v1120 = vmul.f32 %v1119, 1.442695
  %v1121 = vpow.pop %v1120
  %v1122 = vadd.f32 %v1121, 1.0
  %v1123 = vrcp.pop %v1122
  %v1124 = vmul.f32 1.0, %v1123
  %v1125 = vadd.f32 %v1111, %v83
  %v1126 = vmul.f32 %v1124, %v1125
  %v1127 = vadd.f32 %v1117, %v1126
  %v1128 = vtanh.pop %v1127
  %v1129 = vsub.f32 1.0, %v1124
  %1131 = vrot.lane.b32.xlu0 %v1128, 64
  %v1132 = vpop.permute.xlu0 %1131
  %v1134 = vmul.f32 %v1129, %v1132
  %v1135 = vmul.f32 %v1124, %v1036
  %v1136 = vadd.f32 %v1134, %v1135
  %1138 = vrot.lane.b32.xlu0 %v1136, 64
  %v1139 = vpop.permute.xlu0 %1138
  %v1140 = vsel %vm127, %v1139, 0
  %1142 = vmatprep.subr.mxu0 0.0
  %1143 = vmatpush1.msra.mxu0 0.0
  %1144 = vmatprep.subr.mxu0 0.0
  %1145 = vmatpush1.msra.mxu0 0.0
  %1146 = vmatprep.subr.mxu0 0.0
  %1147 = vmatpush1.msra.mxu0 0.0
  %1148 = vmatprep.subr.mxu0 0.0
  %1149 = vmatpush1.msra.mxu0 0.0
  %1150 = vmatprep.subr.mxu0 0.0
  %1151 = vmatpush1.msra.mxu0 0.0
  %1152 = vmatprep.subr.mxu0 0.0
  %1153 = vmatpush1.msra.mxu0 0.0
  %1154 = vmatprep.subr.mxu0 0.0
  %1155 = vmatpush1.msra.mxu0 0.0
  %1156 = vmatprep.subr.mxu0 0.0
  %1157 = vmatpush1.msra.mxu0 0.0
  %1158 = vmatprep.subr.mxu0 %v73
  %1159 = vmatpush1.msra.mxu0 %v72
  %1160 = vmatprep.subr.mxu0 %v71
  %1161 = vmatpush1.msra.mxu0 %v70
  %1162 = vmatprep.subr.mxu0 %v69
  %1163 = vmatpush1.msra.mxu0 %v68
  %1164 = vmatprep.subr.mxu0 %v67
  %1165 = vmatpush1.msra.mxu0 %v66
  %1166 = vmatprep.subr.mxu0 %v65
  %1167 = vmatpush1.msra.mxu0 %v64
  %1168 = vmatprep.subr.mxu0 %v63
  %1169 = vmatpush1.msra.mxu0 %v62
  %1170 = vmatprep.subr.mxu0 %v61
  %1171 = vmatpush1.msra.mxu0 %v60
  %1172 = vmatprep.subr.mxu0 %v59
  %1173 = vmatpush1.msra.mxu0 %v58
  %1174 = vmatprep.subr.mxu0 0.0
  %1175 = vmatpush2.msra.mxu0 0.0
  %1176 = vmatprep.subr.mxu0 0.0
  %1177 = vmatpush2.msra.mxu0 0.0
  %1178 = vmatprep.subr.mxu0 0.0
  %1179 = vmatpush2.msra.mxu0 0.0
  %1180 = vmatprep.subr.mxu0 0.0
  %1181 = vmatpush2.msra.mxu0 0.0
  %1182 = vmatprep.subr.mxu0 0.0
  %1183 = vmatpush2.msra.mxu0 0.0
  %1184 = vmatprep.subr.mxu0 0.0
  %1185 = vmatpush2.msra.mxu0 0.0
  %1186 = vmatprep.subr.mxu0 0.0
  %1187 = vmatpush2.msra.mxu0 0.0
  %1188 = vmatprep.subr.mxu0 0.0
  %1189 = vmatpush2.msra.mxu0 0.0
  %1190 = vmatprep.subr.mxu0 0.0
  %1191 = vmatpush2.msra.mxu0 0.0
  %1192 = vmatprep.subr.mxu0 0.0
  %1193 = vmatpush2.msra.mxu0 0.0
  %1194 = vmatprep.subr.mxu0 0.0
  %1195 = vmatpush2.msra.mxu0 0.0
  %1196 = vmatprep.subr.mxu0 0.0
  %1197 = vmatpush2.msra.mxu0 0.0
  %1198 = vmatprep.subr.mxu0 0.0
  %1199 = vmatpush2.msra.mxu0 0.0
  %1200 = vmatprep.subr.mxu0 0.0
  %1201 = vmatpush2.msra.mxu0 0.0
  %1202 = vmatprep.subr.mxu0 0.0
  %1203 = vmatpush2.msra.mxu0 0.0
  %1204 = vmatprep.subr.mxu0 0.0
  %1205 = vmatpush2.msra.mxu0 0.0
  %1206 = vmatprep.mubr.f32.mxu0 0.0
  %1207 = vmatmul.mubr.f32.gmra.mxu0 %v1140
  %v1208 = vpop.f32.mrf.mxu0
  %v1209 = vadd.f32 0.0, %v1208
  %v1210 = vpop.f32.mrf.mxu0
  %v1211 = vadd.f32 0.0, %v1210
  %1212 = vdwg.mxu0
  %s1213 = smul.u32 7, 2
  %s1214 = smul.addr %s1213, 8
  %s1215 = scalar_lea.vmem [#allocation2], %s1214
  %v1216 = vld [vmem:[%s1215] sm:$0xff]
  %v1217 = vld [vmem:[%s1215 + $0x8] sm:$0xff]
  %v1218 = vadd.f32 %v1216, %v1209
  %v1219 = vxor.u32 %v1218, 2147483648
  %v1220 = vmul.f32 %v1219, 1.442695
  %v1221 = vpow.pop %v1220
  %v1222 = vadd.f32 %v1221, 1.0
  %v1223 = vrcp.pop %v1222
  %v1224 = vmul.f32 1.0, %v1223
  %v1225 = vadd.f32 %v1211, %v83
  %v1226 = vmul.f32 %v1224, %v1225
  %v1227 = vadd.f32 %v1217, %v1226
  %v1228 = vtanh.pop %v1227
  %v1229 = vsub.f32 1.0, %v1224
  %1231 = vrot.lane.b32.xlu0 %v1228, 64
  %v1232 = vpop.permute.xlu0 %1231
  %v1234 = vmul.f32 %v1229, %v1232
  %v1235 = vmul.f32 %v1224, %v1136
  %v1236 = vadd.f32 %v1234, %v1235
  %v1237 = vld [vmem:[%s7] sm:$0xff]
  %v1238 = vld [vmem:[%s7 + $0x8] sm:$0xff]
  %v1239 = vld [vmem:[%s7 + $0x10] sm:$0xff]
  %v1240 = vld [vmem:[%s7 + $0x18] sm:$0xff]
  %v1241 = vld [vmem:[%s7 + $0x20] sm:$0xff]
  %v1242 = vld [vmem:[%s7 + $0x28] sm:$0xff]
  %v1243 = vld [vmem:[%s7 + $0x30] sm:$0xff]
  %v1244 = vld [vmem:[%s7 + $0x38] sm:$0xff]
  %v1245 = vld [vmem:[%s8] sm:$0x1]
  %v1247 = vlaneseq
  %v1248 = vshrl.u32 %v1247, 7
  %v1249 = vsub.s32 0, %v1248
  %v1250 = vrot.slane %v1245, %v1249
  %1253 = vrot.lane.b32.xlu0 %v1236, 64
  %v1254 = vpop.permute.xlu0 %1253
  %v1255 = vsel %vm127, %v1254, 0
  %1257 = vmatprep.subr.mxu0 0.0
  %1258 = vmatpush1.msra.mxu0 0.0
  %1259 = vmatprep.subr.mxu0 0.0
  %1260 = vmatpush1.msra.mxu0 0.0
  %1261 = vmatprep.subr.mxu0 0.0
  %1262 = vmatpush1.msra.mxu0 0.0
  %1263 = vmatprep.subr.mxu0 0.0
  %1264 = vmatpush1.msra.mxu0 0.0
  %1265 = vmatprep.subr.mxu0 0.0
  %1266 = vmatpush1.msra.mxu0 0.0
  %1267 = vmatprep.subr.mxu0 0.0
  %1268 = vmatpush1.msra.mxu0 0.0
  %1269 = vmatprep.subr.mxu0 0.0
  %1270 = vmatpush1.msra.mxu0 0.0
  %1271 = vmatprep.subr.mxu0 0.0
  %1272 = vmatpush1.msra.mxu0 0.0
  %1273 = vmatprep.subr.mxu0 0.0
  %1274 = vmatpush1.msra.mxu0 %v1244
  %1275 = vmatprep.subr.mxu0 0.0
  %1276 = vmatpush1.msra.mxu0 %v1243
  %1277 = vmatprep.subr.mxu0 0.0
  %1278 = vmatpush1.msra.mxu0 %v1242
  %1279 = vmatprep.subr.mxu0 0.0
  %1280 = vmatpush1.msra.mxu0 %v1241
  %1281 = vmatprep.subr.mxu0 0.0
  %1282 = vmatpush1.msra.mxu0 %v1240
  %1283 = vmatprep.subr.mxu0 0.0
  %1284 = vmatpush1.msra.mxu0 %v1239
  %1285 = vmatprep.subr.mxu0 0.0
  %1286 = vmatpush1.msra.mxu0 %v1238
  %1287 = vmatprep.subr.mxu0 0.0
  %1288 = vmatpush1.msra.mxu0 %v1237
  %1289 = vmatprep.subr.mxu0 0.0
  %1290 = vmatpush2.msra.mxu0 0.0
  %1291 = vmatprep.subr.mxu0 0.0
  %1292 = vmatpush2.msra.mxu0 0.0
  %1293 = vmatprep.subr.mxu0 0.0
  %1294 = vmatpush2.msra.mxu0 0.0
  %1295 = vmatprep.subr.mxu0 0.0
  %1296 = vmatpush2.msra.mxu0 0.0
  %1297 = vmatprep.subr.mxu0 0.0
  %1298 = vmatpush2.msra.mxu0 0.0
  %1299 = vmatprep.subr.mxu0 0.0
  %1300 = vmatpush2.msra.mxu0 0.0
  %1301 = vmatprep.subr.mxu0 0.0
  %1302 = vmatpush2.msra.mxu0 0.0
  %1303 = vmatprep.subr.mxu0 0.0
  %1304 = vmatpush2.msra.mxu0 0.0
  %1305 = vmatprep.subr.mxu0 0.0
  %1306 = vmatpush2.msra.mxu0 0.0
  %1307 = vmatprep.subr.mxu0 0.0
  %1308 = vmatpush2.msra.mxu0 0.0
  %1309 = vmatprep.subr.mxu0 0.0
  %1310 = vmatpush2.msra.mxu0 0.0
  %1311 = vmatprep.subr.mxu0 0.0
  %1312 = vmatpush2.msra.mxu0 0.0
  %1313 = vmatprep.subr.mxu0 0.0
  %1314 = vmatpush2.msra.mxu0 0.0
  %1315 = vmatprep.subr.mxu0 0.0
  %1316 = vmatpush2.msra.mxu0 0.0
  %1317 = vmatprep.subr.mxu0 0.0
  %1318 = vmatpush2.msra.mxu0 0.0
  %1319 = vmatprep.subr.mxu0 0.0
  %1320 = vmatpush2.msra.mxu0 0.0
  %1321 = vmatprep.mubr.f32.mxu0 0.0
  %1322 = vmatmul.mubr.f32.gmra.mxu0 %v1255
  %v1323 = vpop.f32.mrf.mxu0
  %v1324 = vadd.f32 %v1250, %v1323
  %v1325 = vpop.f32.mrf.mxu0
  %1326 = vdwg.mxu0
  %1327 = vst.msk [vmem:[%s17] sm:$0xff] %vm300, %v1324
  %v1328 = vmul.f32 %v1324, 0.5
  %v1329 = vmul.f32 %v1328, 1.442695
  %v1330 = vpow.pop %v1329
  %v1331 = vld [vmem:[%s2] sm:$0xff]
  %1333 = vrot.lane.b32.xlu0 %v1331, 16
  %v1334 = vpop.permute.xlu0 %1333
  %v1336 = vmul.f32 %v1330, %v1334
  %1338 = vrot.lane.b32.xlu0 %v1336, 112
  %v1339 = vpop.permute.xlu0 %1338
  %v1341 = vadd.f32 %v1324, %v1339
  %v1342 = vld [vmem:[%s9] sm:$0xff]
  %v1343 = vld [vmem:[%s9 + $0x8] sm:$0xff]
  %v1344 = vld [vmem:[%s10] sm:$0x1]
  %v1346 = vlaneseq
  %v1347 = vshrl.u32 %v1346, 7
  %v1348 = vsub.s32 0, %v1347
  %v1349 = vrot.slane %v1344, %v1348
  %vm1351 = vcmask 130048
  %v1353 = vsel %vm1351, %v1341, 0
  %1355 = vmatprep.subr.mxu0 0.0
  %1356 = vmatpush1.msra.mxu0 0.0
  %1357 = vmatprep.subr.mxu0 0.0
  %1358 = vmatpush1.msra.mxu0 0.0
  %1359 = vmatprep.subr.mxu0 0.0
  %1360 = vmatpush1.msra.mxu0 0.0
  %1361 = vmatprep.subr.mxu0 0.0
  %1362 = vmatpush1.msra.mxu0 0.0
  %1363 = vmatprep.subr.mxu0 0.0
  %1364 = vmatpush1.msra.mxu0 0.0
  %1365 = vmatprep.subr.mxu0 0.0
  %1366 = vmatpush1.msra.mxu0 0.0
  %1367 = vmatprep.subr.mxu0 0.0
  %1368 = vmatpush1.msra.mxu0 0.0
  %1369 = vmatprep.subr.mxu0 0.0
  %1370 = vmatpush1.msra.mxu0 0.0
  %1371 = vmatprep.subr.mxu0 0.0
  %1372 = vmatpush1.msra.mxu0 0.0
  %1373 = vmatprep.subr.mxu0 0.0
  %1374 = vmatpush1.msra.mxu0 0.0
  %1375 = vmatprep.subr.mxu0 0.0
  %1376 = vmatpush1.msra.mxu0 0.0
  %1377 = vmatprep.subr.mxu0 0.0
  %1378 = vmatpush1.msra.mxu0 0.0
  %1379 = vmatprep.subr.mxu0 0.0
  %1380 = vmatpush1.msra.mxu0 0.0
  %1381 = vmatprep.subr.mxu0 0.0
  %1382 = vmatpush1.msra.mxu0 0.0
  %1383 = vmatprep.subr.mxu0 0.0
  %1384 = vmatpush1.msra.mxu0 %v1343
  %1385 = vmatprep.subr.mxu0 0.0
  %1386 = vmatpush1.msra.mxu0 %v1342
  %1387 = vmatprep.subr.mxu0 0.0
  %1388 = vmatpush2.msra.mxu0 0.0
  %1389 = vmatprep.subr.mxu0 0.0
  %1390 = vmatpush2.msra.mxu0 0.0
  %1391 = vmatprep.subr.mxu0 0.0
  %1392 = vmatpush2.msra.mxu0 0.0
  %1393 = vmatprep.subr.mxu0 0.0
  %1394 = vmatpush2.msra.mxu0 0.0
  %1395 = vmatprep.subr.mxu0 0.0
  %1396 = vmatpush2.msra.mxu0 0.0
  %1397 = vmatprep.subr.mxu0 0.0
  %1398 = vmatpush2.msra.mxu0 0.0
  %1399 = vmatprep.subr.mxu0 0.0
  %1400 = vmatpush2.msra.mxu0 0.0
  %1401 = vmatprep.subr.mxu0 0.0
  %1402 = vmatpush2.msra.mxu0 0.0
  %1403 = vmatprep.subr.mxu0 0.0
  %1404 = vmatpush2.msra.mxu0 0.0
  %1405 = vmatprep.subr.mxu0 0.0
  %1406 = vmatpush2.msra.mxu0 0.0
  %1407 = vmatprep.subr.mxu0 0.0
  %1408 = vmatpush2.msra.mxu0 0.0
  %1409 = vmatprep.subr.mxu0 0.0
  %1410 = vmatpush2.msra.mxu0 0.0
  %1411 = vmatprep.subr.mxu0 0.0
  %1412 = vmatpush2.msra.mxu0 0.0
  %1413 = vmatprep.subr.mxu0 0.0
  %1414 = vmatpush2.msra.mxu0 0.0
  %1415 = vmatprep.subr.mxu0 0.0
  %1416 = vmatpush2.msra.mxu0 0.0
  %1417 = vmatprep.subr.mxu0 0.0
  %1418 = vmatpush2.msra.mxu0 0.0
  %1419 = vmatprep.mubr.f32.mxu0 0.0
  %1420 = vmatmul.mubr.f32.gmra.mxu0 %v1353
  %v1421 = vpop.f32.mrf.mxu0
  %v1422 = vadd.f32 %v1349, %v1421
  %v1423 = vpop.f32.mrf.mxu0
  %1424 = vdwg.mxu0
  %v1426 = vsel %vm300, %v1422, 0
  %1428 = vmatprep.subr.mxu0 0.0
  %1429 = vmatpush1.msra.mxu0 0.0
  %1430 = vmatprep.subr.mxu0 0.0
  %1431 = vmatpush1.msra.mxu0 0.0
  %1432 = vmatprep.subr.mxu0 0.0
  %1433 = vmatpush1.msra.mxu0 0.0
  %1434 = vmatprep.subr.mxu0 0.0
  %1435 = vmatpush1.msra.mxu0 0.0
  %1436 = vmatprep.subr.mxu0 0.0
  %1437 = vmatpush1.msra.mxu0 0.0
  %1438 = vmatprep.subr.mxu0 0.0
  %1439 = vmatpush1.msra.mxu0 0.0
  %1440 = vmatprep.subr.mxu0 0.0
  %1441 = vmatpush1.msra.mxu0 0.0
  %1442 = vmatprep.subr.mxu0 0.0
  %1443 = vmatpush1.msra.mxu0 0.0
  %1444 = vmatprep.subr.mxu0 0.0
  %1445 = vmatpush1.msra.mxu0 0.0
  %1446 = vmatprep.subr.mxu0 0.0
  %1447 = vmatpush1.msra.mxu0 0.0
  %1448 = vmatprep.subr.mxu0 0.0
  %1449 = vmatpush1.msra.mxu0 0.0
  %1450 = vmatprep.subr.mxu0 0.0
  %1451 = vmatpush1.msra.mxu0 0.0
  %1452 = vmatprep.subr.mxu0 0.0
  %1453 = vmatpush1.msra.mxu0 %v77
  %1454 = vmatprep.subr.mxu0 0.0
  %1455 = vmatpush1.msra.mxu0 %v76
  %1456 = vmatprep.subr.mxu0 0.0
  %1457 = vmatpush1.msra.mxu0 %v75
  %1458 = vmatprep.subr.mxu0 0.0
  %1459 = vmatpush1.msra.mxu0 %v74
  %1460 = vmatprep.subr.mxu0 0.0
  %1461 = vmatpush2.msra.mxu0 0.0
  %1462 = vmatprep.subr.mxu0 0.0
  %1463 = vmatpush2.msra.mxu0 0.0
  %1464 = vmatprep.subr.mxu0 0.0
  %1465 = vmatpush2.msra.mxu0 0.0
  %1466 = vmatprep.subr.mxu0 0.0
  %1467 = vmatpush2.msra.mxu0 0.0
  %1468 = vmatprep.subr.mxu0 0.0
  %1469 = vmatpush2.msra.mxu0 0.0
  %1470 = vmatprep.subr.mxu0 0.0
  %1471 = vmatpush2.msra.mxu0 0.0
  %1472 = vmatprep.subr.mxu0 0.0
  %1473 = vmatpush2.msra.mxu0 0.0
  %1474 = vmatprep.subr.mxu0 0.0
  %1475 = vmatpush2.msra.mxu0 0.0
  %1476 = vmatprep.subr.mxu0 0.0
  %1477 = vmatpush2.msra.mxu0 0.0
  %1478 = vmatprep.subr.mxu0 0.0
  %1479 = vmatpush2.msra.mxu0 0.0
  %1480 = vmatprep.subr.mxu0 0.0
  %1481 = vmatpush2.msra.mxu0 0.0
  %1482 = vmatprep.subr.mxu0 0.0
  %1483 = vmatpush2.msra.mxu0 0.0
  %1484 = vmatprep.subr.mxu0 0.0
  %1485 = vmatpush2.msra.mxu0 0.0
  %1486 = vmatprep.subr.mxu0 0.0
  %1487 = vmatpush2.msra.mxu0 0.0
  %1488 = vmatprep.subr.mxu0 0.0
  %1489 = vmatpush2.msra.mxu0 0.0
  %1490 = vmatprep.subr.mxu0 0.0
  %1491 = vmatpush2.msra.mxu0 0.0
  %1492 = vmatprep.mubr.f32.mxu0 0.0
  %1493 = vmatmul.mubr.f32.gmra.mxu0 %v1426
  %v1494 = vpop.f32.mrf.mxu0
  %v1495 = vadd.f32 0.0, %v1494
  %v1496 = vpop.f32.mrf.mxu0
  %1497 = vdwg.mxu0
  %v1498 = vld [vmem:[#allocation3] sm:$0xff]
  %v1499 = vadd.f32 %v1498, %v1495
  %v1500 = vxor.u32 %v1499, 2147483648
  %v1501 = vmul.f32 %v1500, 1.442695
  %v1502 = vpow.pop %v1501
  %v1503 = vadd.f32 %v1502, 1.0
  %v1504 = vrcp.pop %v1503
  %v1505 = vmul.f32 1.0, %v1504
  %1506 = vrot.lane.b32.xlu0 %v90, 64
  %v1507 = vpop.permute.xlu0 %1506
  %v1509 = vadd.f32 %v1495, %v1507
  %1511 = vrot.lane.b32.xlu0 %v1509, 64
  %v1512 = vpop.permute.xlu0 %1511
  %v1514 = vmul.f32 %v1505, %v1512
  %1516 = vrot.lane.b32.xlu0 %v1514, 64
  %v1517 = vpop.permute.xlu0 %1516
  %v1519 = vadd.f32 %v1498, %v1517
  %v1520 = vtanh.pop %v1519
  %v1521 = vsub.f32 1.0, %v1505
  %1523 = vrot.lane.b32.xlu0 %v1520, 96
  %v1524 = vpop.permute.xlu0 %1523
  %v1526 = vmul.f32 %v1521, %v1524
  %1527 = vrot.lane.b32.xlu0 %v1422, 32
  %v1528 = vpop.permute.xlu0 %1527
  %v1530 = vmul.f32 %v1505, %v1528
  %v1531 = vadd.f32 %v1526, %v1530
  %1533 = vrot.lane.b32.xlu0 %v1531, 96
  %v1534 = vpop.permute.xlu0 %1533
  %1536 = vst.msk [vmem:[#allocation4] sm:$0xff] %vm300, %v1534
  %v1537 = vsel %vm300, %v1534, 0
  %1539 = vmatprep.subr.mxu0 0.0
  %1540 = vmatpush1.msra.mxu0 0.0
  %1541 = vmatprep.subr.mxu0 0.0
  %1542 = vmatpush1.msra.mxu0 0.0
  %1543 = vmatprep.subr.mxu0 0.0
  %1544 = vmatpush1.msra.mxu0 0.0
  %1545 = vmatprep.subr.mxu0 0.0
  %1546 = vmatpush1.msra.mxu0 0.0
  %1547 = vmatprep.subr.mxu0 0.0
  %1548 = vmatpush1.msra.mxu0 0.0
  %1549 = vmatprep.subr.mxu0 0.0
  %1550 = vmatpush1.msra.mxu0 0.0
  %1551 = vmatprep.subr.mxu0 0.0
  %1552 = vmatpush1.msra.mxu0 0.0
  %1553 = vmatprep.subr.mxu0 0.0
  %1554 = vmatpush1.msra.mxu0 0.0
  %1555 = vmatprep.subr.mxu0 0.0
  %1556 = vmatpush1.msra.mxu0 0.0
  %1557 = vmatprep.subr.mxu0 0.0
  %1558 = vmatpush1.msra.mxu0 0.0
  %1559 = vmatprep.subr.mxu0 0.0
  %1560 = vmatpush1.msra.mxu0 0.0
  %1561 = vmatprep.subr.mxu0 0.0
  %1562 = vmatpush1.msra.mxu0 0.0
  %1563 = vmatprep.subr.mxu0 0.0
  %1564 = vmatpush1.msra.mxu0 %v77
  %1565 = vmatprep.subr.mxu0 0.0
  %1566 = vmatpush1.msra.mxu0 %v76
  %1567 = vmatprep.subr.mxu0 0.0
  %1568 = vmatpush1.msra.mxu0 %v75
  %1569 = vmatprep.subr.mxu0 0.0
  %1570 = vmatpush1.msra.mxu0 %v74
  %1571 = vmatprep.subr.mxu0 0.0
  %1572 = vmatpush2.msra.mxu0 0.0
  %1573 = vmatprep.subr.mxu0 0.0
  %1574 = vmatpush2.msra.mxu0 0.0
  %1575 = vmatprep.subr.mxu0 0.0
  %1576 = vmatpush2.msra.mxu0 0.0
  %1577 = vmatprep.subr.mxu0 0.0
  %1578 = vmatpush2.msra.mxu0 0.0
  %1579 = vmatprep.subr.mxu0 0.0
  %1580 = vmatpush2.msra.mxu0 0.0
  %1581 = vmatprep.subr.mxu0 0.0
  %1582 = vmatpush2.msra.mxu0 0.0
  %1583 = vmatprep.subr.mxu0 0.0
  %1584 = vmatpush2.msra.mxu0 0.0
  %1585 = vmatprep.subr.mxu0 0.0
  %1586 = vmatpush2.msra.mxu0 0.0
  %1587 = vmatprep.subr.mxu0 0.0
  %1588 = vmatpush2.msra.mxu0 0.0
  %1589 = vmatprep.subr.mxu0 0.0
  %1590 = vmatpush2.msra.mxu0 0.0
  %1591 = vmatprep.subr.mxu0 0.0
  %1592 = vmatpush2.msra.mxu0 0.0
  %1593 = vmatprep.subr.mxu0 0.0
  %1594 = vmatpush2.msra.mxu0 0.0
  %1595 = vmatprep.subr.mxu0 0.0
  %1596 = vmatpush2.msra.mxu0 0.0
  %1597 = vmatprep.subr.mxu0 0.0
  %1598 = vmatpush2.msra.mxu0 0.0
  %1599 = vmatprep.subr.mxu0 0.0
  %1600 = vmatpush2.msra.mxu0 0.0
  %1601 = vmatprep.subr.mxu0 0.0
  %1602 = vmatpush2.msra.mxu0 0.0
  %1603 = vmatprep.mubr.f32.mxu0 0.0
  %1604 = vmatmul.mubr.f32.gmra.mxu0 %v1537
  %v1605 = vpop.f32.mrf.mxu0
  %v1606 = vadd.f32 0.0, %v1605
  %v1607 = vpop.f32.mrf.mxu0
  %1608 = vdwg.mxu0
  %s1609 = scalar_lea.vmem [#allocation3], 8
  %v1610 = vld [vmem:[%s1609] sm:$0xff]
  %v1611 = vadd.f32 %v1610, %v1606
  %v1612 = vxor.u32 %v1611, 2147483648
  %v1613 = vmul.f32 %v1612, 1.442695
  %v1614 = vpow.pop %v1613
  %v1615 = vadd.f32 %v1614, 1.0
  %v1616 = vrcp.pop %v1615
  %v1617 = vmul.f32 1.0, %v1616
  %v1618 = vadd.f32 %v1606, %v1507
  %1620 = vrot.lane.b32.xlu0 %v1618, 64
  %v1621 = vpop.permute.xlu0 %1620
  %v1623 = vmul.f32 %v1617, %v1621
  %1625 = vrot.lane.b32.xlu0 %v1623, 64
  %v1626 = vpop.permute.xlu0 %1625
  %v1628 = vadd.f32 %v1610, %v1626
  %v1629 = vtanh.pop %v1628
  %v1630 = vsub.f32 1.0, %v1617
  %1632 = vrot.lane.b32.xlu0 %v1629, 96
  %v1633 = vpop.permute.xlu0 %1632
  %v1635 = vmul.f32 %v1630, %v1633
  %v1636 = vmul.f32 %v1617, %v1531
  %v1637 = vadd.f32 %v1635, %v1636
  %1639 = vrot.lane.b32.xlu0 %v1637, 96
  %v1640 = vpop.permute.xlu0 %1639
  %s1642 = scalar_lea.vmem [#allocation4], 8
  %1643 = vst.msk [vmem:[%s1642] sm:$0xff] %vm300, %v1640
  %v1644 = vsel %vm300, %v1640, 0
  %1646 = vmatprep.subr.mxu0 0.0
  %1647 = vmatpush1.msra.mxu0 0.0
  %1648 = vmatprep.subr.mxu0 0.0
  %1649 = vmatpush1.msra.mxu0 0.0
  %1650 = vmatprep.subr.mxu0 0.0
  %1651 = vmatpush1.msra.mxu0 0.0
  %1652 = vmatprep.subr.mxu0 0.0
  %1653 = vmatpush1.msra.mxu0 0.0
  %1654 = vmatprep.subr.mxu0 0.0
  %1655 = vmatpush1.msra.mxu0 0.0
  %1656 = vmatprep.subr.mxu0 0.0
  %1657 = vmatpush1.msra.mxu0 0.0
  %1658 = vmatprep.subr.mxu0 0.0
  %1659 = vmatpush1.msra.mxu0 0.0
  %1660 = vmatprep.subr.mxu0 0.0
  %1661 = vmatpush1.msra.mxu0 0.0
  %1662 = vmatprep.subr.mxu0 0.0
  %1663 = vmatpush1.msra.mxu0 0.0
  %1664 = vmatprep.subr.mxu0 0.0
  %1665 = vmatpush1.msra.mxu0 0.0
  %1666 = vmatprep.subr.mxu0 0.0
  %1667 = vmatpush1.msra.mxu0 0.0
  %1668 = vmatprep.subr.mxu0 0.0
  %1669 = vmatpush1.msra.mxu0 0.0
  %1670 = vmatprep.subr.mxu0 0.0
  %1671 = vmatpush1.msra.mxu0 %v77
  %1672 = vmatprep.subr.mxu0 0.0
  %1673 = vmatpush1.msra.mxu0 %v76
  %1674 = vmatprep.subr.mxu0 0.0
  %1675 = vmatpush1.msra.mxu0 %v75
  %1676 = vmatprep.subr.mxu0 0.0
  %1677 = vmatpush1.msra.mxu0 %v74
  %1678 = vmatprep.subr.mxu0 0.0
  %1679 = vmatpush2.msra.mxu0 0.0
  %1680 = vmatprep.subr.mxu0 0.0
  %1681 = vmatpush2.msra.mxu0 0.0
  %1682 = vmatprep.subr.mxu0 0.0
  %1683 = vmatpush2.msra.mxu0 0.0
  %1684 = vmatprep.subr.mxu0 0.0
  %1685 = vmatpush2.msra.mxu0 0.0
  %1686 = vmatprep.subr.mxu0 0.0
  %1687 = vmatpush2.msra.mxu0 0.0
  %1688 = vmatprep.subr.mxu0 0.0
  %1689 = vmatpush2.msra.mxu0 0.0
  %1690 = vmatprep.subr.mxu0 0.0
  %1691 = vmatpush2.msra.mxu0 0.0
  %1692 = vmatprep.subr.mxu0 0.0
  %1693 = vmatpush2.msra.mxu0 0.0
  %1694 = vmatprep.subr.mxu0 0.0
  %1695 = vmatpush2.msra.mxu0 0.0
  %1696 = vmatprep.subr.mxu0 0.0
  %1697 = vmatpush2.msra.mxu0 0.0
  %1698 = vmatprep.subr.mxu0 0.0
  %1699 = vmatpush2.msra.mxu0 0.0
  %1700 = vmatprep.subr.mxu0 0.0
  %1701 = vmatpush2.msra.mxu0 0.0
  %1702 = vmatprep.subr.mxu0 0.0
  %1703 = vmatpush2.msra.mxu0 0.0
  %1704 = vmatprep.subr.mxu0 0.0
  %1705 = vmatpush2.msra.mxu0 0.0
  %1706 = vmatprep.subr.mxu0 0.0
  %1707 = vmatpush2.msra.mxu0 0.0
  %1708 = vmatprep.subr.mxu0 0.0
  %1709 = vmatpush2.msra.mxu0 0.0
  %1710 = vmatprep.mubr.f32.mxu0 0.0
  %1711 = vmatmul.mubr.f32.gmra.mxu0 %v1644
  %v1712 = vpop.f32.mrf.mxu0
  %v1713 = vadd.f32 0.0, %v1712
  %v1714 = vpop.f32.mrf.mxu0
  %1715 = vdwg.mxu0
  %s1716 = scalar_lea.vmem [#allocation3], 16
  %v1717 = vld [vmem:[%s1716] sm:$0xff]
  %v1718 = vadd.f32 %v1717, %v1713
  %v1719 = vxor.u32 %v1718, 2147483648
  %v1720 = vmul.f32 %v1719, 1.442695
  %v1721 = vpow.pop %v1720
  %v1722 = vadd.f32 %v1721, 1.0
  %v1723 = vrcp.pop %v1722
  %v1724 = vmul.f32 1.0, %v1723
  %v1725 = vadd.f32 %v1713, %v1507
  %1727 = vrot.lane.b32.xlu0 %v1725, 64
  %v1728 = vpop.permute.xlu0 %1727
  %v1730 = vmul.f32 %v1724, %v1728
  %1732 = vrot.lane.b32.xlu0 %v1730, 64
  %v1733 = vpop.permute.xlu0 %1732
  %v1735 = vadd.f32 %v1717, %v1733
  %v1736 = vtanh.pop %v1735
  %v1737 = vsub.f32 1.0, %v1724
  %1739 = vrot.lane.b32.xlu0 %v1736, 96
  %v1740 = vpop.permute.xlu0 %1739
  %v1742 = vmul.f32 %v1737, %v1740
  %v1743 = vmul.f32 %v1724, %v1637
  %v1744 = vadd.f32 %v1742, %v1743
  %1746 = vrot.lane.b32.xlu0 %v1744, 96
  %v1747 = vpop.permute.xlu0 %1746
  %s1749 = scalar_lea.vmem [#allocation4], 16
  %1750 = vst.msk [vmem:[%s1749] sm:$0xff] %vm300, %v1747
  %v1751 = vsel %vm300, %v1747, 0
  %1753 = vmatprep.subr.mxu0 0.0
  %1754 = vmatpush1.msra.mxu0 0.0
  %1755 = vmatprep.subr.mxu0 0.0
  %1756 = vmatpush1.msra.mxu0 0.0
  %1757 = vmatprep.subr.mxu0 0.0
  %1758 = vmatpush1.msra.mxu0 0.0
  %1759 = vmatprep.subr.mxu0 0.0
  %1760 = vmatpush1.msra.mxu0 0.0
  %1761 = vmatprep.subr.mxu0 0.0
  %1762 = vmatpush1.msra.mxu0 0.0
  %1763 = vmatprep.subr.mxu0 0.0
  %1764 = vmatpush1.msra.mxu0 0.0
  %1765 = vmatprep.subr.mxu0 0.0
  %1766 = vmatpush1.msra.mxu0 0.0
  %1767 = vmatprep.subr.mxu0 0.0
  %1768 = vmatpush1.msra.mxu0 0.0
  %1769 = vmatprep.subr.mxu0 0.0
  %1770 = vmatpush1.msra.mxu0 0.0
  %1771 = vmatprep.subr.mxu0 0.0
  %1772 = vmatpush1.msra.mxu0 0.0
  %1773 = vmatprep.subr.mxu0 0.0
  %1774 = vmatpush1.msra.mxu0 0.0
  %1775 = vmatprep.subr.mxu0 0.0
  %1776 = vmatpush1.msra.mxu0 0.0
  %1777 = vmatprep.subr.mxu0 0.0
  %1778 = vmatpush1.msra.mxu0 %v77
  %1779 = vmatprep.subr.mxu0 0.0
  %1780 = vmatpush1.msra.mxu0 %v76
  %1781 = vmatprep.subr.mxu0 0.0
  %1782 = vmatpush1.msra.mxu0 %v75
  %1783 = vmatprep.subr.mxu0 0.0
  %1784 = vmatpush1.msra.mxu0 %v74
  %1785 = vmatprep.subr.mxu0 0.0
  %1786 = vmatpush2.msra.mxu0 0.0
  %1787 = vmatprep.subr.mxu0 0.0
  %1788 = vmatpush2.msra.mxu0 0.0
  %1789 = vmatprep.subr.mxu0 0.0
  %1790 = vmatpush2.msra.mxu0 0.0
  %1791 = vmatprep.subr.mxu0 0.0
  %1792 = vmatpush2.msra.mxu0 0.0
  %1793 = vmatprep.subr.mxu0 0.0
  %1794 = vmatpush2.msra.mxu0 0.0
  %1795 = vmatprep.subr.mxu0 0.0
  %1796 = vmatpush2.msra.mxu0 0.0
  %1797 = vmatprep.subr.mxu0 0.0
  %1798 = vmatpush2.msra.mxu0 0.0
  %1799 = vmatprep.subr.mxu0 0.0
  %1800 = vmatpush2.msra.mxu0 0.0
  %1801 = vmatprep.subr.mxu0 0.0
  %1802 = vmatpush2.msra.mxu0 0.0
  %1803 = vmatprep.subr.mxu0 0.0
  %1804 = vmatpush2.msra.mxu0 0.0
  %1805 = vmatprep.subr.mxu0 0.0
  %1806 = vmatpush2.msra.mxu0 0.0
  %1807 = vmatprep.subr.mxu0 0.0
  %1808 = vmatpush2.msra.mxu0 0.0
  %1809 = vmatprep.subr.mxu0 0.0
  %1810 = vmatpush2.msra.mxu0 0.0
  %1811 = vmatprep.subr.mxu0 0.0
  %1812 = vmatpush2.msra.mxu0 0.0
  %1813 = vmatprep.subr.mxu0 0.0
  %1814 = vmatpush2.msra.mxu0 0.0
  %1815 = vmatprep.subr.mxu0 0.0
  %1816 = vmatpush2.msra.mxu0 0.0
  %1817 = vmatprep.mubr.f32.mxu0 0.0
  %1818 = vmatmul.mubr.f32.gmra.mxu0 %v1751
  %v1819 = vpop.f32.mrf.mxu0
  %v1820 = vadd.f32 0.0, %v1819
  %v1821 = vpop.f32.mrf.mxu0
  %1822 = vdwg.mxu0
  %s1823 = scalar_lea.vmem [#allocation3], 24
  %v1824 = vld [vmem:[%s1823] sm:$0xff]
  %v1825 = vadd.f32 %v1824, %v1820
  %v1826 = vxor.u32 %v1825, 2147483648
  %v1827 = vmul.f32 %v1826, 1.442695
  %v1828 = vpow.pop %v1827
  %v1829 = vadd.f32 %v1828, 1.0
  %v1830 = vrcp.pop %v1829
  %v1831 = vmul.f32 1.0, %v1830
  %v1832 = vadd.f32 %v1820, %v1507
  %1834 = vrot.lane.b32.xlu0 %v1832, 64
  %v1835 = vpop.permute.xlu0 %1834
  %v1837 = vmul.f32 %v1831, %v1835
  %1839 = vrot.lane.b32.xlu0 %v1837, 64
  %v1840 = vpop.permute.xlu0 %1839
  %v1842 = vadd.f32 %v1824, %v1840
  %v1843 = vtanh.pop %v1842
  %v1844 = vsub.f32 1.0, %v1831
  %1846 = vrot.lane.b32.xlu0 %v1843, 96
  %v1847 = vpop.permute.xlu0 %1846
  %v1849 = vmul.f32 %v1844, %v1847
  %v1850 = vmul.f32 %v1831, %v1744
  %v1851 = vadd.f32 %v1849, %v1850
  %1853 = vrot.lane.b32.xlu0 %v1851, 96
  %v1854 = vpop.permute.xlu0 %1853
  %s1856 = scalar_lea.vmem [#allocation4], 24
  %1857 = vst.msk [vmem:[%s1856] sm:$0xff] %vm300, %v1854
  %v1858 = vsel %vm300, %v1854, 0
  %1860 = vmatprep.subr.mxu0 0.0
  %1861 = vmatpush1.msra.mxu0 0.0
  %1862 = vmatprep.subr.mxu0 0.0
  %1863 = vmatpush1.msra.mxu0 0.0
  %1864 = vmatprep.subr.mxu0 0.0
  %1865 = vmatpush1.msra.mxu0 0.0
  %1866 = vmatprep.subr.mxu0 0.0
  %1867 = vmatpush1.msra.mxu0 0.0
  %1868 = vmatprep.subr.mxu0 0.0
  %1869 = vmatpush1.msra.mxu0 0.0
  %1870 = vmatprep.subr.mxu0 0.0
  %1871 = vmatpush1.msra.mxu0 0.0
  %1872 = vmatprep.subr.mxu0 0.0
  %1873 = vmatpush1.msra.mxu0 0.0
  %1874 = vmatprep.subr.mxu0 0.0
  %1875 = vmatpush1.msra.mxu0 0.0
  %1876 = vmatprep.subr.mxu0 0.0
  %1877 = vmatpush1.msra.mxu0 0.0
  %1878 = vmatprep.subr.mxu0 0.0
  %1879 = vmatpush1.msra.mxu0 0.0
  %1880 = vmatprep.subr.mxu0 0.0
  %1881 = vmatpush1.msra.mxu0 0.0
  %1882 = vmatprep.subr.mxu0 0.0
  %1883 = vmatpush1.msra.mxu0 0.0
  %1884 = vmatprep.subr.mxu0 0.0
  %1885 = vmatpush1.msra.mxu0 %v77
  %1886 = vmatprep.subr.mxu0 0.0
  %1887 = vmatpush1.msra.mxu0 %v76
  %1888 = vmatprep.subr.mxu0 0.0
  %1889 = vmatpush1.msra.mxu0 %v75
  %1890 = vmatprep.subr.mxu0 0.0
  %1891 = vmatpush1.msra.mxu0 %v74
  %1892 = vmatprep.subr.mxu0 0.0
  %1893 = vmatpush2.msra.mxu0 0.0
  %1894 = vmatprep.subr.mxu0 0.0
  %1895 = vmatpush2.msra.mxu0 0.0
  %1896 = vmatprep.subr.mxu0 0.0
  %1897 = vmatpush2.msra.mxu0 0.0
  %1898 = vmatprep.subr.mxu0 0.0
  %1899 = vmatpush2.msra.mxu0 0.0
  %1900 = vmatprep.subr.mxu0 0.0
  %1901 = vmatpush2.msra.mxu0 0.0
  %1902 = vmatprep.subr.mxu0 0.0
  %1903 = vmatpush2.msra.mxu0 0.0
  %1904 = vmatprep.subr.mxu0 0.0
  %1905 = vmatpush2.msra.mxu0 0.0
  %1906 = vmatprep.subr.mxu0 0.0
  %1907 = vmatpush2.msra.mxu0 0.0
  %1908 = vmatprep.subr.mxu0 0.0
  %1909 = vmatpush2.msra.mxu0 0.0
  %1910 = vmatprep.subr.mxu0 0.0
  %1911 = vmatpush2.msra.mxu0 0.0
  %1912 = vmatprep.subr.mxu0 0.0
  %1913 = vmatpush2.msra.mxu0 0.0
  %1914 = vmatprep.subr.mxu0 0.0
  %1915 = vmatpush2.msra.mxu0 0.0
  %1916 = vmatprep.subr.mxu0 0.0
  %1917 = vmatpush2.msra.mxu0 0.0
  %1918 = vmatprep.subr.mxu0 0.0
  %1919 = vmatpush2.msra.mxu0 0.0
  %1920 = vmatprep.subr.mxu0 0.0
  %1921 = vmatpush2.msra.mxu0 0.0
  %1922 = vmatprep.subr.mxu0 0.0
  %1923 = vmatpush2.msra.mxu0 0.0
  %1924 = vmatprep.mubr.f32.mxu0 0.0
  %1925 = vmatmul.mubr.f32.gmra.mxu0 %v1858
  %v1926 = vpop.f32.mrf.mxu0
  %v1927 = vadd.f32 0.0, %v1926
  %v1928 = vpop.f32.mrf.mxu0
  %1929 = vdwg.mxu0
  %s1930 = scalar_lea.vmem [#allocation3], 32
  %v1931 = vld [vmem:[%s1930] sm:$0xff]
  %v1932 = vadd.f32 %v1931, %v1927
  %v1933 = vxor.u32 %v1932, 2147483648
  %v1934 = vmul.f32 %v1933, 1.442695
  %v1935 = vpow.pop %v1934
  %v1936 = vadd.f32 %v1935, 1.0
  %v1937 = vrcp.pop %v1936
  %v1938 = vmul.f32 1.0, %v1937
  %v1939 = vadd.f32 %v1927, %v1507
  %1941 = vrot.lane.b32.xlu0 %v1939, 64
  %v1942 = vpop.permute.xlu0 %1941
  %v1944 = vmul.f32 %v1938, %v1942
  %1946 = vrot.lane.b32.xlu0 %v1944, 64
  %v1947 = vpop.permute.xlu0 %1946
  %v1949 = vadd.f32 %v1931, %v1947
  %v1950 = vtanh.pop %v1949
  %v1951 = vsub.f32 1.0, %v1938
  %1953 = vrot.lane.b32.xlu0 %v1950, 96
  %v1954 = vpop.permute.xlu0 %1953
  %v1956 = vmul.f32 %v1951, %v1954
  %v1957 = vmul.f32 %v1938, %v1851
  %v1958 = vadd.f32 %v1956, %v1957
  %1960 = vrot.lane.b32.xlu0 %v1958, 96
  %v1961 = vpop.permute.xlu0 %1960
  %s1963 = scalar_lea.vmem [#allocation4], 32
  %1964 = vst.msk [vmem:[%s1963] sm:$0xff] %vm300, %v1961
  %v1965 = vsel %vm300, %v1961, 0
  %1967 = vmatprep.subr.mxu0 0.0
  %1968 = vmatpush1.msra.mxu0 0.0
  %1969 = vmatprep.subr.mxu0 0.0
  %1970 = vmatpush1.msra.mxu0 0.0
  %1971 = vmatprep.subr.mxu0 0.0
  %1972 = vmatpush1.msra.mxu0 0.0
  %1973 = vmatprep.subr.mxu0 0.0
  %1974 = vmatpush1.msra.mxu0 0.0
  %1975 = vmatprep.subr.mxu0 0.0
  %1976 = vmatpush1.msra.mxu0 0.0
  %1977 = vmatprep.subr.mxu0 0.0
  %1978 = vmatpush1.msra.mxu0 0.0
  %1979 = vmatprep.subr.mxu0 0.0
  %1980 = vmatpush1.msra.mxu0 0.0
  %1981 = vmatprep.subr.mxu0 0.0
  %1982 = vmatpush1.msra.mxu0 0.0
  %1983 = vmatprep.subr.mxu0 0.0
  %1984 = vmatpush1.msra.mxu0 0.0
  %1985 = vmatprep.subr.mxu0 0.0
  %1986 = vmatpush1.msra.mxu0 0.0
  %1987 = vmatprep.subr.mxu0 0.0
  %1988 = vmatpush1.msra.mxu0 0.0
  %1989 = vmatprep.subr.mxu0 0.0
  %1990 = vmatpush1.msra.mxu0 0.0
  %1991 = vmatprep.subr.mxu0 0.0
  %1992 = vmatpush1.msra.mxu0 %v77
  %1993 = vmatprep.subr.mxu0 0.0
  %1994 = vmatpush1.msra.mxu0 %v76
  %1995 = vmatprep.subr.mxu0 0.0
  %1996 = vmatpush1.msra.mxu0 %v75
  %1997 = vmatprep.subr.mxu0 0.0
  %1998 = vmatpush1.msra.mxu0 %v74
  %1999 = vmatprep.subr.mxu0 0.0
  %2000 = vmatpush2.msra.mxu0 0.0
  %2001 = vmatprep.subr.mxu0 0.0
  %2002 = vmatpush2.msra.mxu0 0.0
  %2003 = vmatprep.subr.mxu0 0.0
  %2004 = vmatpush2.msra.mxu0 0.0
  %2005 = vmatprep.subr.mxu0 0.0
  %2006 = vmatpush2.msra.mxu0 0.0
  %2007 = vmatprep.subr.mxu0 0.0
  %2008 = vmatpush2.msra.mxu0 0.0
  %2009 = vmatprep.subr.mxu0 0.0
  %2010 = vmatpush2.msra.mxu0 0.0
  %2011 = vmatprep.subr.mxu0 0.0
  %2012 = vmatpush2.msra.mxu0 0.0
  %2013 = vmatprep.subr.mxu0 0.0
  %2014 = vmatpush2.msra.mxu0 0.0
  %2015 = vmatprep.subr.mxu0 0.0
  %2016 = vmatpush2.msra.mxu0 0.0
  %2017 = vmatprep.subr.mxu0 0.0
  %2018 = vmatpush2.msra.mxu0 0.0
  %2019 = vmatprep.subr.mxu0 0.0
  %2020 = vmatpush2.msra.mxu0 0.0
  %2021 = vmatprep.subr.mxu0 0.0
  %2022 = vmatpush2.msra.mxu0 0.0
  %2023 = vmatprep.subr.mxu0 0.0
  %2024 = vmatpush2.msra.mxu0 0.0
  %2025 = vmatprep.subr.mxu0 0.0
  %2026 = vmatpush2.msra.mxu0 0.0
  %2027 = vmatprep.subr.mxu0 0.0
  %2028 = vmatpush2.msra.mxu0 0.0
  %2029 = vmatprep.subr.mxu0 0.0
  %2030 = vmatpush2.msra.mxu0 0.0
  %2031 = vmatprep.mubr.f32.mxu0 0.0
  %2032 = vmatmul.mubr.f32.gmra.mxu0 %v1965
  %v2033 = vpop.f32.mrf.mxu0
  %v2034 = vadd.f32 0.0, %v2033
  %v2035 = vpop.f32.mrf.mxu0
  %2036 = vdwg.mxu0
  %s2037 = scalar_lea.vmem [#allocation3], 40
  %v2038 = vld [vmem:[%s2037] sm:$0xff]
  %v2039 = vadd.f32 %v2038, %v2034
  %v2040 = vxor.u32 %v2039, 2147483648
  %v2041 = vmul.f32 %v2040, 1.442695
  %v2042 = vpow.pop %v2041
  %v2043 = vadd.f32 %v2042, 1.0
  %v2044 = vrcp.pop %v2043
  %v2045 = vmul.f32 1.0, %v2044
  %v2046 = vadd.f32 %v2034, %v1507
  %2048 = vrot.lane.b32.xlu0 %v2046, 64
  %v2049 = vpop.permute.xlu0 %2048
  %v2051 = vmul.f32 %v2045, %v2049
  %2053 = vrot.lane.b32.xlu0 %v2051, 64
  %v2054 = vpop.permute.xlu0 %2053
  %v2056 = vadd.f32 %v2038, %v2054
  %v2057 = vtanh.pop %v2056
  %v2058 = vsub.f32 1.0, %v2045
  %2060 = vrot.lane.b32.xlu0 %v2057, 96
  %v2061 = vpop.permute.xlu0 %2060
  %v2063 = vmul.f32 %v2058, %v2061
  %v2064 = vmul.f32 %v2045, %v1958
  %v2065 = vadd.f32 %v2063, %v2064
  %2067 = vrot.lane.b32.xlu0 %v2065, 96
  %v2068 = vpop.permute.xlu0 %2067
  %s2070 = scalar_lea.vmem [#allocation4], 40
  %2071 = vst.msk [vmem:[%s2070] sm:$0xff] %vm300, %v2068
  %v2072 = vsel %vm300, %v2068, 0
  %2074 = vmatprep.subr.mxu0 0.0
  %2075 = vmatpush1.msra.mxu0 0.0
  %2076 = vmatprep.subr.mxu0 0.0
  %2077 = vmatpush1.msra.mxu0 0.0
  %2078 = vmatprep.subr.mxu0 0.0
  %2079 = vmatpush1.msra.mxu0 0.0
  %2080 = vmatprep.subr.mxu0 0.0
  %2081 = vmatpush1.msra.mxu0 0.0
  %2082 = vmatprep.subr.mxu0 0.0
  %2083 = vmatpush1.msra.mxu0 0.0
  %2084 = vmatprep.subr.mxu0 0.0
  %2085 = vmatpush1.msra.mxu0 0.0
  %2086 = vmatprep.subr.mxu0 0.0
  %2087 = vmatpush1.msra.mxu0 0.0
  %2088 = vmatprep.subr.mxu0 0.0
  %2089 = vmatpush1.msra.mxu0 0.0
  %2090 = vmatprep.subr.mxu0 0.0
  %2091 = vmatpush1.msra.mxu0 0.0
  %2092 = vmatprep.subr.mxu0 0.0
  %2093 = vmatpush1.msra.mxu0 0.0
  %2094 = vmatprep.subr.mxu0 0.0
  %2095 = vmatpush1.msra.mxu0 0.0
  %2096 = vmatprep.subr.mxu0 0.0
  %2097 = vmatpush1.msra.mxu0 0.0
  %2098 = vmatprep.subr.mxu0 0.0
  %2099 = vmatpush1.msra.mxu0 %v77
  %2100 = vmatprep.subr.mxu0 0.0
  %2101 = vmatpush1.msra.mxu0 %v76
  %2102 = vmatprep.subr.mxu0 0.0
  %2103 = vmatpush1.msra.mxu0 %v75
  %2104 = vmatprep.subr.mxu0 0.0
  %2105 = vmatpush1.msra.mxu0 %v74
  %2106 = vmatprep.subr.mxu0 0.0
  %2107 = vmatpush2.msra.mxu0 0.0
  %2108 = vmatprep.subr.mxu0 0.0
  %2109 = vmatpush2.msra.mxu0 0.0
  %2110 = vmatprep.subr.mxu0 0.0
  %2111 = vmatpush2.msra.mxu0 0.0
  %2112 = vmatprep.subr.mxu0 0.0
  %2113 = vmatpush2.msra.mxu0 0.0
  %2114 = vmatprep.subr.mxu0 0.0
  %2115 = vmatpush2.msra.mxu0 0.0
  %2116 = vmatprep.subr.mxu0 0.0
  %2117 = vmatpush2.msra.mxu0 0.0
  %2118 = vmatprep.subr.mxu0 0.0
  %2119 = vmatpush2.msra.mxu0 0.0
  %2120 = vmatprep.subr.mxu0 0.0
  %2121 = vmatpush2.msra.mxu0 0.0
  %2122 = vmatprep.subr.mxu0 0.0
  %2123 = vmatpush2.msra.mxu0 0.0
  %2124 = vmatprep.subr.mxu0 0.0
  %2125 = vmatpush2.msra.mxu0 0.0
  %2126 = vmatprep.subr.mxu0 0.0
  %2127 = vmatpush2.msra.mxu0 0.0
  %2128 = vmatprep.subr.mxu0 0.0
  %2129 = vmatpush2.msra.mxu0 0.0
  %2130 = vmatprep.subr.mxu0 0.0
  %2131 = vmatpush2.msra.mxu0 0.0
  %2132 = vmatprep.subr.mxu0 0.0
  %2133 = vmatpush2.msra.mxu0 0.0
  %2134 = vmatprep.subr.mxu0 0.0
  %2135 = vmatpush2.msra.mxu0 0.0
  %2136 = vmatprep.subr.mxu0 0.0
  %2137 = vmatpush2.msra.mxu0 0.0
  %2138 = vmatprep.mubr.f32.mxu0 0.0
  %2139 = vmatmul.mubr.f32.gmra.mxu0 %v2072
  %v2140 = vpop.f32.mrf.mxu0
  %v2141 = vadd.f32 0.0, %v2140
  %v2142 = vpop.f32.mrf.mxu0
  %2143 = vdwg.mxu0
  %s2144 = scalar_lea.vmem [#allocation3], 48
  %v2145 = vld [vmem:[%s2144] sm:$0xff]
  %v2146 = vadd.f32 %v2145, %v2141
  %v2147 = vxor.u32 %v2146, 2147483648
  %v2148 = vmul.f32 %v2147, 1.442695
  %v2149 = vpow.pop %v2148
  %v2150 = vadd.f32 %v2149, 1.0
  %v2151 = vrcp.pop %v2150
  %v2152 = vmul.f32 1.0, %v2151
  %v2153 = vadd.f32 %v2141, %v1507
  %2155 = vrot.lane.b32.xlu0 %v2153, 64
  %v2156 = vpop.permute.xlu0 %2155
  %v2158 = vmul.f32 %v2152, %v2156
  %2160 = vrot.lane.b32.xlu0 %v2158, 64
  %v2161 = vpop.permute.xlu0 %2160
  %v2163 = vadd.f32 %v2145, %v2161
  %v2164 = vtanh.pop %v2163
  %v2165 = vsub.f32 1.0, %v2152
  %2167 = vrot.lane.b32.xlu0 %v2164, 96
  %v2168 = vpop.permute.xlu0 %2167
  %v2170 = vmul.f32 %v2165, %v2168
  %v2171 = vmul.f32 %v2152, %v2065
  %v2172 = vadd.f32 %v2170, %v2171
  %2174 = vrot.lane.b32.xlu0 %v2172, 96
  %v2175 = vpop.permute.xlu0 %2174
  %s2177 = scalar_lea.vmem [#allocation4], 48
  %2178 = vst.msk [vmem:[%s2177] sm:$0xff] %vm300, %v2175
  %v2179 = vsel %vm300, %v2175, 0
  %2181 = vmatprep.subr.mxu0 0.0
  %2182 = vmatpush1.msra.mxu0 0.0
  %2183 = vmatprep.subr.mxu0 0.0
  %2184 = vmatpush1.msra.mxu0 0.0
  %2185 = vmatprep.subr.mxu0 0.0
  %2186 = vmatpush1.msra.mxu0 0.0
  %2187 = vmatprep.subr.mxu0 0.0
  %2188 = vmatpush1.msra.mxu0 0.0
  %2189 = vmatprep.subr.mxu0 0.0
  %2190 = vmatpush1.msra.mxu0 0.0
  %2191 = vmatprep.subr.mxu0 0.0
  %2192 = vmatpush1.msra.mxu0 0.0
  %2193 = vmatprep.subr.mxu0 0.0
  %2194 = vmatpush1.msra.mxu0 0.0
  %2195 = vmatprep.subr.mxu0 0.0
  %2196 = vmatpush1.msra.mxu0 0.0
  %2197 = vmatprep.subr.mxu0 0.0
  %2198 = vmatpush1.msra.mxu0 0.0
  %2199 = vmatprep.subr.mxu0 0.0
  %2200 = vmatpush1.msra.mxu0 0.0
  %2201 = vmatprep.subr.mxu0 0.0
  %2202 = vmatpush1.msra.mxu0 0.0
  %2203 = vmatprep.subr.mxu0 0.0
  %2204 = vmatpush1.msra.mxu0 0.0
  %2205 = vmatprep.subr.mxu0 0.0
  %2206 = vmatpush1.msra.mxu0 %v77
  %2207 = vmatprep.subr.mxu0 0.0
  %2208 = vmatpush1.msra.mxu0 %v76
  %2209 = vmatprep.subr.mxu0 0.0
  %2210 = vmatpush1.msra.mxu0 %v75
  %2211 = vmatprep.subr.mxu0 0.0
  %2212 = vmatpush1.msra.mxu0 %v74
  %2213 = vmatprep.subr.mxu0 0.0
  %2214 = vmatpush2.msra.mxu0 0.0
  %2215 = vmatprep.subr.mxu0 0.0
  %2216 = vmatpush2.msra.mxu0 0.0
  %2217 = vmatprep.subr.mxu0 0.0
  %2218 = vmatpush2.msra.mxu0 0.0
  %2219 = vmatprep.subr.mxu0 0.0
  %2220 = vmatpush2.msra.mxu0 0.0
  %2221 = vmatprep.subr.mxu0 0.0
  %2222 = vmatpush2.msra.mxu0 0.0
  %2223 = vmatprep.subr.mxu0 0.0
  %2224 = vmatpush2.msra.mxu0 0.0
  %2225 = vmatprep.subr.mxu0 0.0
  %2226 = vmatpush2.msra.mxu0 0.0
  %2227 = vmatprep.subr.mxu0 0.0
  %2228 = vmatpush2.msra.mxu0 0.0
  %2229 = vmatprep.subr.mxu0 0.0
  %2230 = vmatpush2.msra.mxu0 0.0
  %2231 = vmatprep.subr.mxu0 0.0
  %2232 = vmatpush2.msra.mxu0 0.0
  %2233 = vmatprep.subr.mxu0 0.0
  %2234 = vmatpush2.msra.mxu0 0.0
  %2235 = vmatprep.subr.mxu0 0.0
  %2236 = vmatpush2.msra.mxu0 0.0
  %2237 = vmatprep.subr.mxu0 0.0
  %2238 = vmatpush2.msra.mxu0 0.0
  %2239 = vmatprep.subr.mxu0 0.0
  %2240 = vmatpush2.msra.mxu0 0.0
  %2241 = vmatprep.subr.mxu0 0.0
  %2242 = vmatpush2.msra.mxu0 0.0
  %2243 = vmatprep.subr.mxu0 0.0
  %2244 = vmatpush2.msra.mxu0 0.0
  %2245 = vmatprep.mubr.f32.mxu0 0.0
  %2246 = vmatmul.mubr.f32.gmra.mxu0 %v2179
  %v2247 = vpop.f32.mrf.mxu0
  %v2248 = vadd.f32 0.0, %v2247
  %v2249 = vpop.f32.mrf.mxu0
  %2250 = vdwg.mxu0
  %s2251 = scalar_lea.vmem [#allocation3], 56
  %v2252 = vld [vmem:[%s2251] sm:$0xff]
  %v2253 = vadd.f32 %v2252, %v2248
  %v2254 = vxor.u32 %v2253, 2147483648
  %v2255 = vmul.f32 %v2254, 1.442695
  %v2256 = vpow.pop %v2255
  %v2257 = vadd.f32 %v2256, 1.0
  %v2258 = vrcp.pop %v2257
  %v2259 = vmul.f32 1.0, %v2258
  %v2260 = vadd.f32 %v2248, %v1507
  %2262 = vrot.lane.b32.xlu0 %v2260, 64
  %v2263 = vpop.permute.xlu0 %2262
  %v2265 = vmul.f32 %v2259, %v2263
  %2267 = vrot.lane.b32.xlu0 %v2265, 64
  %v2268 = vpop.permute.xlu0 %2267
  %v2270 = vadd.f32 %v2252, %v2268
  %v2271 = vtanh.pop %v2270
  %v2272 = vsub.f32 1.0, %v2259
  %2274 = vrot.lane.b32.xlu0 %v2271, 96
  %v2275 = vpop.permute.xlu0 %2274
  %v2277 = vmul.f32 %v2272, %v2275
  %v2278 = vmul.f32 %v2259, %v2172
  %v2279 = vadd.f32 %v2277, %v2278
  %2281 = vrot.lane.b32.xlu0 %v2279, 96
  %v2282 = vpop.permute.xlu0 %2281
  %s2284 = scalar_lea.vmem [#allocation4], 56
  %2285 = vst.msk [vmem:[%s2284] sm:$0xff] %vm300, %v2282
  %v2286 = vld [vmem:[#allocation4] sm:$0xff]
  %v2287 = vld [vmem:[#allocation4 + $0x8] sm:$0xff]
  %v2288 = vld [vmem:[#allocation4 + $0x10] sm:$0xff]
  %v2289 = vld [vmem:[#allocation4 + $0x18] sm:$0xff]
  %v2290 = vld [vmem:[#allocation4 + $0x20] sm:$0xff]
  %v2291 = vld [vmem:[#allocation4 + $0x28] sm:$0xff]
  %v2292 = vld [vmem:[#allocation4 + $0x30] sm:$0xff]
  %v2293 = vld [vmem:[#allocation4 + $0x38] sm:$0xff]
  %v2294 = vld [vmem:[%s15] sm:$0xff]
  %v2295 = vld [vmem:[%s15 + $0x8] sm:$0xff]
  %v2296 = vld [vmem:[%s15 + $0x10] sm:$0xff]
  %v2297 = vld [vmem:[%s15 + $0x18] sm:$0xff]
  %v2298 = vld [vmem:[%s16] sm:$0x1]
  %v2300 = vlaneseq
  %v2301 = vshrl.u32 %v2300, 7
  %v2302 = vsub.s32 0, %v2301
  %v2303 = vrot.slane %v2298, %v2302
  %v2306 = vsel %vm300, %v2286, 0
  %v2309 = vsel %vm300, %v2287, 0
  %v2312 = vsel %vm300, %v2288, 0
  %v2315 = vsel %vm300, %v2289, 0
  %v2318 = vsel %vm300, %v2290, 0
  %v2321 = vsel %vm300, %v2291, 0
  %v2324 = vsel %vm300, %v2292, 0
  %v2327 = vsel %vm300, %v2293, 0
  %2329 = vmatprep.subr.mxu0 0.0
  %2330 = vmatpush1.msra.mxu0 0.0
  %2331 = vmatprep.subr.mxu0 0.0
  %2332 = vmatpush1.msra.mxu0 0.0
  %2333 = vmatprep.subr.mxu0 0.0
  %2334 = vmatpush1.msra.mxu0 0.0
  %2335 = vmatprep.subr.mxu0 0.0
  %2336 = vmatpush1.msra.mxu0 0.0
  %2337 = vmatprep.subr.mxu0 0.0
  %2338 = vmatpush1.msra.mxu0 0.0
  %2339 = vmatprep.subr.mxu0 0.0
  %2340 = vmatpush1.msra.mxu0 0.0
  %2341 = vmatprep.subr.mxu0 0.0
  %2342 = vmatpush1.msra.mxu0 0.0
  %2343 = vmatprep.subr.mxu0 0.0
  %2344 = vmatpush1.msra.mxu0 0.0
  %2345 = vmatprep.subr.mxu0 0.0
  %2346 = vmatpush1.msra.mxu0 0.0
  %2347 = vmatprep.subr.mxu0 0.0
  %2348 = vmatpush1.msra.mxu0 0.0
  %2349 = vmatprep.subr.mxu0 0.0
  %2350 = vmatpush1.msra.mxu0 0.0
  %2351 = vmatprep.subr.mxu0 0.0
  %2352 = vmatpush1.msra.mxu0 0.0
  %2353 = vmatprep.subr.mxu0 0.0
  %2354 = vmatpush1.msra.mxu0 %v2297
  %2355 = vmatprep.subr.mxu0 0.0
  %2356 = vmatpush1.msra.mxu0 %v2296
  %2357 = vmatprep.subr.mxu0 0.0
  %2358 = vmatpush1.msra.mxu0 %v2295
  %2359 = vmatprep.subr.mxu0 0.0
  %2360 = vmatpush1.msra.mxu0 %v2294
  %2361 = vmatprep.subr.mxu0 0.0
  %2362 = vmatpush2.msra.mxu0 0.0
  %2363 = vmatprep.subr.mxu0 0.0
  %2364 = vmatpush2.msra.mxu0 0.0
  %2365 = vmatprep.subr.mxu0 0.0
  %2366 = vmatpush2.msra.mxu0 0.0
  %2367 = vmatprep.subr.mxu0 0.0
  %2368 = vmatpush2.msra.mxu0 0.0
  %2369 = vmatprep.subr.mxu0 0.0
  %2370 = vmatpush2.msra.mxu0 0.0
  %2371 = vmatprep.subr.mxu0 0.0
  %2372 = vmatpush2.msra.mxu0 0.0
  %2373 = vmatprep.subr.mxu0 0.0
  %2374 = vmatpush2.msra.mxu0 0.0
  %2375 = vmatprep.subr.mxu0 0.0
  %2376 = vmatpush2.msra.mxu0 0.0
  %2377 = vmatprep.subr.mxu0 0.0
  %2378 = vmatpush2.msra.mxu0 0.0
  %2379 = vmatprep.subr.mxu0 0.0
  %2380 = vmatpush2.msra.mxu0 0.0
  %2381 = vmatprep.subr.mxu0 0.0
  %2382 = vmatpush2.msra.mxu0 0.0
  %2383 = vmatprep.subr.mxu0 0.0
  %2384 = vmatpush2.msra.mxu0 0.0
  %2385 = vmatprep.subr.mxu0 0.0
  %2386 = vmatpush2.msra.mxu0 0.0
  %2387 = vmatprep.subr.mxu0 0.0
  %2388 = vmatpush2.msra.mxu0 0.0
  %2389 = vmatprep.subr.mxu0 0.0
  %2390 = vmatpush2.msra.mxu0 0.0
  %2391 = vmatprep.subr.mxu0 0.0
  %2392 = vmatpush2.msra.mxu0 0.0
  %2393 = vmatprep.mubr.f32.mxu0 0.0
  %2394 = vmatmul.mubr.f32.gmra.mxu0 %v2306
  %v2395 = vpop.f32.mrf.mxu0
  %v2396 = vadd.f32 %v2303, %v2395
  %v2397 = vpop.f32.mrf.mxu0
  %2398 = vmatprep.mubr.f32.mxu0 0.0
  %2399 = vmatmul.mubr.f32.gmra.mxu0 %v2309
  %v2400 = vpop.f32.mrf.mxu0
  %v2401 = vadd.f32 %v2303, %v2400
  %v2402 = vpop.f32.mrf.mxu0
  %2403 = vmatprep.mubr.f32.mxu0 0.0
  %2404 = vmatmul.mubr.f32.gmra.mxu0 %v2312
  %v2405 = vpop.f32.mrf.mxu0
  %v2406 = vadd.f32 %v2303, %v2405
  %v2407 = vpop.f32.mrf.mxu0
  %2408 = vmatprep.mubr.f32.mxu0 0.0
  %2409 = vmatmul.mubr.f32.gmra.mxu0 %v2315
  %v2410 = vpop.f32.mrf.mxu0
  %v2411 = vadd.f32 %v2303, %v2410
  %v2412 = vpop.f32.mrf.mxu0
  %2413 = vmatprep.mubr.f32.mxu0 0.0
  %2414 = vmatmul.mubr.f32.gmra.mxu0 %v2318
  %v2415 = vpop.f32.mrf.mxu0
  %v2416 = vadd.f32 %v2303, %v2415
  %v2417 = vpop.f32.mrf.mxu0
  %2418 = vmatprep.mubr.f32.mxu0 0.0
  %2419 = vmatmul.mubr.f32.gmra.mxu0 %v2321
  %v2420 = vpop.f32.mrf.mxu0
  %v2421 = vadd.f32 %v2303, %v2420
  %v2422 = vpop.f32.mrf.mxu0
  %2423 = vmatprep.mubr.f32.mxu0 0.0
  %2424 = vmatmul.mubr.f32.gmra.mxu0 %v2324
  %v2425 = vpop.f32.mrf.mxu0
  %v2426 = vadd.f32 %v2303, %v2425
  %v2427 = vpop.f32.mrf.mxu0
  %2428 = vmatprep.mubr.f32.mxu0 0.0
  %2429 = vmatmul.mubr.f32.gmra.mxu0 %v2327
  %v2430 = vpop.f32.mrf.mxu0
  %v2431 = vadd.f32 %v2303, %v2430
  %v2432 = vpop.f32.mrf.mxu0
  %2433 = vdwg.mxu0
  %v2434 = vsel %vm300, %v2396, -inf
  %v2435 = vsel %vm300, %v2401, -inf
  %v2436 = vsel %vm300, %v2406, -inf
  %v2437 = vsel %vm300, %v2411, -inf
  %v2438 = vsel %vm300, %v2416, -inf
  %v2439 = vmax.f32 %v2434, %v2438
  %v2440 = vsel %vm300, %v2421, -inf
  %v2441 = vmax.f32 %v2435, %v2440
  %v2442 = vsel %vm300, %v2426, -inf
  %v2443 = vmax.f32 %v2436, %v2442
  %v2444 = vsel %vm300, %v2431, -inf
  %v2445 = vmax.f32 %v2437, %v2444
  %v2446 = vmax.f32 %v2439, %v2441
  %v2447 = vmax.f32 %v2443, %v2445
  %v2448 = vmax.f32 %v2446, %v2447
  %v2449 = vsub.f32 %v2396, %v2448
  %v2450 = vsub.f32 %v2401, %v2448
  %v2451 = vsub.f32 %v2406, %v2448
  %v2452 = vsub.f32 %v2411, %v2448
  %v2453 = vsub.f32 %v2416, %v2448
  %v2454 = vsub.f32 %v2421, %v2448
  %v2455 = vsub.f32 %v2426, %v2448
  %v2456 = vsub.f32 %v2431, %v2448
  %v2457 = vmul.f32 %v2449, 1.442695
  %v2458 = vpow.pop %v2457
  %v2459 = vmul.f32 %v2450, 1.442695
  %v2460 = vpow.pop %v2459
  %v2461 = vmul.f32 %v2451, 1.442695
  %v2462 = vpow.pop %v2461
  %v2463 = vmul.f32 %v2452, 1.442695
  %v2464 = vpow.pop %v2463
  %v2465 = vmul.f32 %v2453, 1.442695
  %v2466 = vpow.pop %v2465
  %v2467 = vmul.f32 %v2454, 1.442695
  %v2468 = vpow.pop %v2467
  %v2469 = vmul.f32 %v2455, 1.442695
  %v2470 = vpow.pop %v2469
  %v2471 = vmul.f32 %v2456, 1.442695
  %v2472 = vpow.pop %v2471
  %v2473 = vsel %vm300, %v2458, 0.0
  %v2474 = vsel %vm300, %v2460, 0.0
  %v2475 = vadd.f32 %v2473, %v2474
  %v2476 = vsel %vm300, %v2462, 0.0
  %v2477 = vadd.f32 %v2475, %v2476
  %v2478 = vsel %vm300, %v2464, 0.0
  %v2479 = vadd.f32 %v2477, %v2478
  %v2480 = vsel %vm300, %v2466, 0.0
  %v2481 = vadd.f32 %v2479, %v2480
  %v2482 = vsel %vm300, %v2468, 0.0
  %v2483 = vadd.f32 %v2481, %v2482
  %v2484 = vsel %vm300, %v2470, 0.0
  %v2485 = vadd.f32 %v2483, %v2484
  %v2486 = vsel %vm300, %v2472, 0.0
  %v2487 = vadd.f32 %v2485, %v2486
  %v2488 = vlog2.pop %v2487
  %v2489 = vmul.f32 %v2488, 0.6931472
  %v2490 = vadd.f32 %v2489, %v2448
  %v2491 = vsub.f32 %v2396, %v2490
  %v2492 = vsub.f32 %v2401, %v2490
  %v2493 = vsub.f32 %v2406, %v2490
  %v2494 = vsub.f32 %v2411, %v2490
  %v2495 = vsub.f32 %v2416, %v2490
  %v2496 = vsub.f32 %v2421, %v2490
  %v2497 = vsub.f32 %v2426, %v2490
  %v2498 = vsub.f32 %v2431, %v2490
  %2499 = vst.msk [vmem:[%s18] sm:$0xff] %vm300, %v2491
  %2500 = vst.msk [vmem:[%s18 + $0x8] sm:$0xff] %vm300, %v2492
  %2501 = vst.msk [vmem:[%s18 + $0x10] sm:$0xff] %vm300, %v2493
  %2502 = vst.msk [vmem:[%s18 + $0x18] sm:$0xff] %vm300, %v2494
  %2503 = vst.msk [vmem:[%s18 + $0x20] sm:$0xff] %vm300, %v2495
  %2504 = vst.msk [vmem:[%s18 + $0x28] sm:$0xff] %vm300, %v2496
  %2505 = vst.msk [vmem:[%s18 + $0x30] sm:$0xff] %vm300, %v2497
  %2506 = vst.msk [vmem:[%s18 + $0x38] sm:$0xff] %vm300, %v2498
  // Predicated region
  $region70: #{vae_forward.1} parent=0 // pred_check
    _
  $region71: #{vae_forward.1} parent=0 // pred_check_branch
    %2508 = sbr.rel (0) target = $region73
  $region72: #{vae_forward.1} parent=0 // pred_region
    _
  $region73: #{vae_forward.1} parent=0 // pred_fallthru
    _
  // Predicated region
  $region74: #{vae_forward.1} parent=0 // pred_check
    _
  $region75: #{vae_forward.1} parent=0 // pred_check_branch
    %2510 = sbr.rel (0) target = $region77
  $region76: #{vae_forward.1} parent=0 // pred_region
    _
  $region77: #{vae_forward.1} parent=0 // pred_fallthru
    _
  // Predicated region
  $region78: #{vae_forward.1} parent=0 // pred_check
    _
  $region79: #{vae_forward.1} parent=0 // pred_check_branch
    %2512 = sbr.rel (0) target = $region81
  $region80: #{vae_forward.1} parent=0 // pred_region
    _
  $region81: #{vae_forward.1} parent=0 // pred_fallthru
    _
  // Predicated region
  $region82: #{vae_forward.1} parent=0 // pred_check
    _
  $region83: #{vae_forward.1} parent=0 // pred_check_branch
    %2514 = sbr.rel (0) target = $region85
  $region84: #{vae_forward.1} parent=0 // pred_region
    _
  $region85: #{vae_forward.1} parent=0 // pred_fallthru
    _

</llo_original>
